<compile_context>
chip_gen: v6e
topology: v6e:2x2x1
jax: 0.10.0
libtpu: 0.0.40
codegen_flags: <defaults>
</compile_context>

<pallas_src>
import functools

import numpy as np

import jax
import jax.numpy as jnp
from jax.experimental import pallas as pl
from jax.experimental.pallas import tpu as pltpu


_WEIGHT_NAMES = (
    "w1b", "b1b", "sd1", "su1", "pe1", "po1", "qe1", "qo1",
    "w2b", "b2b", "sd2", "su2", "pe2", "po2", "qe2", "qo2",
    "w3p", "b3p", "w4p", "b4p", "w5p", "b5p",
)


# ------------------------------ fused kernel --------------------------------


def _symbolnet_kernel(x_ref,
                      w1b_ref, b1b_ref, sd1_ref, su1_ref, pe1_ref, po1_ref,
                      qe1_ref, qo1_ref,
                      w2b_ref, b2b_ref, sd2_ref, su2_ref, pe2_ref, po2_ref,
                      qe2_ref, qo2_ref,
                      w3p_ref, b3p_ref, w4p_ref, b4p_ref, w5p_ref, b5p_ref,
                      out_ref):
    def dot(a, b):
        return jnp.dot(a, b, preferred_element_type=jnp.float32)

    x = x_ref[0, 0]                                       # (32, 32) one image

    # ---- conv1 (1->6, 3x3, pad 1) + relu: 3 banded matmuls + row shifts ----
    t0 = dot(x, w1b_ref[0])                               # (32, 192)
    t1 = dot(x, w1b_ref[1])
    t2 = dot(x, w1b_ref[2])
    z1 = dot(sd1_ref[...], t0) + t1 + dot(su1_ref[...], t2) + b1b_ref[...]
    y1 = jnp.maximum(z1, 0.0)                             # (32, 192) = (H, W*6)

    # ---- 2x2/2 max pool (0/1 selection matmuls + elementwise max) ----------
    r1 = jnp.maximum(dot(pe1_ref[...], y1), dot(po1_ref[...], y1))   # (16, 192)
    p1 = jnp.maximum(dot(r1, qe1_ref[...]), dot(r1, qo1_ref[...]))   # (16, 96)

    # ---- conv2 (6->16, 3x3, pad 1) + relu ----------------------------------
    u0 = dot(p1, w2b_ref[0])                              # (16, 256)
    u1 = dot(p1, w2b_ref[1])
    u2 = dot(p1, w2b_ref[2])
    z2 = dot(sd2_ref[...], u0) + u1 + dot(su2_ref[...], u2) + b2b_ref[...]
    y2 = jnp.maximum(z2, 0.0)                             # (16, 256) = (H, W*16)

    # ---- 2x2/2 max pool ----------------------------------------------------
    r2 = jnp.maximum(dot(pe2_ref[...], y2), dot(po2_ref[...], y2))   # (8, 256)
    p2 = jnp.maximum(dot(r2, qe2_ref[...]), dot(r2, qo2_ref[...]))   # (8, 128)

    # ---- fc1 (+relu); torch's NCHW flatten permutation is inside w3p -------
    h = b3p_ref[...]                                      # (1, 128)
    for i in range(8):                                    # contract the 8 pooled rows
        h = h + dot(p2[i:i + 1, :], w3p_ref[i])
    h1 = jnp.maximum(h, 0.0)                              # (1, 128)  (120 + pad)

    # ---- fc2 (+relu), fc3 --------------------------------------------------
    h2 = jnp.maximum(dot(h1, w4p_ref[...]) + b4p_ref[...], 0.0)      # (1, 128)
    logits = dot(h2, w5p_ref[...]) + b5p_ref[...]                    # (1, 128)

    out_ref[0] = logits


def symbolnet_forward(x_nchw, packed, n_class):
    """Exact SymbolNet.forward semantics.  Input is NCHW (B, 1, 32, 32)."""
    B, C, H, W = x_nchw.shape
    assert (C, H, W) == (1, 32, 32)
    weights = [packed[name] for name in _WEIGHT_NAMES]

    def const_map(nd):                    # bind ndim now (avoid late closure)
        return lambda b: (0,) * nd

    in_specs = [pl.BlockSpec((1, 1, H, W), lambda b: (b, 0, 0, 0))]
    in_specs += [pl.BlockSpec(w.shape, const_map(w.ndim)) for w in weights]

    out = pl.pallas_call(
        _symbolnet_kernel,
        out_shape=jax.ShapeDtypeStruct((B, 1, 128), jnp.float32),
        grid_spec=pltpu.PrefetchScalarGridSpec(
            num_scalar_prefetch=0,
            grid=(B,),
            in_specs=in_specs,
            out_specs=pl.BlockSpec((1, 1, 128), lambda b: (b, 0, 0)),
        ),
        compiler_params=pltpu.CompilerParams(
            dimension_semantics=("parallel",)),      # v7x: one image per TC
    )(x_nchw, *weights)
    return out.reshape(B, 128)[:, :n_class]


# ---------------------------- parameter packing ------------------------------


def init_raw_params(key, n_class):
    """Deterministic synthetic init, PyTorch layouts (OIHW conv, (out,in) fc)."""
    def u(k, shape, fan_in):
        bound = 1.0 / (fan_in ** 0.5)
        return jax.random.uniform(k, shape, jnp.float32, -bound, bound)

    ks = jax.random.split(key, 10)
    return {
        "w1": u(ks[0], (6, 1, 3, 3), 1 * 9),   "b1": u(ks[1], (6,), 1 * 9),
        "w2": u(ks[2], (16, 6, 3, 3), 6 * 9),  "b2": u(ks[3], (16,), 6 * 9),
        "w3": u(ks[4], (120, 16 * 8 * 8), 16 * 8 * 8),
        "b3": u(ks[5], (120,), 16 * 8 * 8),
        "w4": u(ks[6], (84, 120), 120),        "b4": u(ks[7], (84,), 120),
        "w5": u(ks[8], (n_class, 84), 84),     "b5": u(ks[9], (n_class,), 84),
    }


def pack_params(raw, n_class):
    """Host-side packing: banded conv weights, pool selectors, padded FC."""
    w1 = np.asarray(raw["w1"], np.float32); b1 = np.asarray(raw["b1"], np.float32)
    w2 = np.asarray(raw["w2"], np.float32); b2 = np.asarray(raw["b2"], np.float32)
    w3 = np.asarray(raw["w3"], np.float32); b3 = np.asarray(raw["b3"], np.float32)
    w4 = np.asarray(raw["w4"], np.float32); b4 = np.asarray(raw["b4"], np.float32)
    w5 = np.asarray(raw["w5"], np.float32); b5 = np.asarray(raw["b5"], np.float32)

    def band(wt, width):
        # wt: (Cout, Cin, 3, 3).  m[ky, wi*Cin+ci, wo*Cout+co] = wt[co,ci,ky,wi-wo+1]
        cout, cin = wt.shape[0], wt.shape[1]
        m = np.zeros((3, width * cin, width * cout), np.float32)
        for ky in range(3):
            for kx in range(3):
                tap = wt[:, :, ky, kx].T                  # (Cin, Cout)
                for wo in range(width):
                    wi = wo + kx - 1
                    if 0 <= wi < width:
                        m[ky, wi * cin:(wi + 1) * cin,
                          wo * cout:(wo + 1) * cout] = tap
        return m

    def shifts(n):
        sd = np.zeros((n, n), np.float32)   # (sd @ t)[h] = t[h-1], row 0 -> 0
        su = np.zeros((n, n), np.float32)   # (su @ t)[h] = t[h+1], last -> 0
        for h in range(1, n):
            sd[h, h - 1] = 1.0
        for h in range(n - 1):
            su[h, h + 1] = 1.0
        return sd, su

    def row_sel(n):
        half = n // 2
        pe = np.zeros((half, n), np.float32)
        po = np.zeros((half, n), np.float32)
        for i in range(half):
            pe[i, 2 * i] = 1.0
            po[i, 2 * i + 1] = 1.0
        return pe, po

    def col_sel(width, chans):
        half = width // 2
        qe = np.zeros((width * chans, half * chans), np.float32)
        qo = np.zeros((width * chans, half * chans), np.float32)
        for j in range(half):
            for c in range(chans):
                qe[(2 * j) * chans + c, j * chans + c] = 1.0
                qo[(2 * j + 1) * chans + c, j * chans + c] = 1.0
        return qe, qo

    w1b = band(w1, 32)                                   # (3, 32, 192)
    b1b = np.tile(b1, 32)[None, :]                       # (1, 192)
    sd1, su1 = shifts(32)
    pe1, po1 = row_sel(32)                               # (16, 32)
    qe1, qo1 = col_sel(32, 6)                            # (192, 96)

    w2b = band(w2, 16)                                   # (3, 96, 256)
    b2b = np.tile(b2, 16)[None, :]                       # (1, 256)
    sd2, su2 = shifts(16)
    pe2, po2 = row_sel(16)                               # (8, 16)
    qe2, qo2 = col_sel(16, 16)                           # (256, 128)

    # fc1: fold torch flatten (index c*64 + i*8 + j) into the packed weight;
    # kernel pooled layout is p2[i, j*16 + c].  Pad 120 -> 128 lanes.
    w3p = np.zeros((8, 128, 128), np.float32)
    for i in range(8):
        for j in range(8):
            for c in range(16):
                w3p[i, j * 16 + c, :120] = w3[:, c * 64 + i * 8 + j]
    b3p = np.zeros((1, 128), np.float32); b3p[0, :120] = b3

    w4p = np.zeros((128, 128), np.float32); w4p[:120, :84] = w4.T
    b4p = np.zeros((1, 128), np.float32); b4p[0, :84] = b4

    w5p = np.zeros((128, 128), np.float32); w5p[:84, :n_class] = w5.T
    b5p = np.zeros((1, 128), np.float32); b5p[0, :n_class] = b5

    vals = dict(w1b=w1b, b1b=b1b, sd1=sd1, su1=su1, pe1=pe1, po1=po1,
                qe1=qe1, qo1=qo1, w2b=w2b, b2b=b2b, sd2=sd2, su2=su2,
                pe2=pe2, po2=po2, qe2=qe2, qo2=qo2,
                w3p=w3p, b3p=b3p, w4p=w4p, b4p=b4p, w5p=w5p, b5p=b5p)
    return {k: jnp.asarray(v) for k, v in vals.items()}


# --------------------------- pure-JAX reference ------------------------------


def reference_forward(x, raw):
    dn = ("NCHW", "OIHW", "NCHW")
    y = jax.lax.conv_general_dilated(x, raw["w1"], (1, 1), ((1, 1), (1, 1)),
                                     dimension_numbers=dn)
    y = jax.nn.relu(y + raw["b1"][None, :, None, None])
    y = jax.lax.reduce_window(y, -jnp.inf, jax.lax.max,
                              (1, 1, 2, 2), (1, 1, 2, 2), "VALID")
    y = jax.lax.conv_general_dilated(y, raw["w2"], (1, 1), ((1, 1), (1, 1)),
                                     dimension_numbers=dn)
    y = jax.nn.relu(y + raw["b2"][None, :, None, None])
    y = jax.lax.reduce_window(y, -jnp.inf, jax.lax.max,
                              (1, 1, 2, 2), (1, 1, 2, 2), "VALID")
    y = y.reshape(y.shape[0], -1)
    y = jax.nn.relu(y @ raw["w3"].T + raw["b3"])
    y = jax.nn.relu(y @ raw["w4"].T + raw["b4"])
    return y @ raw["w5"].T + raw["b5"]


# --------------------------------- main --------------------------------------


if __name__ == "__main__":
    n_class = 10
    key = jax.random.PRNGKey(0)
    k_x, k_p = jax.random.split(key)

    # fc1 expects 16*8*8 features -> two 2x pools imply a 32x32 input.
    x = jax.random.normal(k_x, (2, 1, 32, 32), jnp.float32)   # NCHW like torch

    raw = init_raw_params(k_p, n_class)
    packed = pack_params(raw, n_class)

    fwd = jax.jit(lambda xx: symbolnet_forward(xx, packed, n_class))
    out = jax.block_until_ready(fwd(x))
    assert out.shape == (2, n_class) and out.dtype == jnp.float32

    ref = jax.block_until_ready(reference_forward(x, raw))
    # loose tolerance: default MXU matmul precision differs slightly between paths
    assert jnp.allclose(out, ref, atol=5e-2, rtol=5e-2), (
        float(jnp.max(jnp.abs(out - ref))))

    print("KERNEL_OK")
</pallas_src>

<mosaic_0001>
module attributes {stable_mosaic.version = 11 : i64} {
  func.func @_symbolnet_kernel(%arg0: i32, %arg1: memref<1x1x32x32xf32, #tpu.memory_space<vmem>>, %arg2: memref<3x32x192xf32, #tpu.memory_space<vmem>>, %arg3: memref<1x192xf32, #tpu.memory_space<vmem>>, %arg4: memref<32x32xf32, #tpu.memory_space<vmem>>, %arg5: memref<32x32xf32, #tpu.memory_space<vmem>>, %arg6: memref<16x32xf32, #tpu.memory_space<vmem>>, %arg7: memref<16x32xf32, #tpu.memory_space<vmem>>, %arg8: memref<192x96xf32, #tpu.memory_space<vmem>>, %arg9: memref<192x96xf32, #tpu.memory_space<vmem>>, %arg10: memref<3x96x256xf32, #tpu.memory_space<vmem>>, %arg11: memref<1x256xf32, #tpu.memory_space<vmem>>, %arg12: memref<16x16xf32, #tpu.memory_space<vmem>>, %arg13: memref<16x16xf32, #tpu.memory_space<vmem>>, %arg14: memref<8x16xf32, #tpu.memory_space<vmem>>, %arg15: memref<8x16xf32, #tpu.memory_space<vmem>>, %arg16: memref<256x128xf32, #tpu.memory_space<vmem>>, %arg17: memref<256x128xf32, #tpu.memory_space<vmem>>, %arg18: memref<8x128x128xf32, #tpu.memory_space<vmem>>, %arg19: memref<1x128xf32, #tpu.memory_space<vmem>>, %arg20: memref<128x128xf32, #tpu.memory_space<vmem>>, %arg21: memref<1x128xf32, #tpu.memory_space<vmem>>, %arg22: memref<128x128xf32, #tpu.memory_space<vmem>>, %arg23: memref<1x128xf32, #tpu.memory_space<vmem>>, %arg24: memref<1x1x128xf32, #tpu.memory_space<vmem>>) attributes {dimension_semantics = [#tpu.dimension_semantics<parallel>], iteration_bounds = array<i64: 2>, scalar_prefetch = 0 : i64, scratch_operands = 0 : i64, tpu.core_type = #tpu.core_type<tc>, window_params = [{transform_indices = @transform_0, window_bounds = array<i64: 1, 1, 32, 32>}, {pipeline_mode = #tpu.pipeline_mode<synchronous>, transform_indices = @transform_1, window_bounds = array<i64: 3, 32, 192>}, {pipeline_mode = #tpu.pipeline_mode<synchronous>, transform_indices = @transform_2, window_bounds = array<i64: 1, 192>}, {pipeline_mode = #tpu.pipeline_mode<synchronous>, transform_indices = @transform_3, window_bounds = array<i64: 32, 32>}, {pipeline_mode = #tpu.pipeline_mode<synchronous>, transform_indices = @transform_4, window_bounds = array<i64: 32, 32>}, {pipeline_mode = #tpu.pipeline_mode<synchronous>, transform_indices = @transform_5, window_bounds = array<i64: 16, 32>}, {pipeline_mode = #tpu.pipeline_mode<synchronous>, transform_indices = @transform_6, window_bounds = array<i64: 16, 32>}, {pipeline_mode = #tpu.pipeline_mode<synchronous>, transform_indices = @transform_7, window_bounds = array<i64: 192, 96>}, {pipeline_mode = #tpu.pipeline_mode<synchronous>, transform_indices = @transform_8, window_bounds = array<i64: 192, 96>}, {pipeline_mode = #tpu.pipeline_mode<synchronous>, transform_indices = @transform_9, window_bounds = array<i64: 3, 96, 256>}, {pipeline_mode = #tpu.pipeline_mode<synchronous>, transform_indices = @transform_10, window_bounds = array<i64: 1, 256>}, {pipeline_mode = #tpu.pipeline_mode<synchronous>, transform_indices = @transform_11, window_bounds = array<i64: 16, 16>}, {pipeline_mode = #tpu.pipeline_mode<synchronous>, transform_indices = @transform_12, window_bounds = array<i64: 16, 16>}, {pipeline_mode = #tpu.pipeline_mode<synchronous>, transform_indices = @transform_13, window_bounds = array<i64: 8, 16>}, {pipeline_mode = #tpu.pipeline_mode<synchronous>, transform_indices = @transform_14, window_bounds = array<i64: 8, 16>}, {pipeline_mode = #tpu.pipeline_mode<synchronous>, transform_indices = @transform_15, window_bounds = array<i64: 256, 128>}, {pipeline_mode = #tpu.pipeline_mode<synchronous>, transform_indices = @transform_16, window_bounds = array<i64: 256, 128>}, {pipeline_mode = #tpu.pipeline_mode<synchronous>, transform_indices = @transform_17, window_bounds = array<i64: 8, 128, 128>}, {pipeline_mode = #tpu.pipeline_mode<synchronous>, transform_indices = @transform_18, window_bounds = array<i64: 1, 128>}, {pipeline_mode = #tpu.pipeline_mode<synchronous>, transform_indices = @transform_19, window_bounds = array<i64: 128, 128>}, {pipeline_mode = #tpu.pipeline_mode<synchronous>, transform_indices = @transform_20, window_bounds = array<i64: 1, 128>}, {pipeline_mode = #tpu.pipeline_mode<synchronous>, transform_indices = @transform_21, window_bounds = array<i64: 128, 128>}, {pipeline_mode = #tpu.pipeline_mode<synchronous>, transform_indices = @transform_22, window_bounds = array<i64: 1, 128>}, {transform_indices = @transform_23, window_bounds = array<i64: 1, 1, 128>}]} {
    %c0 = arith.constant 0 : index
    %c0_0 = arith.constant 0 : index
    %c0_1 = arith.constant 0 : index
    %c0_2 = arith.constant 0 : index
    %0 = vector.load %arg1[%c0, %c0_0, %c0_1, %c0_2] : memref<1x1x32x32xf32, #tpu.memory_space<vmem>>, vector<1x1x32x32xf32>
    %1 = vector.shape_cast %0 : vector<1x1x32x32xf32> to vector<32x32xf32>
    %c0_3 = arith.constant 0 : index
    %c0_4 = arith.constant 0 : index
    %c0_5 = arith.constant 0 : index
    %2 = vector.load %arg2[%c0_3, %c0_4, %c0_5] : memref<3x32x192xf32, #tpu.memory_space<vmem>>, vector<1x32x192xf32>
    %3 = vector.shape_cast %2 : vector<1x32x192xf32> to vector<32x192xf32>
    %cst = arith.constant dense<0.000000e+00> : vector<32x192xf32>
    %4 = tpu.matmul %1, %3, %cst {dimension_numbers = #tpu.dot_dimension_numbers<[1], [0], [0], [1], [0, 0, 1, 1], [], []>} : vector<32x32xf32>, vector<32x192xf32>, vector<32x192xf32> -> vector<32x192xf32>
    %c1 = arith.constant 1 : index
    %c0_6 = arith.constant 0 : index
    %c0_7 = arith.constant 0 : index
    %5 = vector.load %arg2[%c1, %c0_6, %c0_7] : memref<3x32x192xf32, #tpu.memory_space<vmem>>, vector<1x32x192xf32>
    %6 = vector.shape_cast %5 : vector<1x32x192xf32> to vector<32x192xf32>
    %cst_8 = arith.constant dense<0.000000e+00> : vector<32x192xf32>
    %7 = tpu.matmul %1, %6, %cst_8 {dimension_numbers = #tpu.dot_dimension_numbers<[1], [0], [0], [1], [0, 0, 1, 1], [], []>} : vector<32x32xf32>, vector<32x192xf32>, vector<32x192xf32> -> vector<32x192xf32>
    %c2 = arith.constant 2 : index
    %c0_9 = arith.constant 0 : index
    %c0_10 = arith.constant 0 : index
    %8 = vector.load %arg2[%c2, %c0_9, %c0_10] : memref<3x32x192xf32, #tpu.memory_space<vmem>>, vector<1x32x192xf32>
    %9 = vector.shape_cast %8 : vector<1x32x192xf32> to vector<32x192xf32>
    %cst_11 = arith.constant dense<0.000000e+00> : vector<32x192xf32>
    %10 = tpu.matmul %1, %9, %cst_11 {dimension_numbers = #tpu.dot_dimension_numbers<[1], [0], [0], [1], [0, 0, 1, 1], [], []>} : vector<32x32xf32>, vector<32x192xf32>, vector<32x192xf32> -> vector<32x192xf32>
    %c0_12 = arith.constant 0 : index
    %c0_13 = arith.constant 0 : index
    %11 = vector.load %arg4[%c0_12, %c0_13] : memref<32x32xf32, #tpu.memory_space<vmem>>, vector<32x32xf32>
    %cst_14 = arith.constant dense<0.000000e+00> : vector<32x192xf32>
    %12 = tpu.matmul %11, %4, %cst_14 {dimension_numbers = #tpu.dot_dimension_numbers<[1], [0], [0], [1], [0, 0, 1, 1], [], []>} : vector<32x32xf32>, vector<32x192xf32>, vector<32x192xf32> -> vector<32x192xf32>
    %13 = arith.addf %12, %7 : vector<32x192xf32>
    %c0_15 = arith.constant 0 : index
    %c0_16 = arith.constant 0 : index
    %14 = vector.load %arg5[%c0_15, %c0_16] : memref<32x32xf32, #tpu.memory_space<vmem>>, vector<32x32xf32>
    %cst_17 = arith.constant dense<0.000000e+00> : vector<32x192xf32>
    %15 = tpu.matmul %14, %10, %cst_17 {dimension_numbers = #tpu.dot_dimension_numbers<[1], [0], [0], [1], [0, 0, 1, 1], [], []>} : vector<32x32xf32>, vector<32x192xf32>, vector<32x192xf32> -> vector<32x192xf32>
    %16 = arith.addf %13, %15 : vector<32x192xf32>
    %c0_18 = arith.constant 0 : index
    %c0_19 = arith.constant 0 : index
    %17 = vector.load %arg3[%c0_18, %c0_19] : memref<1x192xf32, #tpu.memory_space<vmem>>, vector<1x192xf32>
    %18 = vector.broadcast %17 : vector<1x192xf32> to vector<32x192xf32>
    %19 = arith.addf %16, %18 : vector<32x192xf32>
    %cst_20 = arith.constant 0.000000e+00 : f32
    %20 = vector.broadcast %cst_20 : f32 to vector<32x192xf32>
    %21 = arith.maximumf %19, %20 : vector<32x192xf32>
    %c0_21 = arith.constant 0 : index
    %c0_22 = arith.constant 0 : index
    %22 = vector.load %arg6[%c0_21, %c0_22] : memref<16x32xf32, #tpu.memory_space<vmem>>, vector<16x32xf32>
    %cst_23 = arith.constant dense<0.000000e+00> : vector<16x192xf32>
    %23 = tpu.matmul %22, %21, %cst_23 {dimension_numbers = #tpu.dot_dimension_numbers<[1], [0], [0], [1], [0, 0, 1, 1], [], []>} : vector<16x32xf32>, vector<32x192xf32>, vector<16x192xf32> -> vector<16x192xf32>
    %c0_24 = arith.constant 0 : index
    %c0_25 = arith.constant 0 : index
    %24 = vector.load %arg7[%c0_24, %c0_25] : memref<16x32xf32, #tpu.memory_space<vmem>>, vector<16x32xf32>
    %cst_26 = arith.constant dense<0.000000e+00> : vector<16x192xf32>
    %25 = tpu.matmul %24, %21, %cst_26 {dimension_numbers = #tpu.dot_dimension_numbers<[1], [0], [0], [1], [0, 0, 1, 1], [], []>} : vector<16x32xf32>, vector<32x192xf32>, vector<16x192xf32> -> vector<16x192xf32>
    %26 = arith.maximumf %23, %25 : vector<16x192xf32>
    %c0_27 = arith.constant 0 : index
    %c0_28 = arith.constant 0 : index
    %27 = vector.load %arg8[%c0_27, %c0_28] : memref<192x96xf32, #tpu.memory_space<vmem>>, vector<192x96xf32>
    %cst_29 = arith.constant dense<0.000000e+00> : vector<16x96xf32>
    %28 = tpu.matmul %26, %27, %cst_29 {dimension_numbers = #tpu.dot_dimension_numbers<[1], [0], [0], [1], [0, 0, 1, 1], [], []>} : vector<16x192xf32>, vector<192x96xf32>, vector<16x96xf32> -> vector<16x96xf32>
    %c0_30 = arith.constant 0 : index
    %c0_31 = arith.constant 0 : index
    %29 = vector.load %arg9[%c0_30, %c0_31] : memref<192x96xf32, #tpu.memory_space<vmem>>, vector<192x96xf32>
    %cst_32 = arith.constant dense<0.000000e+00> : vector<16x96xf32>
    %30 = tpu.matmul %26, %29, %cst_32 {dimension_numbers = #tpu.dot_dimension_numbers<[1], [0], [0], [1], [0, 0, 1, 1], [], []>} : vector<16x192xf32>, vector<192x96xf32>, vector<16x96xf32> -> vector<16x96xf32>
    %31 = arith.maximumf %28, %30 : vector<16x96xf32>
    %c0_33 = arith.constant 0 : index
    %c0_34 = arith.constant 0 : index
    %c0_35 = arith.constant 0 : index
    %32 = vector.load %arg10[%c0_33, %c0_34, %c0_35] : memref<3x96x256xf32, #tpu.memory_space<vmem>>, vector<1x96x256xf32>
    %33 = vector.shape_cast %32 : vector<1x96x256xf32> to vector<96x256xf32>
    %cst_36 = arith.constant dense<0.000000e+00> : vector<16x256xf32>
    %34 = tpu.matmul %31, %33, %cst_36 {dimension_numbers = #tpu.dot_dimension_numbers<[1], [0], [0], [1], [0, 0, 1, 1], [], []>} : vector<16x96xf32>, vector<96x256xf32>, vector<16x256xf32> -> vector<16x256xf32>
    %c1_37 = arith.constant 1 : index
    %c0_38 = arith.constant 0 : index
    %c0_39 = arith.constant 0 : index
    %35 = vector.load %arg10[%c1_37, %c0_38, %c0_39] : memref<3x96x256xf32, #tpu.memory_space<vmem>>, vector<1x96x256xf32>
    %36 = vector.shape_cast %35 : vector<1x96x256xf32> to vector<96x256xf32>
    %cst_40 = arith.constant dense<0.000000e+00> : vector<16x256xf32>
    %37 = tpu.matmul %31, %36, %cst_40 {dimension_numbers = #tpu.dot_dimension_numbers<[1], [0], [0], [1], [0, 0, 1, 1], [], []>} : vector<16x96xf32>, vector<96x256xf32>, vector<16x256xf32> -> vector<16x256xf32>
    %c2_41 = arith.constant 2 : index
    %c0_42 = arith.constant 0 : index
    %c0_43 = arith.constant 0 : index
    %38 = vector.load %arg10[%c2_41, %c0_42, %c0_43] : memref<3x96x256xf32, #tpu.memory_space<vmem>>, vector<1x96x256xf32>
    %39 = vector.shape_cast %38 : vector<1x96x256xf32> to vector<96x256xf32>
    %cst_44 = arith.constant dense<0.000000e+00> : vector<16x256xf32>
    %40 = tpu.matmul %31, %39, %cst_44 {dimension_numbers = #tpu.dot_dimension_numbers<[1], [0], [0], [1], [0, 0, 1, 1], [], []>} : vector<16x96xf32>, vector<96x256xf32>, vector<16x256xf32> -> vector<16x256xf32>
    %c0_45 = arith.constant 0 : index
    %c0_46 = arith.constant 0 : index
    %41 = vector.load %arg12[%c0_45, %c0_46] : memref<16x16xf32, #tpu.memory_space<vmem>>, vector<16x16xf32>
    %cst_47 = arith.constant dense<0.000000e+00> : vector<16x256xf32>
    %42 = tpu.matmul %41, %34, %cst_47 {dimension_numbers = #tpu.dot_dimension_numbers<[1], [0], [0], [1], [0, 0, 1, 1], [], []>} : vector<16x16xf32>, vector<16x256xf32>, vector<16x256xf32> -> vector<16x256xf32>
    %43 = arith.addf %42, %37 : vector<16x256xf32>
    %c0_48 = arith.constant 0 : index
    %c0_49 = arith.constant 0 : index
    %44 = vector.load %arg13[%c0_48, %c0_49] : memref<16x16xf32, #tpu.memory_space<vmem>>, vector<16x16xf32>
    %cst_50 = arith.constant dense<0.000000e+00> : vector<16x256xf32>
    %45 = tpu.matmul %44, %40, %cst_50 {dimension_numbers = #tpu.dot_dimension_numbers<[1], [0], [0], [1], [0, 0, 1, 1], [], []>} : vector<16x16xf32>, vector<16x256xf32>, vector<16x256xf32> -> vector<16x256xf32>
    %46 = arith.addf %43, %45 : vector<16x256xf32>
    %c0_51 = arith.constant 0 : index
    %c0_52 = arith.constant 0 : index
    %47 = vector.load %arg11[%c0_51, %c0_52] : memref<1x256xf32, #tpu.memory_space<vmem>>, vector<1x256xf32>
    %48 = vector.broadcast %47 : vector<1x256xf32> to vector<16x256xf32>
    %49 = arith.addf %46, %48 : vector<16x256xf32>
    %cst_53 = arith.constant 0.000000e+00 : f32
    %50 = vector.broadcast %cst_53 : f32 to vector<16x256xf32>
    %51 = arith.maximumf %49, %50 : vector<16x256xf32>
    %c0_54 = arith.constant 0 : index
    %c0_55 = arith.constant 0 : index
    %52 = vector.load %arg14[%c0_54, %c0_55] : memref<8x16xf32, #tpu.memory_space<vmem>>, vector<8x16xf32>
    %cst_56 = arith.constant dense<0.000000e+00> : vector<8x256xf32>
    %53 = tpu.matmul %52, %51, %cst_56 {dimension_numbers = #tpu.dot_dimension_numbers<[1], [0], [0], [1], [0, 0, 1, 1], [], []>} : vector<8x16xf32>, vector<16x256xf32>, vector<8x256xf32> -> vector<8x256xf32>
    %c0_57 = arith.constant 0 : index
    %c0_58 = arith.constant 0 : index
    %54 = vector.load %arg15[%c0_57, %c0_58] : memref<8x16xf32, #tpu.memory_space<vmem>>, vector<8x16xf32>
    %cst_59 = arith.constant dense<0.000000e+00> : vector<8x256xf32>
    %55 = tpu.matmul %54, %51, %cst_59 {dimension_numbers = #tpu.dot_dimension_numbers<[1], [0], [0], [1], [0, 0, 1, 1], [], []>} : vector<8x16xf32>, vector<16x256xf32>, vector<8x256xf32> -> vector<8x256xf32>
    %56 = arith.maximumf %53, %55 : vector<8x256xf32>
    %c0_60 = arith.constant 0 : index
    %c0_61 = arith.constant 0 : index
    %57 = vector.load %arg16[%c0_60, %c0_61] : memref<256x128xf32, #tpu.memory_space<vmem>>, vector<256x128xf32>
    %cst_62 = arith.constant dense<0.000000e+00> : vector<8x128xf32>
    %58 = tpu.matmul %56, %57, %cst_62 {dimension_numbers = #tpu.dot_dimension_numbers<[1], [0], [0], [1], [0, 0, 1, 1], [], []>} : vector<8x256xf32>, vector<256x128xf32>, vector<8x128xf32> -> vector<8x128xf32>
    %c0_63 = arith.constant 0 : index
    %c0_64 = arith.constant 0 : index
    %59 = vector.load %arg17[%c0_63, %c0_64] : memref<256x128xf32, #tpu.memory_space<vmem>>, vector<256x128xf32>
    %cst_65 = arith.constant dense<0.000000e+00> : vector<8x128xf32>
    %60 = tpu.matmul %56, %59, %cst_65 {dimension_numbers = #tpu.dot_dimension_numbers<[1], [0], [0], [1], [0, 0, 1, 1], [], []>} : vector<8x256xf32>, vector<256x128xf32>, vector<8x128xf32> -> vector<8x128xf32>
    %61 = arith.maximumf %58, %60 : vector<8x128xf32>
    %c0_66 = arith.constant 0 : index
    %c0_67 = arith.constant 0 : index
    %62 = vector.load %arg19[%c0_66, %c0_67] : memref<1x128xf32, #tpu.memory_space<vmem>>, vector<1x128xf32>
    %63 = vector.extract_strided_slice %61 {offsets = [0, 0], sizes = [1, 128], strides = [1, 1]} : vector<8x128xf32> to vector<1x128xf32>
    %c0_68 = arith.constant 0 : index
    %c0_69 = arith.constant 0 : index
    %c0_70 = arith.constant 0 : index
    %64 = vector.load %arg18[%c0_68, %c0_69, %c0_70] : memref<8x128x128xf32, #tpu.memory_space<vmem>>, vector<1x128x128xf32>
    %65 = vector.shape_cast %64 : vector<1x128x128xf32> to vector<128x128xf32>
    %cst_71 = arith.constant dense<0.000000e+00> : vector<1x128xf32>
    %66 = tpu.matmul %63, %65, %cst_71 {dimension_numbers = #tpu.dot_dimension_numbers<[1], [0], [0], [1], [0, 0, 1, 1], [], []>} : vector<1x128xf32>, vector<128x128xf32>, vector<1x128xf32> -> vector<1x128xf32>
    %67 = arith.addf %62, %66 : vector<1x128xf32>
    %68 = vector.extract_strided_slice %61 {offsets = [1, 0], sizes = [1, 128], strides = [1, 1]} : vector<8x128xf32> to vector<1x128xf32>
    %c1_72 = arith.constant 1 : index
    %c0_73 = arith.constant 0 : index
    %c0_74 = arith.constant 0 : index
    %69 = vector.load %arg18[%c1_72, %c0_73, %c0_74] : memref<8x128x128xf32, #tpu.memory_space<vmem>>, vector<1x128x128xf32>
    %70 = vector.shape_cast %69 : vector<1x128x128xf32> to vector<128x128xf32>
    %cst_75 = arith.constant dense<0.000000e+00> : vector<1x128xf32>
    %71 = tpu.matmul %68, %70, %cst_75 {dimension_numbers = #tpu.dot_dimension_numbers<[1], [0], [0], [1], [0, 0, 1, 1], [], []>} : vector<1x128xf32>, vector<128x128xf32>, vector<1x128xf32> -> vector<1x128xf32>
    %72 = arith.addf %67, %71 : vector<1x128xf32>
    %73 = vector.extract_strided_slice %61 {offsets = [2, 0], sizes = [1, 128], strides = [1, 1]} : vector<8x128xf32> to vector<1x128xf32>
    %c2_76 = arith.constant 2 : index
    %c0_77 = arith.constant 0 : index
    %c0_78 = arith.constant 0 : index
    %74 = vector.load %arg18[%c2_76, %c0_77, %c0_78] : memref<8x128x128xf32, #tpu.memory_space<vmem>>, vector<1x128x128xf32>
    %75 = vector.shape_cast %74 : vector<1x128x128xf32> to vector<128x128xf32>
    %cst_79 = arith.constant dense<0.000000e+00> : vector<1x128xf32>
    %76 = tpu.matmul %73, %75, %cst_79 {dimension_numbers = #tpu.dot_dimension_numbers<[1], [0], [0], [1], [0, 0, 1, 1], [], []>} : vector<1x128xf32>, vector<128x128xf32>, vector<1x128xf32> -> vector<1x128xf32>
    %77 = arith.addf %72, %76 : vector<1x128xf32>
    %78 = vector.extract_strided_slice %61 {offsets = [3, 0], sizes = [1, 128], strides = [1, 1]} : vector<8x128xf32> to vector<1x128xf32>
    %c3 = arith.constant 3 : index
    %c0_80 = arith.constant 0 : index
    %c0_81 = arith.constant 0 : index
    %79 = vector.load %arg18[%c3, %c0_80, %c0_81] : memref<8x128x128xf32, #tpu.memory_space<vmem>>, vector<1x128x128xf32>
    %80 = vector.shape_cast %79 : vector<1x128x128xf32> to vector<128x128xf32>
    %cst_82 = arith.constant dense<0.000000e+00> : vector<1x128xf32>
    %81 = tpu.matmul %78, %80, %cst_82 {dimension_numbers = #tpu.dot_dimension_numbers<[1], [0], [0], [1], [0, 0, 1, 1], [], []>} : vector<1x128xf32>, vector<128x128xf32>, vector<1x128xf32> -> vector<1x128xf32>
    %82 = arith.addf %77, %81 : vector<1x128xf32>
    %83 = vector.extract_strided_slice %61 {offsets = [4, 0], sizes = [1, 128], strides = [1, 1]} : vector<8x128xf32> to vector<1x128xf32>
    %c4 = arith.constant 4 : index
    %c0_83 = arith.constant 0 : index
    %c0_84 = arith.constant 0 : index
    %84 = vector.load %arg18[%c4, %c0_83, %c0_84] : memref<8x128x128xf32, #tpu.memory_space<vmem>>, vector<1x128x128xf32>
    %85 = vector.shape_cast %84 : vector<1x128x128xf32> to vector<128x128xf32>
    %cst_85 = arith.constant dense<0.000000e+00> : vector<1x128xf32>
    %86 = tpu.matmul %83, %85, %cst_85 {dimension_numbers = #tpu.dot_dimension_numbers<[1], [0], [0], [1], [0, 0, 1, 1], [], []>} : vector<1x128xf32>, vector<128x128xf32>, vector<1x128xf32> -> vector<1x128xf32>
    %87 = arith.addf %82, %86 : vector<1x128xf32>
    %88 = vector.extract_strided_slice %61 {offsets = [5, 0], sizes = [1, 128], strides = [1, 1]} : vector<8x128xf32> to vector<1x128xf32>
    %c5 = arith.constant 5 : index
    %c0_86 = arith.constant 0 : index
    %c0_87 = arith.constant 0 : index
    %89 = vector.load %arg18[%c5, %c0_86, %c0_87] : memref<8x128x128xf32, #tpu.memory_space<vmem>>, vector<1x128x128xf32>
    %90 = vector.shape_cast %89 : vector<1x128x128xf32> to vector<128x128xf32>
    %cst_88 = arith.constant dense<0.000000e+00> : vector<1x128xf32>
    %91 = tpu.matmul %88, %90, %cst_88 {dimension_numbers = #tpu.dot_dimension_numbers<[1], [0], [0], [1], [0, 0, 1, 1], [], []>} : vector<1x128xf32>, vector<128x128xf32>, vector<1x128xf32> -> vector<1x128xf32>
    %92 = arith.addf %87, %91 : vector<1x128xf32>
    %93 = vector.extract_strided_slice %61 {offsets = [6, 0], sizes = [1, 128], strides = [1, 1]} : vector<8x128xf32> to vector<1x128xf32>
    %c6 = arith.constant 6 : index
    %c0_89 = arith.constant 0 : index
    %c0_90 = arith.constant 0 : index
    %94 = vector.load %arg18[%c6, %c0_89, %c0_90] : memref<8x128x128xf32, #tpu.memory_space<vmem>>, vector<1x128x128xf32>
    %95 = vector.shape_cast %94 : vector<1x128x128xf32> to vector<128x128xf32>
    %cst_91 = arith.constant dense<0.000000e+00> : vector<1x128xf32>
    %96 = tpu.matmul %93, %95, %cst_91 {dimension_numbers = #tpu.dot_dimension_numbers<[1], [0], [0], [1], [0, 0, 1, 1], [], []>} : vector<1x128xf32>, vector<128x128xf32>, vector<1x128xf32> -> vector<1x128xf32>
    %97 = arith.addf %92, %96 : vector<1x128xf32>
    %98 = vector.extract_strided_slice %61 {offsets = [7, 0], sizes = [1, 128], strides = [1, 1]} : vector<8x128xf32> to vector<1x128xf32>
    %c7 = arith.constant 7 : index
    %c0_92 = arith.constant 0 : index
    %c0_93 = arith.constant 0 : index
    %99 = vector.load %arg18[%c7, %c0_92, %c0_93] : memref<8x128x128xf32, #tpu.memory_space<vmem>>, vector<1x128x128xf32>
    %100 = vector.shape_cast %99 : vector<1x128x128xf32> to vector<128x128xf32>
    %cst_94 = arith.constant dense<0.000000e+00> : vector<1x128xf32>
    %101 = tpu.matmul %98, %100, %cst_94 {dimension_numbers = #tpu.dot_dimension_numbers<[1], [0], [0], [1], [0, 0, 1, 1], [], []>} : vector<1x128xf32>, vector<128x128xf32>, vector<1x128xf32> -> vector<1x128xf32>
    %102 = arith.addf %97, %101 : vector<1x128xf32>
    %cst_95 = arith.constant 0.000000e+00 : f32
    %103 = vector.broadcast %cst_95 : f32 to vector<1x128xf32>
    %104 = arith.maximumf %102, %103 : vector<1x128xf32>
    %c0_96 = arith.constant 0 : index
    %c0_97 = arith.constant 0 : index
    %105 = vector.load %arg20[%c0_96, %c0_97] : memref<128x128xf32, #tpu.memory_space<vmem>>, vector<128x128xf32>
    %cst_98 = arith.constant dense<0.000000e+00> : vector<1x128xf32>
    %106 = tpu.matmul %104, %105, %cst_98 {dimension_numbers = #tpu.dot_dimension_numbers<[1], [0], [0], [1], [0, 0, 1, 1], [], []>} : vector<1x128xf32>, vector<128x128xf32>, vector<1x128xf32> -> vector<1x128xf32>
    %c0_99 = arith.constant 0 : index
    %c0_100 = arith.constant 0 : index
    %107 = vector.load %arg21[%c0_99, %c0_100] : memref<1x128xf32, #tpu.memory_space<vmem>>, vector<1x128xf32>
    %108 = arith.addf %106, %107 : vector<1x128xf32>
    %cst_101 = arith.constant 0.000000e+00 : f32
    %109 = vector.broadcast %cst_101 : f32 to vector<1x128xf32>
    %110 = arith.maximumf %108, %109 : vector<1x128xf32>
    %c0_102 = arith.constant 0 : index
    %c0_103 = arith.constant 0 : index
    %111 = vector.load %arg22[%c0_102, %c0_103] : memref<128x128xf32, #tpu.memory_space<vmem>>, vector<128x128xf32>
    %cst_104 = arith.constant dense<0.000000e+00> : vector<1x128xf32>
    %112 = tpu.matmul %110, %111, %cst_104 {dimension_numbers = #tpu.dot_dimension_numbers<[1], [0], [0], [1], [0, 0, 1, 1], [], []>} : vector<1x128xf32>, vector<128x128xf32>, vector<1x128xf32> -> vector<1x128xf32>
    %c0_105 = arith.constant 0 : index
    %c0_106 = arith.constant 0 : index
    %113 = vector.load %arg23[%c0_105, %c0_106] : memref<1x128xf32, #tpu.memory_space<vmem>>, vector<1x128xf32>
    %114 = arith.addf %112, %113 : vector<1x128xf32>
    %c0_107 = arith.constant 0 : index
    %c0_108 = arith.constant 0 : index
    %c0_109 = arith.constant 0 : index
    %115 = vector.load %arg24[%c0_107, %c0_108, %c0_109] : memref<1x1x128xf32, #tpu.memory_space<vmem>>, vector<1x1x128xf32>
    %116 = vector.shape_cast %115 : vector<1x1x128xf32> to vector<1x128xf32>
    %117 = vector.shape_cast %114 : vector<1x128xf32> to vector<1x1x128xf32>
    tpu.vector_store %arg24[%c0_107, %c0_108, %c0_109], %117 {strides = array<i32>} : memref<1x1x128xf32, #tpu.memory_space<vmem>>, vector<1x1x128xf32>,
    return
  }
  func.func @transform_0(%arg0: i32) -> (i32, i32, i32, i32) {
    %c0_i32 = arith.constant 0 : i32
    %c0_i32_0 = arith.constant 0 : i32
    %c0_i32_1 = arith.constant 0 : i32
    %c0_i32_2 = arith.constant 0 : i32
    return %arg0, %c0_i32, %c0_i32_0, %c0_i32_1 : i32, i32, i32, i32
  }
  func.func @transform_1(%arg0: i32) -> (i32, i32, i32) {
    %c0_i32 = arith.constant 0 : i32
    %c0_i32_0 = arith.constant 0 : i32
    %c0_i32_1 = arith.constant 0 : i32
    %c0_i32_2 = arith.constant 0 : i32
    return %c0_i32, %c0_i32_0, %c0_i32_1 : i32, i32, i32
  }
  func.func @transform_2(%arg0: i32) -> (i32, i32) {
    %c0_i32 = arith.constant 0 : i32
    %c0_i32_0 = arith.constant 0 : i32
    %c0_i32_1 = arith.constant 0 : i32
    return %c0_i32, %c0_i32_0 : i32, i32
  }
  func.func @transform_3(%arg0: i32) -> (i32, i32) {
    %c0_i32 = arith.constant 0 : i32
    %c0_i32_0 = arith.constant 0 : i32
    %c0_i32_1 = arith.constant 0 : i32
    return %c0_i32, %c0_i32_0 : i32, i32
  }
  func.func @transform_4(%arg0: i32) -> (i32, i32) {
    %c0_i32 = arith.constant 0 : i32
    %c0_i32_0 = arith.constant 0 : i32
    %c0_i32_1 = arith.constant 0 : i32
    return %c0_i32, %c0_i32_0 : i32, i32
  }
  func.func @transform_5(%arg0: i32) -> (i32, i32) {
    %c0_i32 = arith.constant 0 : i32
    %c0_i32_0 = arith.constant 0 : i32
    %c0_i32_1 = arith.constant 0 : i32
    return %c0_i32, %c0_i32_0 : i32, i32
  }
  func.func @transform_6(%arg0: i32) -> (i32, i32) {
    %c0_i32 = arith.constant 0 : i32
    %c0_i32_0 = arith.constant 0 : i32
    %c0_i32_1 = arith.constant 0 : i32
    return %c0_i32, %c0_i32_0 : i32, i32
  }
  func.func @transform_7(%arg0: i32) -> (i32, i32) {
    %c0_i32 = arith.constant 0 : i32
    %c0_i32_0 = arith.constant 0 : i32
    %c0_i32_1 = arith.constant 0 : i32
    return %c0_i32, %c0_i32_0 : i32, i32
  }
  func.func @transform_8(%arg0: i32) -> (i32, i32) {
    %c0_i32 = arith.constant 0 : i32
    %c0_i32_0 = arith.constant 0 : i32
    %c0_i32_1 = arith.constant 0 : i32
    return %c0_i32, %c0_i32_0 : i32, i32
  }
  func.func @transform_9(%arg0: i32) -> (i32, i32, i32) {
    %c0_i32 = arith.constant 0 : i32
    %c0_i32_0 = arith.constant 0 : i32
    %c0_i32_1 = arith.constant 0 : i32
    %c0_i32_2 = arith.constant 0 : i32
    return %c0_i32, %c0_i32_0, %c0_i32_1 : i32, i32, i32
  }
  func.func @transform_10(%arg0: i32) -> (i32, i32) {
    %c0_i32 = arith.constant 0 : i32
    %c0_i32_0 = arith.constant 0 : i32
    %c0_i32_1 = arith.constant 0 : i32
    return %c0_i32, %c0_i32_0 : i32, i32
  }
  func.func @transform_11(%arg0: i32) -> (i32, i32) {
    %c0_i32 = arith.constant 0 : i32
    %c0_i32_0 = arith.constant 0 : i32
    %c0_i32_1 = arith.constant 0 : i32
    return %c0_i32, %c0_i32_0 : i32, i32
  }
  func.func @transform_12(%arg0: i32) -> (i32, i32) {
    %c0_i32 = arith.constant 0 : i32
    %c0_i32_0 = arith.constant 0 : i32
    %c0_i32_1 = arith.constant 0 : i32
    return %c0_i32, %c0_i32_0 : i32, i32
  }
  func.func @transform_13(%arg0: i32) -> (i32, i32) {
    %c0_i32 = arith.constant 0 : i32
    %c0_i32_0 = arith.constant 0 : i32
    %c0_i32_1 = arith.constant 0 : i32
    return %c0_i32, %c0_i32_0 : i32, i32
  }
  func.func @transform_14(%arg0: i32) -> (i32, i32) {
    %c0_i32 = arith.constant 0 : i32
    %c0_i32_0 = arith.constant 0 : i32
    %c0_i32_1 = arith.constant 0 : i32
    return %c0_i32, %c0_i32_0 : i32, i32
  }
  func.func @transform_15(%arg0: i32) -> (i32, i32) {
    %c0_i32 = arith.constant 0 : i32
    %c0_i32_0 = arith.constant 0 : i32
    %c0_i32_1 = arith.constant 0 : i32
    return %c0_i32, %c0_i32_0 : i32, i32
  }
  func.func @transform_16(%arg0: i32) -> (i32, i32) {
    %c0_i32 = arith.constant 0 : i32
    %c0_i32_0 = arith.constant 0 : i32
    %c0_i32_1 = arith.constant 0 : i32
    return %c0_i32, %c0_i32_0 : i32, i32
  }
  func.func @transform_17(%arg0: i32) -> (i32, i32, i32) {
    %c0_i32 = arith.constant 0 : i32
    %c0_i32_0 = arith.constant 0 : i32
    %c0_i32_1 = arith.constant 0 : i32
    %c0_i32_2 = arith.constant 0 : i32
    return %c0_i32, %c0_i32_0, %c0_i32_1 : i32, i32, i32
  }
  func.func @transform_18(%arg0: i32) -> (i32, i32) {
    %c0_i32 = arith.constant 0 : i32
    %c0_i32_0 = arith.constant 0 : i32
    %c0_i32_1 = arith.constant 0 : i32
    return %c0_i32, %c0_i32_0 : i32, i32
  }
  func.func @transform_19(%arg0: i32) -> (i32, i32) {
    %c0_i32 = arith.constant 0 : i32
    %c0_i32_0 = arith.constant 0 : i32
    %c0_i32_1 = arith.constant 0 : i32
    return %c0_i32, %c0_i32_0 : i32, i32
  }
  func.func @transform_20(%arg0: i32) -> (i32, i32) {
    %c0_i32 = arith.constant 0 : i32
    %c0_i32_0 = arith.constant 0 : i32
    %c0_i32_1 = arith.constant 0 : i32
    return %c0_i32, %c0_i32_0 : i32, i32
  }
  func.func @transform_21(%arg0: i32) -> (i32, i32) {
    %c0_i32 = arith.constant 0 : i32
    %c0_i32_0 = arith.constant 0 : i32
    %c0_i32_1 = arith.constant 0 : i32
    return %c0_i32, %c0_i32_0 : i32, i32
  }
  func.func @transform_22(%arg0: i32) -> (i32, i32) {
    %c0_i32 = arith.constant 0 : i32
    %c0_i32_0 = arith.constant 0 : i32
    %c0_i32_1 = arith.constant 0 : i32
    return %c0_i32, %c0_i32_0 : i32, i32
  }
  func.func @transform_23(%arg0: i32) -> (i32, i32, i32) {
    %c0_i32 = arith.constant 0 : i32
    %c0_i32_0 = arith.constant 0 : i32
    %c0_i32_1 = arith.constant 0 : i32
    return %arg0, %c0_i32, %c0_i32_0 : i32, i32, i32
  }
}

</mosaic_0001>

<llo_original>
// kernel: _lambda_.1
$region0: #{_lambda_.1}
  #allocation0 [shape = 'u32[]', space=smem, size = 0x4, offset = 0x4, fixed_abs, tag = 'smem constant byte address 0x4 - core index']
  #allocation1 [shape = 'u32[144,128]{1,0:T(1,128)}', space=vmem, size = 0x12000, scoped, tag = 'internal scratch']
  %s0 = inlined_call_operand.hbm [shape: f32[2,1,32,32], index: 0, kind: input, shape index: {}]
  %s1 = inlined_call_operand.hbm [shape: f32[3,32,192], index: 1, kind: input, shape index: {}]
  %s2 = inlined_call_operand.hbm [shape: f32[1,192], index: 2, kind: input, shape index: {}]
  %s3 = inlined_call_operand.hbm [shape: f32[32,32], index: 3, kind: input, shape index: {}]
  %s4 = inlined_call_operand.hbm [shape: f32[32,32], index: 4, kind: input, shape index: {}]
  %s5 = inlined_call_operand.hbm [shape: f32[16,32], index: 5, kind: input, shape index: {}]
  %s6 = inlined_call_operand.hbm [shape: f32[16,32], index: 6, kind: input, shape index: {}]
  %s7 = inlined_call_operand.hbm [shape: f32[192,96], index: 7, kind: input, shape index: {}]
  %s8 = inlined_call_operand.hbm [shape: f32[192,96], index: 8, kind: input, shape index: {}]
  %s9 = inlined_call_operand.hbm [shape: f32[3,96,256], index: 9, kind: input, shape index: {}]
  %s10 = inlined_call_operand.hbm [shape: f32[1,256], index: 10, kind: input, shape index: {}]
  %s11 = inlined_call_operand.hbm [shape: f32[16,16], index: 11, kind: input, shape index: {}]
  %s12 = inlined_call_operand.vmem [shape: f32[16,16], index: 12, kind: input, shape index: {}]
  %s13 = inlined_call_operand.hbm [shape: f32[8,16], index: 13, kind: input, shape index: {}]
  %s14 = inlined_call_operand.vmem [shape: f32[8,16], index: 14, kind: input, shape index: {}]
  %s15 = inlined_call_operand.hbm [shape: f32[256,128], index: 15, kind: input, shape index: {}]
  %s16 = inlined_call_operand.hbm [shape: f32[256,128], index: 16, kind: input, shape index: {}]
  %s17 = inlined_call_operand.hbm [shape: f32[8,128,128], index: 17, kind: input, shape index: {}]
  %s18 = inlined_call_operand.vmem [shape: f32[1,128], index: 18, kind: input, shape index: {}]
  %s19 = inlined_call_operand.hbm [shape: f32[128,128], index: 19, kind: input, shape index: {}]
  %s20 = inlined_call_operand.vmem [shape: f32[1,128], index: 20, kind: input, shape index: {}]
  %s21 = inlined_call_operand.hbm [shape: f32[128,128], index: 21, kind: input, shape index: {}]
  %s22 = inlined_call_operand.vmem [shape: f32[1,128], index: 22, kind: input, shape index: {}]
  %s23 = inlined_call_operand.hbm [shape: f32[2,1,128], index: 23, kind: output, shape index: {}]
  %s24 = sld [smem:[#allocation0]]
  $region197: #{_lambda_.1} parent=0
    _
  %s26 = ssub.s32 1, %s24
  %s27 = scalar_select 0, %s26, %s24
  $region1: #{_lambda_.1} parent=0
    #allocation2 [shape = 'u8[32768]{0}', space=vmem, size = 0x8000, scoped, tag = 'input window, operand 0']
    #allocation3 [shape = 's32[2]{0}', space=sflag, size = 0x8, scoped, tag = 'scoped memory for _lambda_.1']
    #allocation4 [shape = 's32[2]{0}', space=sflag, size = 0x8, scoped, tag = 'scoped memory for _lambda_.1']
    #allocation5 [shape = 'u8[98304]{0}', space=vmem, size = 0x18000, scoped, tag = 'input window, operand 1, single buffered']
    #allocation6 [shape = 's32[1]{0}', space=sflag, size = 0x4, scoped, tag = 'scoped memory for _lambda_.1']
    #allocation7 [shape = 'u8[1024]{0}', space=vmem, size = 0x400, scoped, tag = 'input window, operand 2, single buffered']
    #allocation8 [shape = 'u8[16384]{0}', space=vmem, size = 0x4000, scoped, tag = 'input window, operand 3, single buffered']
    #allocation9 [shape = 's32[1]{0}', space=sflag, size = 0x4, scoped, tag = 'scoped memory for _lambda_.1']
    #allocation10 [shape = 'u8[16384]{0}', space=vmem, size = 0x4000, scoped, tag = 'input window, operand 4, single buffered']
    #allocation11 [shape = 'u8[8192]{0}', space=vmem, size = 0x2000, scoped, tag = 'input window, operand 5, single buffered']
    #allocation12 [shape = 's32[1]{0}', space=sflag, size = 0x4, scoped, tag = 'scoped memory for _lambda_.1']
    #allocation13 [shape = 'u8[8192]{0}', space=vmem, size = 0x2000, scoped, tag = 'input window, operand 6, single buffered']
    #allocation14 [shape = 'u8[98304]{0}', space=vmem, size = 0x18000, scoped, tag = 'input window, operand 7, single buffered']
    #allocation15 [shape = 's32[1]{0}', space=sflag, size = 0x4, scoped, tag = 'scoped memory for _lambda_.1']
    #allocation16 [shape = 'u8[98304]{0}', space=vmem, size = 0x18000, scoped, tag = 'input window, operand 8, single buffered']
    #allocation17 [shape = 'u8[294912]{0}', space=vmem, size = 0x48000, scoped, tag = 'input window, operand 9, single buffered']
    #allocation18 [shape = 's32[1]{0}', space=sflag, size = 0x4, scoped, tag = 'scoped memory for _lambda_.1']
    #allocation19 [shape = 'u8[1024]{0}', space=vmem, size = 0x400, scoped, tag = 'input window, operand 10, single buffered']
    #allocation20 [shape = 'u8[8192]{0}', space=vmem, size = 0x2000, scoped, tag = 'input window, operand 11, single buffered']
    #allocation21 [shape = 's32[1]{0}', space=sflag, size = 0x4, scoped, tag = 'scoped memory for _lambda_.1']
    #allocation22 [shape = 'u8[4096]{0}', space=vmem, size = 0x1000, scoped, tag = 'input window, operand 13, single buffered']
    #allocation23 [shape = 'u8[131072]{0}', space=vmem, size = 0x20000, scoped, tag = 'input window, operand 15, single buffered']
    #allocation24 [shape = 's32[1]{0}', space=sflag, size = 0x4, scoped, tag = 'scoped memory for _lambda_.1']
    #allocation25 [shape = 'u8[131072]{0}', space=vmem, size = 0x20000, scoped, tag = 'input window, operand 16, single buffered']
    #allocation26 [shape = 'u8[524288]{0}', space=vmem, size = 0x80000, scoped, tag = 'input window, operand 17, single buffered']
    #allocation27 [shape = 's32[1]{0}', space=sflag, size = 0x4, scoped, tag = 'scoped memory for _lambda_.1']
    #allocation28 [shape = 'u8[65536]{0}', space=vmem, size = 0x10000, scoped, tag = 'input window, operand 19, single buffered']
    #allocation29 [shape = 'u8[65536]{0}', space=vmem, size = 0x10000, scoped, tag = 'input window, operand 21, single buffered']
    #allocation30 [shape = 's32[1]{0}', space=sflag, size = 0x4, scoped, tag = 'scoped memory for _lambda_.1']
    #allocation31 [shape = 'u8[1024]{0}', space=vmem, size = 0x400, scoped, tag = 'output window, operand 0']
    %28 = vsyncpa [#allocation3], 0
    %s29 = scalar_lea.sflag [#allocation3], 1
    %30 = vsyncpa %s29, 0
    %31 = vsyncpa [#allocation6], 0
    %32 = vsyncpa [#allocation9], 0
    %33 = vsyncpa [#allocation12], 0
    %34 = vsyncpa [#allocation15], 0
    %35 = vsyncpa [#allocation18], 0
    %36 = vsyncpa [#allocation21], 0
    %37 = vsyncpa [#allocation24], 0
    %38 = vsyncpa [#allocation27], 0
    %39 = vsyncpa [#allocation30], 0
    %40 = vsyncpa [#allocation4], 0
    %s41 = scalar_lea.sflag [#allocation4], 1
    %42 = vsyncpa %s41, 0
    loop: start=0, step=1, limit=4
    $region2: #{_lambda_.1} parent=1 // loop_pre_header
      _
    $region3: #{_lambda_.1} parent=1 // loop_header
      %s44 = sphi 0, %s48
      %p45 = scmp.ge.s32.totalorder %s44, 4
      %s54 = sphi 0, %s56
      %s57 = sphi 0, %s54
      %s58 = sphi 0, %s57
      %s74 = sphi 0, %s58
      %s78 = sphi 0, %s78
      %s80 = sphi 0, %s78
      %s81 = sphi 0, %s80
      %s95 = sphi 0, %s81
      %s99 = sphi 0, %s99
      %s101 = sphi 0, %s99
      %s102 = sphi 0, %s101
      %s116 = sphi 0, %s102
      %s120 = sphi 0, %s120
      %s122 = sphi 0, %s120
      %s123 = sphi 0, %s122
      %s137 = sphi 0, %s123
      %s141 = sphi 0, %s141
      %s143 = sphi 0, %s141
      %s144 = sphi 0, %s143
      %s158 = sphi 0, %s144
      %s162 = sphi 0, %s162
      %s164 = sphi 0, %s162
      %s165 = sphi 0, %s164
      %s179 = sphi 0, %s165
      %s183 = sphi 0, %s183
      %s185 = sphi 0, %s183
      %s186 = sphi 0, %s185
      %s200 = sphi 0, %s186
      %s204 = sphi 0, %s204
      %s206 = sphi 0, %s204
      %s207 = sphi 0, %s206
      %s221 = sphi 0, %s207
      %s225 = sphi 0, %s225
      %s227 = sphi 0, %s225
      %s228 = sphi 0, %s227
      %s242 = sphi 0, %s228
      %s246 = sphi 0, %s246
      %s248 = sphi 0, %s246
      %s249 = sphi 0, %s248
      %s263 = sphi 0, %s249
      %s267 = sphi 0, %s267
      %s269 = sphi 0, %s267
      %s270 = sphi 0, %s269
      %s284 = sphi 0, %s270
      %s288 = sphi 0, %s288
      %s290 = sphi 0, %s288
      %s291 = sphi 0, %s290
      %s305 = sphi 0, %s291
      %s309 = sphi 0, %s309
      %s311 = sphi 0, %s309
      %s312 = sphi 0, %s311
      %s326 = sphi 0, %s312
      %s330 = sphi 0, %s330
      %s332 = sphi 0, %s330
      %s333 = sphi 0, %s332
      %s347 = sphi 0, %s333
      %s351 = sphi 0, %s351
      %s353 = sphi 0, %s351
      %s354 = sphi 0, %s353
      %s368 = sphi 0, %s354
      %s372 = sphi 0, %s372
      %s374 = sphi 0, %s372
      %s375 = sphi 0, %s374
      %s389 = sphi 0, %s375
      %s393 = sphi 0, %s393
      %s395 = sphi 0, %s393
      %s396 = sphi 0, %s395
      %s410 = sphi 0, %s396
      %s414 = sphi 0, %s414
      %s416 = sphi 0, %s414
      %s417 = sphi 0, %s416
      %s431 = sphi 0, %s417
      %s435 = sphi 0, %s435
      %s437 = sphi 0, %s435
      %s438 = sphi 0, %s437
      %s452 = sphi 0, %s438
      %s456 = sphi 0, %s456
      %s458 = sphi 0, %s456
      %s459 = sphi 0, %s458
      %s473 = sphi 0, %s459
      %s477 = sphi 0, %s477
      %s479 = sphi 0, %s477
      %s480 = sphi 0, %s479
      %s494 = sphi 0, %s480
      %s498 = sphi 0, %s498
      %s500 = sphi 0, %s498
      %s501 = sphi 0, %s500
      %s515 = sphi 0, %s501
      %s519 = sphi 0, %s519
      %s521 = sphi 0, %s519
      %s522 = sphi 0, %s521
      %s536 = sphi 0, %s522
      %s542 = sphi 0, %s544
      %s545 = sphi 0, %s542
      %s546 = sphi 0, %s545
      %s562 = sphi 0, %s546
    $region4: #{_lambda_.1} parent=1 // loop_header_branch
      %47 = sbr.rel (%p45) target = $region8
    $region5: #{_lambda_.1} parent=1 // loop_body
      %s49 = ssub.s32 %s44, 1
      %s50 = ssub.s32 %s44, 2
      %s51 = sadd.s32 %s44, 1
      %s52 = ssub.s32 %s44, %s51
      %p53 = scmp.eq.s32.totalorder %s52, 0
      %s55 = sadd.s32 %s54, 1
      %s56 = scalar_select %p53, %s54, %s55
      %p59 = pneg %p53
      %p60 = scmp.eq.s32.totalorder %s44, 1
      %p61 = por %p59, %p60
      %p62 = scmp.ne.s32.totalorder %s54, %s57
      %p63 = scmp.eq.s32.totalorder %s44, 0
      %p64 = por %p62, %p63
      %p65 = scmp.ne.s32.totalorder %s54, %s57
      %p66 = scmp.eq.s32.totalorder %s49, 1
      %p67 = por %p65, %p66
      %p68 = scmp.ne.s32.totalorder %s57, %s58
      %p69 = scmp.eq.s32.totalorder %s49, 0
      %p70 = por %p68, %p69
      %p71 = scmp.ne.s32.totalorder %s57, %s58
      %p72 = scmp.eq.s32.totalorder %s50, 1
      %p73 = por %p71, %p72
      %p75 = scmp.ne.s32.totalorder %s58, %s74
      %p76 = scmp.eq.s32.totalorder %s50, 0
      %p77 = por %p75, %p76
      %s79 = sadd.s32 %s78, 1
      %p82 = scmp.eq.s32.totalorder %s44, 1
      %p83 = scmp.ne.s32.totalorder %s78, %s80
      %p84 = scmp.eq.s32.totalorder %s44, 0
      %p85 = por %p83, %p84
      %p86 = scmp.ne.s32.totalorder %s78, %s80
      %p87 = scmp.eq.s32.totalorder %s49, 1
      %p88 = por %p86, %p87
      %p89 = scmp.ne.s32.totalorder %s80, %s81
      %p90 = scmp.eq.s32.totalorder %s49, 0
      %p91 = por %p89, %p90
      %p92 = scmp.ne.s32.totalorder %s80, %s81
      %p93 = scmp.eq.s32.totalorder %s50, 1
      %p94 = por %p92, %p93
      %p96 = scmp.ne.s32.totalorder %s81, %s95
      %p97 = scmp.eq.s32.totalorder %s50, 0
      %p98 = por %p96, %p97
      %s100 = sadd.s32 %s99, 1
      %p103 = scmp.eq.s32.totalorder %s44, 1
      %p104 = scmp.ne.s32.totalorder %s99, %s101
      %p105 = scmp.eq.s32.totalorder %s44, 0
      %p106 = por %p104, %p105
      %p107 = scmp.ne.s32.totalorder %s99, %s101
      %p108 = scmp.eq.s32.totalorder %s49, 1
      %p109 = por %p107, %p108
      %p110 = scmp.ne.s32.totalorder %s101, %s102
      %p111 = scmp.eq.s32.totalorder %s49, 0
      %p112 = por %p110, %p111
      %p113 = scmp.ne.s32.totalorder %s101, %s102
      %p114 = scmp.eq.s32.totalorder %s50, 1
      %p115 = por %p113, %p114
      %p117 = scmp.ne.s32.totalorder %s102, %s116
      %p118 = scmp.eq.s32.totalorder %s50, 0
      %p119 = por %p117, %p118
      %s121 = sadd.s32 %s120, 1
      %p124 = scmp.eq.s32.totalorder %s44, 1
      %p125 = scmp.ne.s32.totalorder %s120, %s122
      %p126 = scmp.eq.s32.totalorder %s44, 0
      %p127 = por %p125, %p126
      %p128 = scmp.ne.s32.totalorder %s120, %s122
      %p129 = scmp.eq.s32.totalorder %s49, 1
      %p130 = por %p128, %p129
      %p131 = scmp.ne.s32.totalorder %s122, %s123
      %p132 = scmp.eq.s32.totalorder %s49, 0
      %p133 = por %p131, %p132
      %p134 = scmp.ne.s32.totalorder %s122, %s123
      %p135 = scmp.eq.s32.totalorder %s50, 1
      %p136 = por %p134, %p135
      %p138 = scmp.ne.s32.totalorder %s123, %s137
      %p139 = scmp.eq.s32.totalorder %s50, 0
      %p140 = por %p138, %p139
      %s142 = sadd.s32 %s141, 1
      %p145 = scmp.eq.s32.totalorder %s44, 1
      %p146 = scmp.ne.s32.totalorder %s141, %s143
      %p147 = scmp.eq.s32.totalorder %s44, 0
      %p148 = por %p146, %p147
      %p149 = scmp.ne.s32.totalorder %s141, %s143
      %p150 = scmp.eq.s32.totalorder %s49, 1
      %p151 = por %p149, %p150
      %p152 = scmp.ne.s32.totalorder %s143, %s144
      %p153 = scmp.eq.s32.totalorder %s49, 0
      %p154 = por %p152, %p153
      %p155 = scmp.ne.s32.totalorder %s143, %s144
      %p156 = scmp.eq.s32.totalorder %s50, 1
      %p157 = por %p155, %p156
      %p159 = scmp.ne.s32.totalorder %s144, %s158
      %p160 = scmp.eq.s32.totalorder %s50, 0
      %p161 = por %p159, %p160
      %s163 = sadd.s32 %s162, 1
      %p166 = scmp.eq.s32.totalorder %s44, 1
      %p167 = scmp.ne.s32.totalorder %s162, %s164
      %p168 = scmp.eq.s32.totalorder %s44, 0
      %p169 = por %p167, %p168
      %p170 = scmp.ne.s32.totalorder %s162, %s164
      %p171 = scmp.eq.s32.totalorder %s49, 1
      %p172 = por %p170, %p171
      %p173 = scmp.ne.s32.totalorder %s164, %s165
      %p174 = scmp.eq.s32.totalorder %s49, 0
      %p175 = por %p173, %p174
      %p176 = scmp.ne.s32.totalorder %s164, %s165
      %p177 = scmp.eq.s32.totalorder %s50, 1
      %p178 = por %p176, %p177
      %p180 = scmp.ne.s32.totalorder %s165, %s179
      %p181 = scmp.eq.s32.totalorder %s50, 0
      %p182 = por %p180, %p181
      %s184 = sadd.s32 %s183, 1
      %p187 = scmp.eq.s32.totalorder %s44, 1
      %p188 = scmp.ne.s32.totalorder %s183, %s185
      %p189 = scmp.eq.s32.totalorder %s44, 0
      %p190 = por %p188, %p189
      %p191 = scmp.ne.s32.totalorder %s183, %s185
      %p192 = scmp.eq.s32.totalorder %s49, 1
      %p193 = por %p191, %p192
      %p194 = scmp.ne.s32.totalorder %s185, %s186
      %p195 = scmp.eq.s32.totalorder %s49, 0
      %p196 = por %p194, %p195
      %p197 = scmp.ne.s32.totalorder %s185, %s186
      %p198 = scmp.eq.s32.totalorder %s50, 1
      %p199 = por %p197, %p198
      %p201 = scmp.ne.s32.totalorder %s186, %s200
      %p202 = scmp.eq.s32.totalorder %s50, 0
      %p203 = por %p201, %p202
      %s205 = sadd.s32 %s204, 1
      %p208 = scmp.eq.s32.totalorder %s44, 1
      %p209 = scmp.ne.s32.totalorder %s204, %s206
      %p210 = scmp.eq.s32.totalorder %s44, 0
      %p211 = por %p209, %p210
      %p212 = scmp.ne.s32.totalorder %s204, %s206
      %p213 = scmp.eq.s32.totalorder %s49, 1
      %p214 = por %p212, %p213
      %p215 = scmp.ne.s32.totalorder %s206, %s207
      %p216 = scmp.eq.s32.totalorder %s49, 0
      %p217 = por %p215, %p216
      %p218 = scmp.ne.s32.totalorder %s206, %s207
      %p219 = scmp.eq.s32.totalorder %s50, 1
      %p220 = por %p218, %p219
      %p222 = scmp.ne.s32.totalorder %s207, %s221
      %p223 = scmp.eq.s32.totalorder %s50, 0
      %p224 = por %p222, %p223
      %s226 = sadd.s32 %s225, 1
      %p229 = scmp.eq.s32.totalorder %s44, 1
      %p230 = scmp.ne.s32.totalorder %s225, %s227
      %p231 = scmp.eq.s32.totalorder %s44, 0
      %p232 = por %p230, %p231
      %p233 = scmp.ne.s32.totalorder %s225, %s227
      %p234 = scmp.eq.s32.totalorder %s49, 1
      %p235 = por %p233, %p234
      %p236 = scmp.ne.s32.totalorder %s227, %s228
      %p237 = scmp.eq.s32.totalorder %s49, 0
      %p238 = por %p236, %p237
      %p239 = scmp.ne.s32.totalorder %s227, %s228
      %p240 = scmp.eq.s32.totalorder %s50, 1
      %p241 = por %p239, %p240
      %p243 = scmp.ne.s32.totalorder %s228, %s242
      %p244 = scmp.eq.s32.totalorder %s50, 0
      %p245 = por %p243, %p244
      %s247 = sadd.s32 %s246, 1
      %p250 = scmp.eq.s32.totalorder %s44, 1
      %p251 = scmp.ne.s32.totalorder %s246, %s248
      %p252 = scmp.eq.s32.totalorder %s44, 0
      %p253 = por %p251, %p252
      %p254 = scmp.ne.s32.totalorder %s246, %s248
      %p255 = scmp.eq.s32.totalorder %s49, 1
      %p256 = por %p254, %p255
      %p257 = scmp.ne.s32.totalorder %s248, %s249
      %p258 = scmp.eq.s32.totalorder %s49, 0
      %p259 = por %p257, %p258
      %p260 = scmp.ne.s32.totalorder %s248, %s249
      %p261 = scmp.eq.s32.totalorder %s50, 1
      %p262 = por %p260, %p261
      %p264 = scmp.ne.s32.totalorder %s249, %s263
      %p265 = scmp.eq.s32.totalorder %s50, 0
      %p266 = por %p264, %p265
      %s268 = sadd.s32 %s267, 1
      %p271 = scmp.eq.s32.totalorder %s44, 1
      %p272 = scmp.ne.s32.totalorder %s267, %s269
      %p273 = scmp.eq.s32.totalorder %s44, 0
      %p274 = por %p272, %p273
      %p275 = scmp.ne.s32.totalorder %s267, %s269
      %p276 = scmp.eq.s32.totalorder %s49, 1
      %p277 = por %p275, %p276
      %p278 = scmp.ne.s32.totalorder %s269, %s270
      %p279 = scmp.eq.s32.totalorder %s49, 0
      %p280 = por %p278, %p279
      %p281 = scmp.ne.s32.totalorder %s269, %s270
      %p282 = scmp.eq.s32.totalorder %s50, 1
      %p283 = por %p281, %p282
      %p285 = scmp.ne.s32.totalorder %s270, %s284
      %p286 = scmp.eq.s32.totalorder %s50, 0
      %p287 = por %p285, %p286
      %s289 = sadd.s32 %s288, 1
      %p292 = scmp.eq.s32.totalorder %s44, 1
      %p293 = scmp.ne.s32.totalorder %s288, %s290
      %p294 = scmp.eq.s32.totalorder %s44, 0
      %p295 = por %p293, %p294
      %p296 = scmp.ne.s32.totalorder %s288, %s290
      %p297 = scmp.eq.s32.totalorder %s49, 1
      %p298 = por %p296, %p297
      %p299 = scmp.ne.s32.totalorder %s290, %s291
      %p300 = scmp.eq.s32.totalorder %s49, 0
      %p301 = por %p299, %p300
      %p302 = scmp.ne.s32.totalorder %s290, %s291
      %p303 = scmp.eq.s32.totalorder %s50, 1
      %p304 = por %p302, %p303
      %p306 = scmp.ne.s32.totalorder %s291, %s305
      %p307 = scmp.eq.s32.totalorder %s50, 0
      %p308 = por %p306, %p307
      %s310 = sadd.s32 %s309, 1
      %p313 = scmp.eq.s32.totalorder %s44, 1
      %p314 = scmp.ne.s32.totalorder %s309, %s311
      %p315 = scmp.eq.s32.totalorder %s44, 0
      %p316 = por %p314, %p315
      %p317 = scmp.ne.s32.totalorder %s309, %s311
      %p318 = scmp.eq.s32.totalorder %s49, 1
      %p319 = por %p317, %p318
      %p320 = scmp.ne.s32.totalorder %s311, %s312
      %p321 = scmp.eq.s32.totalorder %s49, 0
      %p322 = por %p320, %p321
      %p323 = scmp.ne.s32.totalorder %s311, %s312
      %p324 = scmp.eq.s32.totalorder %s50, 1
      %p325 = por %p323, %p324
      %p327 = scmp.ne.s32.totalorder %s312, %s326
      %p328 = scmp.eq.s32.totalorder %s50, 0
      %p329 = por %p327, %p328
      %s331 = sadd.s32 %s330, 1
      %p334 = scmp.eq.s32.totalorder %s44, 1
      %p335 = scmp.ne.s32.totalorder %s330, %s332
      %p336 = scmp.eq.s32.totalorder %s44, 0
      %p337 = por %p335, %p336
      %p338 = scmp.ne.s32.totalorder %s330, %s332
      %p339 = scmp.eq.s32.totalorder %s49, 1
      %p340 = por %p338, %p339
      %p341 = scmp.ne.s32.totalorder %s332, %s333
      %p342 = scmp.eq.s32.totalorder %s49, 0
      %p343 = por %p341, %p342
      %p344 = scmp.ne.s32.totalorder %s332, %s333
      %p345 = scmp.eq.s32.totalorder %s50, 1
      %p346 = por %p344, %p345
      %p348 = scmp.ne.s32.totalorder %s333, %s347
      %p349 = scmp.eq.s32.totalorder %s50, 0
      %p350 = por %p348, %p349
      %s352 = sadd.s32 %s351, 1
      %p355 = scmp.eq.s32.totalorder %s44, 1
      %p356 = scmp.ne.s32.totalorder %s351, %s353
      %p357 = scmp.eq.s32.totalorder %s44, 0
      %p358 = por %p356, %p357
      %p359 = scmp.ne.s32.totalorder %s351, %s353
      %p360 = scmp.eq.s32.totalorder %s49, 1
      %p361 = por %p359, %p360
      %p362 = scmp.ne.s32.totalorder %s353, %s354
      %p363 = scmp.eq.s32.totalorder %s49, 0
      %p364 = por %p362, %p363
      %p365 = scmp.ne.s32.totalorder %s353, %s354
      %p366 = scmp.eq.s32.totalorder %s50, 1
      %p367 = por %p365, %p366
      %p369 = scmp.ne.s32.totalorder %s354, %s368
      %p370 = scmp.eq.s32.totalorder %s50, 0
      %p371 = por %p369, %p370
      %s373 = sadd.s32 %s372, 1
      %p376 = scmp.eq.s32.totalorder %s44, 1
      %p377 = scmp.ne.s32.totalorder %s372, %s374
      %p378 = scmp.eq.s32.totalorder %s44, 0
      %p379 = por %p377, %p378
      %p380 = scmp.ne.s32.totalorder %s372, %s374
      %p381 = scmp.eq.s32.totalorder %s49, 1
      %p382 = por %p380, %p381
      %p383 = scmp.ne.s32.totalorder %s374, %s375
      %p384 = scmp.eq.s32.totalorder %s49, 0
      %p385 = por %p383, %p384
      %p386 = scmp.ne.s32.totalorder %s374, %s375
      %p387 = scmp.eq.s32.totalorder %s50, 1
      %p388 = por %p386, %p387
      %p390 = scmp.ne.s32.totalorder %s375, %s389
      %p391 = scmp.eq.s32.totalorder %s50, 0
      %p392 = por %p390, %p391
      %s394 = sadd.s32 %s393, 1
      %p397 = scmp.eq.s32.totalorder %s44, 1
      %p398 = scmp.ne.s32.totalorder %s393, %s395
      %p399 = scmp.eq.s32.totalorder %s44, 0
      %p400 = por %p398, %p399
      %p401 = scmp.ne.s32.totalorder %s393, %s395
      %p402 = scmp.eq.s32.totalorder %s49, 1
      %p403 = por %p401, %p402
      %p404 = scmp.ne.s32.totalorder %s395, %s396
      %p405 = scmp.eq.s32.totalorder %s49, 0
      %p406 = por %p404, %p405
      %p407 = scmp.ne.s32.totalorder %s395, %s396
      %p408 = scmp.eq.s32.totalorder %s50, 1
      %p409 = por %p407, %p408
      %p411 = scmp.ne.s32.totalorder %s396, %s410
      %p412 = scmp.eq.s32.totalorder %s50, 0
      %p413 = por %p411, %p412
      %s415 = sadd.s32 %s414, 1
      %p418 = scmp.eq.s32.totalorder %s44, 1
      %p419 = scmp.ne.s32.totalorder %s414, %s416
      %p420 = scmp.eq.s32.totalorder %s44, 0
      %p421 = por %p419, %p420
      %p422 = scmp.ne.s32.totalorder %s414, %s416
      %p423 = scmp.eq.s32.totalorder %s49, 1
      %p424 = por %p422, %p423
      %p425 = scmp.ne.s32.totalorder %s416, %s417
      %p426 = scmp.eq.s32.totalorder %s49, 0
      %p427 = por %p425, %p426
      %p428 = scmp.ne.s32.totalorder %s416, %s417
      %p429 = scmp.eq.s32.totalorder %s50, 1
      %p430 = por %p428, %p429
      %p432 = scmp.ne.s32.totalorder %s417, %s431
      %p433 = scmp.eq.s32.totalorder %s50, 0
      %p434 = por %p432, %p433
      %s436 = sadd.s32 %s435, 1
      %p439 = scmp.eq.s32.totalorder %s44, 1
      %p440 = scmp.ne.s32.totalorder %s435, %s437
      %p441 = scmp.eq.s32.totalorder %s44, 0
      %p442 = por %p440, %p441
      %p443 = scmp.ne.s32.totalorder %s435, %s437
      %p444 = scmp.eq.s32.totalorder %s49, 1
      %p445 = por %p443, %p444
      %p446 = scmp.ne.s32.totalorder %s437, %s438
      %p447 = scmp.eq.s32.totalorder %s49, 0
      %p448 = por %p446, %p447
      %p449 = scmp.ne.s32.totalorder %s437, %s438
      %p450 = scmp.eq.s32.totalorder %s50, 1
      %p451 = por %p449, %p450
      %p453 = scmp.ne.s32.totalorder %s438, %s452
      %p454 = scmp.eq.s32.totalorder %s50, 0
      %p455 = por %p453, %p454
      %s457 = sadd.s32 %s456, 1
      %p460 = scmp.eq.s32.totalorder %s44, 1
      %p461 = scmp.ne.s32.totalorder %s456, %s458
      %p462 = scmp.eq.s32.totalorder %s44, 0
      %p463 = por %p461, %p462
      %p464 = scmp.ne.s32.totalorder %s456, %s458
      %p465 = scmp.eq.s32.totalorder %s49, 1
      %p466 = por %p464, %p465
      %p467 = scmp.ne.s32.totalorder %s458, %s459
      %p468 = scmp.eq.s32.totalorder %s49, 0
      %p469 = por %p467, %p468
      %p470 = scmp.ne.s32.totalorder %s458, %s459
      %p471 = scmp.eq.s32.totalorder %s50, 1
      %p472 = por %p470, %p471
      %p474 = scmp.ne.s32.totalorder %s459, %s473
      %p475 = scmp.eq.s32.totalorder %s50, 0
      %p476 = por %p474, %p475
      %s478 = sadd.s32 %s477, 1
      %p481 = scmp.eq.s32.totalorder %s44, 1
      %p482 = scmp.ne.s32.totalorder %s477, %s479
      %p483 = scmp.eq.s32.totalorder %s44, 0
      %p484 = por %p482, %p483
      %p485 = scmp.ne.s32.totalorder %s477, %s479
      %p486 = scmp.eq.s32.totalorder %s49, 1
      %p487 = por %p485, %p486
      %p488 = scmp.ne.s32.totalorder %s479, %s480
      %p489 = scmp.eq.s32.totalorder %s49, 0
      %p490 = por %p488, %p489
      %p491 = scmp.ne.s32.totalorder %s479, %s480
      %p492 = scmp.eq.s32.totalorder %s50, 1
      %p493 = por %p491, %p492
      %p495 = scmp.ne.s32.totalorder %s480, %s494
      %p496 = scmp.eq.s32.totalorder %s50, 0
      %p497 = por %p495, %p496
      %s499 = sadd.s32 %s498, 1
      %p502 = scmp.eq.s32.totalorder %s44, 1
      %p503 = scmp.ne.s32.totalorder %s498, %s500
      %p504 = scmp.eq.s32.totalorder %s44, 0
      %p505 = por %p503, %p504
      %p506 = scmp.ne.s32.totalorder %s498, %s500
      %p507 = scmp.eq.s32.totalorder %s49, 1
      %p508 = por %p506, %p507
      %p509 = scmp.ne.s32.totalorder %s500, %s501
      %p510 = scmp.eq.s32.totalorder %s49, 0
      %p511 = por %p509, %p510
      %p512 = scmp.ne.s32.totalorder %s500, %s501
      %p513 = scmp.eq.s32.totalorder %s50, 1
      %p514 = por %p512, %p513
      %p516 = scmp.ne.s32.totalorder %s501, %s515
      %p517 = scmp.eq.s32.totalorder %s50, 0
      %p518 = por %p516, %p517
      %s520 = sadd.s32 %s519, 1
      %p523 = scmp.eq.s32.totalorder %s44, 1
      %p524 = scmp.ne.s32.totalorder %s519, %s521
      %p525 = scmp.eq.s32.totalorder %s44, 0
      %p526 = por %p524, %p525
      %p527 = scmp.ne.s32.totalorder %s519, %s521
      %p528 = scmp.eq.s32.totalorder %s49, 1
      %p529 = por %p527, %p528
      %p530 = scmp.ne.s32.totalorder %s521, %s522
      %p531 = scmp.eq.s32.totalorder %s49, 0
      %p532 = por %p530, %p531
      %p533 = scmp.ne.s32.totalorder %s521, %s522
      %p534 = scmp.eq.s32.totalorder %s50, 1
      %p535 = por %p533, %p534
      %p537 = scmp.ne.s32.totalorder %s522, %s536
      %p538 = scmp.eq.s32.totalorder %s50, 0
      %p539 = por %p537, %p538
      %s540 = ssub.s32 %s44, %s51
      %p541 = scmp.eq.s32.totalorder %s540, 0
      %s543 = sadd.s32 %s542, 1
      %s544 = scalar_select %p541, %s542, %s543
      %p547 = pneg %p541
      %p548 = scmp.eq.s32.totalorder %s44, 1
      %p549 = por %p547, %p548
      %p550 = scmp.ne.s32.totalorder %s542, %s545
      %p551 = scmp.eq.s32.totalorder %s44, 0
      %p552 = por %p550, %p551
      %p553 = scmp.ne.s32.totalorder %s542, %s545
      %p554 = scmp.eq.s32.totalorder %s49, 1
      %p555 = por %p553, %p554
      %p556 = scmp.ne.s32.totalorder %s545, %s546
      %p557 = scmp.eq.s32.totalorder %s49, 0
      %p558 = por %p556, %p557
      %p559 = scmp.ne.s32.totalorder %s545, %s546
      %p560 = scmp.eq.s32.totalorder %s50, 1
      %p561 = por %p559, %p560
      %p563 = scmp.ne.s32.totalorder %s546, %s562
      %p564 = scmp.eq.s32.totalorder %s50, 0
      %p565 = por %p563, %p564
      %p566 = scmp.le.s32.totalorder 1, %s44
      %p567 = scmp.lt.s32.totalorder %s44, 3
      %p568 = pnand %p566, %p567
      %p569 = pneg %p568
      // Predicated region
      $region9: #{_lambda_.1} parent=5 // pred_check
        _
      $region10: #{_lambda_.1} parent=5 // pred_check_branch
        %571 = sbr.rel (%p568) target = $region12
      $region11: #{_lambda_.1} parent=5 // pred_region
        %s572 = ssub.s32 %s44, 1
        // Predicated region
        $region13: #{_lambda_.1} parent=11 // pred_check
          %p573 = pneg %p91
        $region14: #{_lambda_.1} parent=11 // pred_check_branch
          %575 = sbr.rel (%p573) target = $region16
        $region15: #{_lambda_.1} parent=11 // pred_region
          %s577 = ssub.s32 3072, 3072
          %578 = vsyncadd [#allocation6], %s577
          %s579 = sshll.u32 [#allocation5], 4
          %s580 = int_to_ptr.vmem [resolvable:$true] %s579
          %585 = dma.hbm_to_vmem [thread:$0]  %s1, 3072, %s580, [#allocation6], 256, 256, 16
        $region16: #{_lambda_.1} parent=11 // pred_fallthru
          _
        // Predicated region
        $region17: #{_lambda_.1} parent=11 // pred_check
          %p586 = pneg %p112
        $region18: #{_lambda_.1} parent=11 // pred_check_branch
          %588 = sbr.rel (%p586) target = $region20
        $region19: #{_lambda_.1} parent=11 // pred_region
          %s590 = ssub.s32 32, 32
          %591 = vsyncadd [#allocation6], %s590
          %s593 = sshll.u32 [#allocation7], 4
          %s594 = int_to_ptr.vmem [resolvable:$true] %s593
          %596 = dma.hbm_to_vmem [thread:$0]  %s2, 32, %s594, [#allocation6]
        $region20: #{_lambda_.1} parent=11 // pred_fallthru
          _
        // Predicated region
        $region21: #{_lambda_.1} parent=11 // pred_check
          %p597 = pneg %p133
        $region22: #{_lambda_.1} parent=11 // pred_check_branch
          %599 = sbr.rel (%p597) target = $region24
        $region23: #{_lambda_.1} parent=11 // pred_region
          %s601 = ssub.s32 512, 512
          %602 = vsyncadd [#allocation9], %s601
          %s603 = sshll.u32 [#allocation8], 4
          %s604 = int_to_ptr.vmem [resolvable:$true] %s603
          %609 = dma.hbm_to_vmem [thread:$0]  %s3, 512, %s604, [#allocation9], 128, 128, 8
        $region24: #{_lambda_.1} parent=11 // pred_fallthru
          _
        // Predicated region
        $region25: #{_lambda_.1} parent=11 // pred_check
          %p610 = pneg %p154
        $region26: #{_lambda_.1} parent=11 // pred_check_branch
          %612 = sbr.rel (%p610) target = $region28
        $region27: #{_lambda_.1} parent=11 // pred_region
          %s614 = ssub.s32 512, 512
          %615 = vsyncadd [#allocation9], %s614
          %s616 = sshll.u32 [#allocation10], 4
          %s617 = int_to_ptr.vmem [resolvable:$true] %s616
          %622 = dma.hbm_to_vmem [thread:$0]  %s4, 512, %s617, [#allocation9], 128, 128, 8
        $region28: #{_lambda_.1} parent=11 // pred_fallthru
          _
        // Predicated region
        $region29: #{_lambda_.1} parent=11 // pred_check
          %p623 = pneg %p175
        $region30: #{_lambda_.1} parent=11 // pred_check_branch
          %625 = sbr.rel (%p623) target = $region32
        $region31: #{_lambda_.1} parent=11 // pred_region
          %s627 = ssub.s32 256, 256
          %628 = vsyncadd [#allocation12], %s627
          %s629 = sshll.u32 [#allocation11], 4
          %s630 = int_to_ptr.vmem [resolvable:$true] %s629
          %635 = dma.hbm_to_vmem [thread:$0]  %s5, 256, %s630, [#allocation12], 128, 128, 8
        $region32: #{_lambda_.1} parent=11 // pred_fallthru
          _
        // Predicated region
        $region33: #{_lambda_.1} parent=11 // pred_check
          %p636 = pneg %p196
        $region34: #{_lambda_.1} parent=11 // pred_check_branch
          %638 = sbr.rel (%p636) target = $region36
        $region35: #{_lambda_.1} parent=11 // pred_region
          %s640 = ssub.s32 256, 256
          %641 = vsyncadd [#allocation12], %s640
          %s642 = sshll.u32 [#allocation13], 4
          %s643 = int_to_ptr.vmem [resolvable:$true] %s642
          %648 = dma.hbm_to_vmem [thread:$0]  %s6, 256, %s643, [#allocation12], 128, 128, 8
        $region36: #{_lambda_.1} parent=11 // pred_fallthru
          _
        // Predicated region
        $region37: #{_lambda_.1} parent=11 // pred_check
          %p649 = pneg %p217
        $region38: #{_lambda_.1} parent=11 // pred_check_branch
          %651 = sbr.rel (%p649) target = $region40
        $region39: #{_lambda_.1} parent=11 // pred_region
          %s653 = ssub.s32 3072, 3072
          %654 = vsyncadd [#allocation15], %s653
          %s655 = sshll.u32 [#allocation14], 4
          %s656 = int_to_ptr.vmem [resolvable:$true] %s655
          %661 = dma.hbm_to_vmem [thread:$0]  %s7, 3072, %s656, [#allocation15], 128, 128, 8
        $region40: #{_lambda_.1} parent=11 // pred_fallthru
          _
        // Predicated region
        $region41: #{_lambda_.1} parent=11 // pred_check
          %p662 = pneg %p238
        $region42: #{_lambda_.1} parent=11 // pred_check_branch
          %664 = sbr.rel (%p662) target = $region44
        $region43: #{_lambda_.1} parent=11 // pred_region
          %s666 = ssub.s32 3072, 3072
          %667 = vsyncadd [#allocation15], %s666
          %s668 = sshll.u32 [#allocation16], 4
          %s669 = int_to_ptr.vmem [resolvable:$true] %s668
          %674 = dma.hbm_to_vmem [thread:$0]  %s8, 3072, %s669, [#allocation15], 128, 128, 8
        $region44: #{_lambda_.1} parent=11 // pred_fallthru
          _
        // Predicated region
        $region45: #{_lambda_.1} parent=11 // pred_check
          %p675 = pneg %p259
        $region46: #{_lambda_.1} parent=11 // pred_check_branch
          %677 = sbr.rel (%p675) target = $region48
        $region47: #{_lambda_.1} parent=11 // pred_region
          %s679 = ssub.s32 9216, 9216
          %680 = vsyncadd [#allocation18], %s679
          %s681 = sshll.u32 [#allocation17], 4
          %s682 = int_to_ptr.vmem [resolvable:$true] %s681
          %687 = dma.hbm_to_vmem [thread:$0]  %s9, 9216, %s682, [#allocation18], 256, 256, 16
        $region48: #{_lambda_.1} parent=11 // pred_fallthru
          _
        // Predicated region
        $region49: #{_lambda_.1} parent=11 // pred_check
          %p688 = pneg %p280
        $region50: #{_lambda_.1} parent=11 // pred_check_branch
          %690 = sbr.rel (%p688) target = $region52
        $region51: #{_lambda_.1} parent=11 // pred_region
          %s692 = ssub.s32 32, 32
          %693 = vsyncadd [#allocation18], %s692
          %s695 = sshll.u32 [#allocation19], 4
          %s696 = int_to_ptr.vmem [resolvable:$true] %s695
          %698 = dma.hbm_to_vmem [thread:$0]  %s10, 32, %s696, [#allocation18]
        $region52: #{_lambda_.1} parent=11 // pred_fallthru
          _
        // Predicated region
        $region53: #{_lambda_.1} parent=11 // pred_check
          %p699 = pneg %p301
        $region54: #{_lambda_.1} parent=11 // pred_check_branch
          %701 = sbr.rel (%p699) target = $region56
        $region55: #{_lambda_.1} parent=11 // pred_region
          %s703 = ssub.s32 256, 256
          %704 = vsyncadd [#allocation21], %s703
          %s705 = sshll.u32 [#allocation20], 4
          %s706 = int_to_ptr.vmem [resolvable:$true] %s705
          %711 = dma.hbm_to_vmem [thread:$0]  %s11, 256, %s706, [#allocation21], 128, 128, 8
        $region56: #{_lambda_.1} parent=11 // pred_fallthru
          _
        // Predicated region
        $region57: #{_lambda_.1} parent=11 // pred_check
          %p712 = pneg %p322
        $region58: #{_lambda_.1} parent=11 // pred_check_branch
          %714 = sbr.rel (%p712) target = $region60
        $region59: #{_lambda_.1} parent=11 // pred_region
          _
        $region60: #{_lambda_.1} parent=11 // pred_fallthru
          _
        // Predicated region
        $region61: #{_lambda_.1} parent=11 // pred_check
          %p715 = pneg %p343
        $region62: #{_lambda_.1} parent=11 // pred_check_branch
          %717 = sbr.rel (%p715) target = $region64
        $region63: #{_lambda_.1} parent=11 // pred_region
          %s719 = ssub.s32 128, 128
          %720 = vsyncadd [#allocation21], %s719
          %s722 = sshll.u32 [#allocation22], 4
          %s723 = int_to_ptr.vmem [resolvable:$true] %s722
          %725 = dma.hbm_to_vmem [thread:$0]  %s13, 128, %s723, [#allocation21]
        $region64: #{_lambda_.1} parent=11 // pred_fallthru
          _
        // Predicated region
        $region65: #{_lambda_.1} parent=11 // pred_check
          %p726 = pneg %p364
        $region66: #{_lambda_.1} parent=11 // pred_check_branch
          %728 = sbr.rel (%p726) target = $region68
        $region67: #{_lambda_.1} parent=11 // pred_region
          _
        $region68: #{_lambda_.1} parent=11 // pred_fallthru
          _
        // Predicated region
        $region69: #{_lambda_.1} parent=11 // pred_check
          %p729 = pneg %p385
        $region70: #{_lambda_.1} parent=11 // pred_check_branch
          %731 = sbr.rel (%p729) target = $region72
        $region71: #{_lambda_.1} parent=11 // pred_region
          %s733 = ssub.s32 4096, 4096
          %734 = vsyncadd [#allocation24], %s733
          %s735 = sshll.u32 [#allocation23], 4
          %s736 = int_to_ptr.vmem [resolvable:$true] %s735
          %741 = dma.hbm_to_vmem [thread:$0]  %s15, 4096, %s736, [#allocation24], 128, 128, 8
        $region72: #{_lambda_.1} parent=11 // pred_fallthru
          _
        // Predicated region
        $region73: #{_lambda_.1} parent=11 // pred_check
          %p742 = pneg %p406
        $region74: #{_lambda_.1} parent=11 // pred_check_branch
          %744 = sbr.rel (%p742) target = $region76
        $region75: #{_lambda_.1} parent=11 // pred_region
          %s746 = ssub.s32 4096, 4096
          %747 = vsyncadd [#allocation24], %s746
          %s748 = sshll.u32 [#allocation25], 4
          %s749 = int_to_ptr.vmem [resolvable:$true] %s748
          %754 = dma.hbm_to_vmem [thread:$0]  %s16, 4096, %s749, [#allocation24], 128, 128, 8
        $region76: #{_lambda_.1} parent=11 // pred_fallthru
          _
        // Predicated region
        $region77: #{_lambda_.1} parent=11 // pred_check
          %p755 = pneg %p427
        $region78: #{_lambda_.1} parent=11 // pred_check_branch
          %757 = sbr.rel (%p755) target = $region80
        $region79: #{_lambda_.1} parent=11 // pred_region
          %s759 = ssub.s32 16384, 16384
          %760 = vsyncadd [#allocation27], %s759
          %s761 = sshll.u32 [#allocation26], 4
          %s762 = int_to_ptr.vmem [resolvable:$true] %s761
          %767 = dma.hbm_to_vmem [thread:$0]  %s17, 16384, %s762, [#allocation27], 128, 128, 8
        $region80: #{_lambda_.1} parent=11 // pred_fallthru
          _
        // Predicated region
        $region81: #{_lambda_.1} parent=11 // pred_check
          %p768 = pneg %p448
        $region82: #{_lambda_.1} parent=11 // pred_check_branch
          %770 = sbr.rel (%p768) target = $region84
        $region83: #{_lambda_.1} parent=11 // pred_region
          _
        $region84: #{_lambda_.1} parent=11 // pred_fallthru
          _
        // Predicated region
        $region85: #{_lambda_.1} parent=11 // pred_check
          %p771 = pneg %p469
        $region86: #{_lambda_.1} parent=11 // pred_check_branch
          %773 = sbr.rel (%p771) target = $region88
        $region87: #{_lambda_.1} parent=11 // pred_region
          %s775 = ssub.s32 2048, 2048
          %776 = vsyncadd [#allocation27], %s775
          %s777 = sshll.u32 [#allocation28], 4
          %s778 = int_to_ptr.vmem [resolvable:$true] %s777
          %783 = dma.hbm_to_vmem [thread:$0]  %s19, 2048, %s778, [#allocation27], 128, 128, 8
        $region88: #{_lambda_.1} parent=11 // pred_fallthru
          _
        // Predicated region
        $region89: #{_lambda_.1} parent=11 // pred_check
          %p784 = pneg %p490
        $region90: #{_lambda_.1} parent=11 // pred_check_branch
          %786 = sbr.rel (%p784) target = $region92
        $region91: #{_lambda_.1} parent=11 // pred_region
          _
        $region92: #{_lambda_.1} parent=11 // pred_fallthru
          _
        // Predicated region
        $region93: #{_lambda_.1} parent=11 // pred_check
          %p787 = pneg %p511
        $region94: #{_lambda_.1} parent=11 // pred_check_branch
          %789 = sbr.rel (%p787) target = $region96
        $region95: #{_lambda_.1} parent=11 // pred_region
          %s791 = ssub.s32 2048, 2048
          %792 = vsyncadd [#allocation30], %s791
          %s793 = sshll.u32 [#allocation29], 4
          %s794 = int_to_ptr.vmem [resolvable:$true] %s793
          %799 = dma.hbm_to_vmem [thread:$0]  %s21, 2048, %s794, [#allocation30], 128, 128, 8
        $region96: #{_lambda_.1} parent=11 // pred_fallthru
          _
        // Predicated region
        $region97: #{_lambda_.1} parent=11 // pred_check
          %p800 = pneg %p532
        $region98: #{_lambda_.1} parent=11 // pred_check_branch
          %802 = sbr.rel (%p800) target = $region100
        $region99: #{_lambda_.1} parent=11 // pred_region
          _
        $region100: #{_lambda_.1} parent=11 // pred_fallthru
          _
      $region12: #{_lambda_.1} parent=5 // pred_fallthru
        _
      %p803 = scmp.lt.s32.totalorder %s44, 2
      // Predicated region
      $region101: #{_lambda_.1} parent=5 // pred_check
        %p804 = pneg %p803
      $region102: #{_lambda_.1} parent=5 // pred_check_branch
        %806 = sbr.rel (%p804) target = $region104
      $region103: #{_lambda_.1} parent=5 // pred_region
        // Predicated region
        $region105: #{_lambda_.1} parent=103 // pred_check
          %p807 = pneg %p64
        $region106: #{_lambda_.1} parent=103 // pred_check_branch
          %809 = sbr.rel (%p807) target = $region108
        $region107: #{_lambda_.1} parent=103 // pred_region
          %s810 = sand.u32 %s54, 1
          %s811 = scalar_lea.sflag [#allocation3], %s810
          %s812 = sand.u32 %s54, 1
          %s813 = smul.addr %s812, 32
          %s814 = scalar_lea.vmem [#allocation2], %s813
          %s816 = ssub.s32 512, 512
          %817 = vsyncadd %s811, %s816
          %s818 = smul.addr %s44, 4
          %s819 = smul.addr %s818, 128
          %s820 = scalar_lea.hbm %s0, %s819
          %s821 = sshll.u32 %s814, 4
          %s822 = int_to_ptr.vmem [resolvable:$true] %s821
          %827 = dma.hbm_to_vmem [thread:$0]  %s820, 512, %s822, %s811, 128, 128, 8
        $region108: #{_lambda_.1} parent=103 // pred_fallthru
          _
      $region104: #{_lambda_.1} parent=5 // pred_fallthru
        _
      %p828 = scmp.le.s32.totalorder 1, %s44
      %p829 = scmp.lt.s32.totalorder %s44, 3
      %p830 = pnand %p828, %p829
      %p831 = pneg %p830
      // Predicated region
      $region109: #{_lambda_.1} parent=5 // pred_check
        _
      $region110: #{_lambda_.1} parent=5 // pred_check_branch
        %833 = sbr.rel (%p830) target = $region112
      $region111: #{_lambda_.1} parent=5 // pred_region
        %s834 = ssub.s32 %s44, 1
        %s835 = sand.u32 %s57, 1
        %s836 = scalar_lea.sflag [#allocation3], %s835
        %s837 = sand.u32 %s57, 1
        %s838 = smul.addr %s837, 32
        %s839 = scalar_lea.vmem [#allocation2], %s838
        // Predicated region
        $region113: #{_lambda_.1} parent=111 // pred_check
          %p840 = pneg %p70
        $region114: #{_lambda_.1} parent=111 // pred_check_branch
          %842 = sbr.rel (%p840) target = $region116
        $region115: #{_lambda_.1} parent=111 // pred_region
          %843 = dma.done %s836, 512
        $region116: #{_lambda_.1} parent=111 // pred_fallthru
          _
        // Predicated region
        $region117: #{_lambda_.1} parent=111 // pred_check
          %p844 = pneg %p91
        $region118: #{_lambda_.1} parent=111 // pred_check_branch
          %846 = sbr.rel (%p844) target = $region120
        $region119: #{_lambda_.1} parent=111 // pred_region
          %847 = dma.done [#allocation6], 3072
        $region120: #{_lambda_.1} parent=111 // pred_fallthru
          _
        // Predicated region
        $region121: #{_lambda_.1} parent=111 // pred_check
          %p848 = pneg %p112
        $region122: #{_lambda_.1} parent=111 // pred_check_branch
          %850 = sbr.rel (%p848) target = $region124
        $region123: #{_lambda_.1} parent=111 // pred_region
          %851 = dma.done [#allocation6], 32
        $region124: #{_lambda_.1} parent=111 // pred_fallthru
          _
        // Predicated region
        $region125: #{_lambda_.1} parent=111 // pred_check
          %p852 = pneg %p133
        $region126: #{_lambda_.1} parent=111 // pred_check_branch
          %854 = sbr.rel (%p852) target = $region128
        $region127: #{_lambda_.1} parent=111 // pred_region
          %855 = dma.done [#allocation9], 512
        $region128: #{_lambda_.1} parent=111 // pred_fallthru
          _
        // Predicated region
        $region129: #{_lambda_.1} parent=111 // pred_check
          %p856 = pneg %p154
        $region130: #{_lambda_.1} parent=111 // pred_check_branch
          %858 = sbr.rel (%p856) target = $region132
        $region131: #{_lambda_.1} parent=111 // pred_region
          %859 = dma.done [#allocation9], 512
        $region132: #{_lambda_.1} parent=111 // pred_fallthru
          _
        // Predicated region
        $region133: #{_lambda_.1} parent=111 // pred_check
          %p860 = pneg %p175
        $region134: #{_lambda_.1} parent=111 // pred_check_branch
          %862 = sbr.rel (%p860) target = $region136
        $region135: #{_lambda_.1} parent=111 // pred_region
          %863 = dma.done [#allocation12], 256
        $region136: #{_lambda_.1} parent=111 // pred_fallthru
          _
        // Predicated region
        $region137: #{_lambda_.1} parent=111 // pred_check
          %p864 = pneg %p196
        $region138: #{_lambda_.1} parent=111 // pred_check_branch
          %866 = sbr.rel (%p864) target = $region140
        $region139: #{_lambda_.1} parent=111 // pred_region
          %867 = dma.done [#allocation12], 256
        $region140: #{_lambda_.1} parent=111 // pred_fallthru
          _
        // Predicated region
        $region141: #{_lambda_.1} parent=111 // pred_check
          %p868 = pneg %p217
        $region142: #{_lambda_.1} parent=111 // pred_check_branch
          %870 = sbr.rel (%p868) target = $region144
        $region143: #{_lambda_.1} parent=111 // pred_region
          %871 = dma.done [#allocation15], 3072
        $region144: #{_lambda_.1} parent=111 // pred_fallthru
          _
        // Predicated region
        $region145: #{_lambda_.1} parent=111 // pred_check
          %p872 = pneg %p238
        $region146: #{_lambda_.1} parent=111 // pred_check_branch
          %874 = sbr.rel (%p872) target = $region148
        $region147: #{_lambda_.1} parent=111 // pred_region
          %875 = dma.done [#allocation15], 3072
        $region148: #{_lambda_.1} parent=111 // pred_fallthru
          _
        // Predicated region
        $region149: #{_lambda_.1} parent=111 // pred_check
          %p876 = pneg %p259
        $region150: #{_lambda_.1} parent=111 // pred_check_branch
          %878 = sbr.rel (%p876) target = $region152
        $region151: #{_lambda_.1} parent=111 // pred_region
          %879 = dma.done [#allocation18], 9216
        $region152: #{_lambda_.1} parent=111 // pred_fallthru
          _
        // Predicated region
        $region153: #{_lambda_.1} parent=111 // pred_check
          %p880 = pneg %p280
        $region154: #{_lambda_.1} parent=111 // pred_check_branch
          %882 = sbr.rel (%p880) target = $region156
        $region155: #{_lambda_.1} parent=111 // pred_region
          %883 = dma.done [#allocation18], 32
        $region156: #{_lambda_.1} parent=111 // pred_fallthru
          _
        // Predicated region
        $region157: #{_lambda_.1} parent=111 // pred_check
          %p884 = pneg %p301
        $region158: #{_lambda_.1} parent=111 // pred_check_branch
          %886 = sbr.rel (%p884) target = $region160
        $region159: #{_lambda_.1} parent=111 // pred_region
          %887 = dma.done [#allocation21], 256
        $region160: #{_lambda_.1} parent=111 // pred_fallthru
          _
        // Predicated region
        $region161: #{_lambda_.1} parent=111 // pred_check
          %p888 = pneg %p343
        $region162: #{_lambda_.1} parent=111 // pred_check_branch
          %890 = sbr.rel (%p888) target = $region164
        $region163: #{_lambda_.1} parent=111 // pred_region
          %891 = dma.done [#allocation21], 128
        $region164: #{_lambda_.1} parent=111 // pred_fallthru
          _
        // Predicated region
        $region165: #{_lambda_.1} parent=111 // pred_check
          %p892 = pneg %p385
        $region166: #{_lambda_.1} parent=111 // pred_check_branch
          %894 = sbr.rel (%p892) target = $region168
        $region167: #{_lambda_.1} parent=111 // pred_region
          %895 = dma.done [#allocation24], 4096
        $region168: #{_lambda_.1} parent=111 // pred_fallthru
          _
        // Predicated region
        $region169: #{_lambda_.1} parent=111 // pred_check
          %p896 = pneg %p406
        $region170: #{_lambda_.1} parent=111 // pred_check_branch
          %898 = sbr.rel (%p896) target = $region172
        $region171: #{_lambda_.1} parent=111 // pred_region
          %899 = dma.done [#allocation24], 4096
        $region172: #{_lambda_.1} parent=111 // pred_fallthru
          _
        // Predicated region
        $region173: #{_lambda_.1} parent=111 // pred_check
          %p900 = pneg %p427
        $region174: #{_lambda_.1} parent=111 // pred_check_branch
          %902 = sbr.rel (%p900) target = $region176
        $region175: #{_lambda_.1} parent=111 // pred_region
          %903 = dma.done [#allocation27], 16384
        $region176: #{_lambda_.1} parent=111 // pred_fallthru
          _
        // Predicated region
        $region177: #{_lambda_.1} parent=111 // pred_check
          %p904 = pneg %p469
        $region178: #{_lambda_.1} parent=111 // pred_check_branch
          %906 = sbr.rel (%p904) target = $region180
        $region179: #{_lambda_.1} parent=111 // pred_region
          %907 = dma.done [#allocation27], 2048
        $region180: #{_lambda_.1} parent=111 // pred_fallthru
          _
        // Predicated region
        $region181: #{_lambda_.1} parent=111 // pred_check
          %p908 = pneg %p511
        $region182: #{_lambda_.1} parent=111 // pred_check_branch
          %910 = sbr.rel (%p908) target = $region184
        $region183: #{_lambda_.1} parent=111 // pred_region
          %911 = dma.done [#allocation30], 2048
        $region184: #{_lambda_.1} parent=111 // pred_fallthru
          _
        %s912 = sand.u32 %s57, 1
        %s913 = scalar_lea.sflag [#allocation3], %s912
        %s914 = sand.u32 %s57, 1
        %s915 = smul.addr %s914, 32
        %s916 = scalar_lea.vmem [#allocation2], %s915
        %p917 = pneg %p70
        %p918 = pneg %p67
        %p919 = pneg %p91
        %p920 = pneg %p88
        %p921 = pneg %p112
        %p922 = pneg %p109
        %p923 = pneg %p133
        %p924 = pneg %p130
        %p925 = pneg %p154
        %p926 = pneg %p151
        %p927 = pneg %p175
        %p928 = pneg %p172
        %p929 = pneg %p196
        %p930 = pneg %p193
        %p931 = pneg %p217
        %p932 = pneg %p214
        %p933 = pneg %p238
        %p934 = pneg %p235
        %p935 = pneg %p259
        %p936 = pneg %p256
        %p937 = pneg %p280
        %p938 = pneg %p277
        %p939 = pneg %p301
        %p940 = pneg %p298
        %p941 = pneg %p322
        %p942 = pneg %p319
        %p943 = pneg %p343
        %p944 = pneg %p340
        %p945 = pneg %p364
        %p946 = pneg %p361
        %p947 = pneg %p385
        %p948 = pneg %p382
        %p949 = pneg %p406
        %p950 = pneg %p403
        %p951 = pneg %p427
        %p952 = pneg %p424
        %p953 = pneg %p448
        %p954 = pneg %p445
        %p955 = pneg %p469
        %p956 = pneg %p466
        %p957 = pneg %p490
        %p958 = pneg %p487
        %p959 = pneg %p511
        %p960 = pneg %p508
        %p961 = pneg %p532
        %p962 = pneg %p529
        %p963 = pneg %p558
        %p964 = pneg %p555
        %s965 = sand.u32 %s545, 1
        %s966 = scalar_lea.sflag [#allocation4], %s965
        %s967 = sand.u32 %s545, 1
        %s968 = scalar_lea.vmem [#allocation31], %s967
        %v969 = vld [vmem:[%s839] sm:$0xff]
        %v970 = vld [vmem:[%s839 + $0x8] sm:$0xff]
        %v971 = vld [vmem:[%s839 + $0x10] sm:$0xff]
        %v972 = vld [vmem:[%s839 + $0x18] sm:$0xff]
        %v973 = vld [vmem:[#allocation5] sm:$0xff]
        %v974 = vld [vmem:[#allocation5 + $0x8] sm:$0xff]
        %v975 = vld [vmem:[#allocation5 + $0x10] sm:$0xff]
        %v976 = vld [vmem:[#allocation5 + $0x18] sm:$0xff]
        %v977 = vld [vmem:[#allocation5 + $0x20] sm:$0xff]
        %v978 = vld [vmem:[#allocation5 + $0x28] sm:$0xff]
        %v979 = vld [vmem:[#allocation5 + $0x30] sm:$0xff]
        %v980 = vld [vmem:[#allocation5 + $0x38] sm:$0xff]
        %vm981 = vcmask 261120
        %v983 = vsel %vm981, %v969, 0
        %v986 = vsel %vm981, %v970, 0
        %v989 = vsel %vm981, %v971, 0
        %v992 = vsel %vm981, %v972, 0
        %994 = vmatprep.subr.mxu0 0.0
        %995 = vmatpush1.msra.mxu0 0.0
        %996 = vmatprep.subr.mxu0 0.0
        %997 = vmatpush1.msra.mxu0 0.0
        %998 = vmatprep.subr.mxu0 0.0
        %999 = vmatpush1.msra.mxu0 0.0
        %1000 = vmatprep.subr.mxu0 0.0
        %1001 = vmatpush1.msra.mxu0 0.0
        %1002 = vmatprep.subr.mxu0 0.0
        %1003 = vmatpush1.msra.mxu0 0.0
        %1004 = vmatprep.subr.mxu0 0.0
        %1005 = vmatpush1.msra.mxu0 0.0
        %1006 = vmatprep.subr.mxu0 0.0
        %1007 = vmatpush1.msra.mxu0 0.0
        %1008 = vmatprep.subr.mxu0 0.0
        %1009 = vmatpush1.msra.mxu0 0.0
        %1010 = vmatprep.subr.mxu0 0.0
        %1011 = vmatpush1.msra.mxu0 0.0
        %1012 = vmatprep.subr.mxu0 0.0
        %1013 = vmatpush1.msra.mxu0 0.0
        %1014 = vmatprep.subr.mxu0 0.0
        %1015 = vmatpush1.msra.mxu0 0.0
        %1016 = vmatprep.subr.mxu0 0.0
        %1017 = vmatpush1.msra.mxu0 0.0
        %1018 = vmatprep.subr.mxu0 %v980
        %1019 = vmatpush1.msra.mxu0 %v979
        %1020 = vmatprep.subr.mxu0 %v978
        %1021 = vmatpush1.msra.mxu0 %v977
        %1022 = vmatprep.subr.mxu0 %v976
        %1023 = vmatpush1.msra.mxu0 %v975
        %1024 = vmatprep.subr.mxu0 %v974
        %1025 = vmatpush1.msra.mxu0 %v973
        %1026 = vmatprep.subr.mxu0 0.0
        %1027 = vmatpush2.msra.mxu0 0.0
        %1028 = vmatprep.subr.mxu0 0.0
        %1029 = vmatpush2.msra.mxu0 0.0
        %1030 = vmatprep.subr.mxu0 0.0
        %1031 = vmatpush2.msra.mxu0 0.0
        %1032 = vmatprep.subr.mxu0 0.0
        %1033 = vmatpush2.msra.mxu0 0.0
        %1034 = vmatprep.subr.mxu0 0.0
        %1035 = vmatpush2.msra.mxu0 0.0
        %1036 = vmatprep.subr.mxu0 0.0
        %1037 = vmatpush2.msra.mxu0 0.0
        %1038 = vmatprep.subr.mxu0 0.0
        %1039 = vmatpush2.msra.mxu0 0.0
        %1040 = vmatprep.subr.mxu0 0.0
        %1041 = vmatpush2.msra.mxu0 0.0
        %1042 = vmatprep.subr.mxu0 0.0
        %1043 = vmatpush2.msra.mxu0 0.0
        %1044 = vmatprep.subr.mxu0 0.0
        %1045 = vmatpush2.msra.mxu0 0.0
        %1046 = vmatprep.subr.mxu0 0.0
        %1047 = vmatpush2.msra.mxu0 0.0
        %1048 = vmatprep.subr.mxu0 0.0
        %1049 = vmatpush2.msra.mxu0 0.0
        %1050 = vmatprep.subr.mxu0 0.0
        %1051 = vmatpush2.msra.mxu0 0.0
        %1052 = vmatprep.subr.mxu0 0.0
        %1053 = vmatpush2.msra.mxu0 0.0
        %1054 = vmatprep.subr.mxu0 0.0
        %1055 = vmatpush2.msra.mxu0 0.0
        %1056 = vmatprep.subr.mxu0 0.0
        %1057 = vmatpush2.msra.mxu0 0.0
        %1058 = vmatprep.mubr.f32.mxu0 0.0
        %1059 = vmatmul.mubr.f32.gmra.mxu0 %v983
        %v1060 = vpop.f32.mrf.mxu0
        %v1061 = vadd.f32 0.0, %v1060
        %v1062 = vpop.f32.mrf.mxu0
        %v1063 = vadd.f32 0.0, %v1062
        %1064 = vmatprep.mubr.f32.mxu0 0.0
        %1065 = vmatmul.mubr.f32.gmra.mxu0 %v986
        %v1066 = vpop.f32.mrf.mxu0
        %v1067 = vadd.f32 0.0, %v1066
        %v1068 = vpop.f32.mrf.mxu0
        %v1069 = vadd.f32 0.0, %v1068
        %1070 = vmatprep.mubr.f32.mxu0 0.0
        %1071 = vmatmul.mubr.f32.gmra.mxu0 %v989
        %v1072 = vpop.f32.mrf.mxu0
        %v1073 = vadd.f32 0.0, %v1072
        %v1074 = vpop.f32.mrf.mxu0
        %v1075 = vadd.f32 0.0, %v1074
        %1076 = vmatprep.mubr.f32.mxu0 0.0
        %1077 = vmatmul.mubr.f32.gmra.mxu0 %v992
        %v1078 = vpop.f32.mrf.mxu0
        %v1079 = vadd.f32 0.0, %v1078
        %v1080 = vpop.f32.mrf.mxu0
        %v1081 = vadd.f32 0.0, %v1080
        %1082 = vdwg.mxu0
        %s1083 = scalar_lea.vmem [#allocation5], 64
        %v1084 = vld [vmem:[%s1083] sm:$0xff]
        %v1085 = vld [vmem:[%s1083 + $0x8] sm:$0xff]
        %v1086 = vld [vmem:[%s1083 + $0x10] sm:$0xff]
        %v1087 = vld [vmem:[%s1083 + $0x18] sm:$0xff]
        %v1088 = vld [vmem:[%s1083 + $0x20] sm:$0xff]
        %v1089 = vld [vmem:[%s1083 + $0x28] sm:$0xff]
        %v1090 = vld [vmem:[%s1083 + $0x30] sm:$0xff]
        %v1091 = vld [vmem:[%s1083 + $0x38] sm:$0xff]
        %1092 = vmatprep.subr.mxu0 0.0
        %1093 = vmatpush1.msra.mxu0 0.0
        %1094 = vmatprep.subr.mxu0 0.0
        %1095 = vmatpush1.msra.mxu0 0.0
        %1096 = vmatprep.subr.mxu0 0.0
        %1097 = vmatpush1.msra.mxu0 0.0
        %1098 = vmatprep.subr.mxu0 0.0
        %1099 = vmatpush1.msra.mxu0 0.0
        %1100 = vmatprep.subr.mxu0 0.0
        %1101 = vmatpush1.msra.mxu0 0.0
        %1102 = vmatprep.subr.mxu0 0.0
        %1103 = vmatpush1.msra.mxu0 0.0
        %1104 = vmatprep.subr.mxu0 0.0
        %1105 = vmatpush1.msra.mxu0 0.0
        %1106 = vmatprep.subr.mxu0 0.0
        %1107 = vmatpush1.msra.mxu0 0.0
        %1108 = vmatprep.subr.mxu0 0.0
        %1109 = vmatpush1.msra.mxu0 0.0
        %1110 = vmatprep.subr.mxu0 0.0
        %1111 = vmatpush1.msra.mxu0 0.0
        %1112 = vmatprep.subr.mxu0 0.0
        %1113 = vmatpush1.msra.mxu0 0.0
        %1114 = vmatprep.subr.mxu0 0.0
        %1115 = vmatpush1.msra.mxu0 0.0
        %1116 = vmatprep.subr.mxu0 %v1091
        %1117 = vmatpush1.msra.mxu0 %v1090
        %1118 = vmatprep.subr.mxu0 %v1089
        %1119 = vmatpush1.msra.mxu0 %v1088
        %1120 = vmatprep.subr.mxu0 %v1087
        %1121 = vmatpush1.msra.mxu0 %v1086
        %1122 = vmatprep.subr.mxu0 %v1085
        %1123 = vmatpush1.msra.mxu0 %v1084
        %1124 = vmatprep.subr.mxu0 0.0
        %1125 = vmatpush2.msra.mxu0 0.0
        %1126 = vmatprep.subr.mxu0 0.0
        %1127 = vmatpush2.msra.mxu0 0.0
        %1128 = vmatprep.subr.mxu0 0.0
        %1129 = vmatpush2.msra.mxu0 0.0
        %1130 = vmatprep.subr.mxu0 0.0
        %1131 = vmatpush2.msra.mxu0 0.0
        %1132 = vmatprep.subr.mxu0 0.0
        %1133 = vmatpush2.msra.mxu0 0.0
        %1134 = vmatprep.subr.mxu0 0.0
        %1135 = vmatpush2.msra.mxu0 0.0
        %1136 = vmatprep.subr.mxu0 0.0
        %1137 = vmatpush2.msra.mxu0 0.0
        %1138 = vmatprep.subr.mxu0 0.0
        %1139 = vmatpush2.msra.mxu0 0.0
        %1140 = vmatprep.subr.mxu0 0.0
        %1141 = vmatpush2.msra.mxu0 0.0
        %1142 = vmatprep.subr.mxu0 0.0
        %1143 = vmatpush2.msra.mxu0 0.0
        %1144 = vmatprep.subr.mxu0 0.0
        %1145 = vmatpush2.msra.mxu0 0.0
        %1146 = vmatprep.subr.mxu0 0.0
        %1147 = vmatpush2.msra.mxu0 0.0
        %1148 = vmatprep.subr.mxu0 0.0
        %1149 = vmatpush2.msra.mxu0 0.0
        %1150 = vmatprep.subr.mxu0 0.0
        %1151 = vmatpush2.msra.mxu0 0.0
        %1152 = vmatprep.subr.mxu0 0.0
        %1153 = vmatpush2.msra.mxu0 0.0
        %1154 = vmatprep.subr.mxu0 0.0
        %1155 = vmatpush2.msra.mxu0 0.0
        %1156 = vmatprep.mubr.f32.mxu0 0.0
        %1157 = vmatmul.mubr.f32.gmra.mxu0 %v983
        %v1158 = vpop.f32.mrf.mxu0
        %v1159 = vadd.f32 0.0, %v1158
        %v1160 = vpop.f32.mrf.mxu0
        %v1161 = vadd.f32 0.0, %v1160
        %1162 = vmatprep.mubr.f32.mxu0 0.0
        %1163 = vmatmul.mubr.f32.gmra.mxu0 %v986
        %v1164 = vpop.f32.mrf.mxu0
        %v1165 = vadd.f32 0.0, %v1164
        %v1166 = vpop.f32.mrf.mxu0
        %v1167 = vadd.f32 0.0, %v1166
        %1168 = vmatprep.mubr.f32.mxu0 0.0
        %1169 = vmatmul.mubr.f32.gmra.mxu0 %v989
        %v1170 = vpop.f32.mrf.mxu0
        %v1171 = vadd.f32 0.0, %v1170
        %v1172 = vpop.f32.mrf.mxu0
        %v1173 = vadd.f32 0.0, %v1172
        %1174 = vmatprep.mubr.f32.mxu0 0.0
        %1175 = vmatmul.mubr.f32.gmra.mxu0 %v992
        %v1176 = vpop.f32.mrf.mxu0
        %v1177 = vadd.f32 0.0, %v1176
        %v1178 = vpop.f32.mrf.mxu0
        %v1179 = vadd.f32 0.0, %v1178
        %1180 = vdwg.mxu0
        %s1181 = scalar_lea.vmem [#allocation5], 128
        %v1182 = vld [vmem:[%s1181] sm:$0xff]
        %v1183 = vld [vmem:[%s1181 + $0x8] sm:$0xff]
        %v1184 = vld [vmem:[%s1181 + $0x10] sm:$0xff]
        %v1185 = vld [vmem:[%s1181 + $0x18] sm:$0xff]
        %v1186 = vld [vmem:[%s1181 + $0x20] sm:$0xff]
        %v1187 = vld [vmem:[%s1181 + $0x28] sm:$0xff]
        %v1188 = vld [vmem:[%s1181 + $0x30] sm:$0xff]
        %v1189 = vld [vmem:[%s1181 + $0x38] sm:$0xff]
        %1190 = vmatprep.subr.mxu0 0.0
        %1191 = vmatpush1.msra.mxu0 0.0
        %1192 = vmatprep.subr.mxu0 0.0
        %1193 = vmatpush1.msra.mxu0 0.0
        %1194 = vmatprep.subr.mxu0 0.0
        %1195 = vmatpush1.msra.mxu0 0.0
        %1196 = vmatprep.subr.mxu0 0.0
        %1197 = vmatpush1.msra.mxu0 0.0
        %1198 = vmatprep.subr.mxu0 0.0
        %1199 = vmatpush1.msra.mxu0 0.0
        %1200 = vmatprep.subr.mxu0 0.0
        %1201 = vmatpush1.msra.mxu0 0.0
        %1202 = vmatprep.subr.mxu0 0.0
        %1203 = vmatpush1.msra.mxu0 0.0
        %1204 = vmatprep.subr.mxu0 0.0
        %1205 = vmatpush1.msra.mxu0 0.0
        %1206 = vmatprep.subr.mxu0 0.0
        %1207 = vmatpush1.msra.mxu0 0.0
        %1208 = vmatprep.subr.mxu0 0.0
        %1209 = vmatpush1.msra.mxu0 0.0
        %1210 = vmatprep.subr.mxu0 0.0
        %1211 = vmatpush1.msra.mxu0 0.0
        %1212 = vmatprep.subr.mxu0 0.0
        %1213 = vmatpush1.msra.mxu0 0.0
        %1214 = vmatprep.subr.mxu0 %v1189
        %1215 = vmatpush1.msra.mxu0 %v1188
        %1216 = vmatprep.subr.mxu0 %v1187
        %1217 = vmatpush1.msra.mxu0 %v1186
        %1218 = vmatprep.subr.mxu0 %v1185
        %1219 = vmatpush1.msra.mxu0 %v1184
        %1220 = vmatprep.subr.mxu0 %v1183
        %1221 = vmatpush1.msra.mxu0 %v1182
        %1222 = vmatprep.subr.mxu0 0.0
        %1223 = vmatpush2.msra.mxu0 0.0
        %1224 = vmatprep.subr.mxu0 0.0
        %1225 = vmatpush2.msra.mxu0 0.0
        %1226 = vmatprep.subr.mxu0 0.0
        %1227 = vmatpush2.msra.mxu0 0.0
        %1228 = vmatprep.subr.mxu0 0.0
        %1229 = vmatpush2.msra.mxu0 0.0
        %1230 = vmatprep.subr.mxu0 0.0
        %1231 = vmatpush2.msra.mxu0 0.0
        %1232 = vmatprep.subr.mxu0 0.0
        %1233 = vmatpush2.msra.mxu0 0.0
        %1234 = vmatprep.subr.mxu0 0.0
        %1235 = vmatpush2.msra.mxu0 0.0
        %1236 = vmatprep.subr.mxu0 0.0
        %1237 = vmatpush2.msra.mxu0 0.0
        %1238 = vmatprep.subr.mxu0 0.0
        %1239 = vmatpush2.msra.mxu0 0.0
        %1240 = vmatprep.subr.mxu0 0.0
        %1241 = vmatpush2.msra.mxu0 0.0
        %1242 = vmatprep.subr.mxu0 0.0
        %1243 = vmatpush2.msra.mxu0 0.0
        %1244 = vmatprep.subr.mxu0 0.0
        %1245 = vmatpush2.msra.mxu0 0.0
        %1246 = vmatprep.subr.mxu0 0.0
        %1247 = vmatpush2.msra.mxu0 0.0
        %1248 = vmatprep.subr.mxu0 0.0
        %1249 = vmatpush2.msra.mxu0 0.0
        %1250 = vmatprep.subr.mxu0 0.0
        %1251 = vmatpush2.msra.mxu0 0.0
        %1252 = vmatprep.subr.mxu0 0.0
        %1253 = vmatpush2.msra.mxu0 0.0
        %1254 = vmatprep.mubr.f32.mxu0 0.0
        %1255 = vmatmul.mubr.f32.gmra.mxu0 %v983
        %v1256 = vpop.f32.mrf.mxu0
        %v1257 = vadd.f32 0.0, %v1256
        %v1258 = vpop.f32.mrf.mxu0
        %v1259 = vadd.f32 0.0, %v1258
        %1260 = vmatprep.mubr.f32.mxu0 0.0
        %1261 = vmatmul.mubr.f32.gmra.mxu0 %v986
        %v1262 = vpop.f32.mrf.mxu0
        %v1263 = vadd.f32 0.0, %v1262
        %v1264 = vpop.f32.mrf.mxu0
        %v1265 = vadd.f32 0.0, %v1264
        %1266 = vmatprep.mubr.f32.mxu0 0.0
        %1267 = vmatmul.mubr.f32.gmra.mxu0 %v989
        %v1268 = vpop.f32.mrf.mxu0
        %v1269 = vadd.f32 0.0, %v1268
        %v1270 = vpop.f32.mrf.mxu0
        %v1271 = vadd.f32 0.0, %v1270
        %1272 = vmatprep.mubr.f32.mxu0 0.0
        %1273 = vmatmul.mubr.f32.gmra.mxu0 %v992
        %v1274 = vpop.f32.mrf.mxu0
        %v1275 = vadd.f32 0.0, %v1274
        %v1276 = vpop.f32.mrf.mxu0
        %v1277 = vadd.f32 0.0, %v1276
        %1278 = vdwg.mxu0
        %v1279 = vld [vmem:[#allocation8] sm:$0xff]
        %v1280 = vld [vmem:[#allocation8 + $0x8] sm:$0xff]
        %v1281 = vld [vmem:[#allocation8 + $0x10] sm:$0xff]
        %v1282 = vld [vmem:[#allocation8 + $0x18] sm:$0xff]
        %v1284 = vsel %vm981, %v1279, 0
        %v1287 = vsel %vm981, %v1280, 0
        %v1290 = vsel %vm981, %v1281, 0
        %v1293 = vsel %vm981, %v1282, 0
        %1295 = vmatprep.subr.mxu0 0.0
        %1296 = vmatpush1.msra.mxu0 0.0
        %1297 = vmatprep.subr.mxu0 0.0
        %1298 = vmatpush1.msra.mxu0 0.0
        %1299 = vmatprep.subr.mxu0 0.0
        %1300 = vmatpush1.msra.mxu0 0.0
        %1301 = vmatprep.subr.mxu0 0.0
        %1302 = vmatpush1.msra.mxu0 0.0
        %1303 = vmatprep.subr.mxu0 0.0
        %1304 = vmatpush1.msra.mxu0 0.0
        %1305 = vmatprep.subr.mxu0 0.0
        %1306 = vmatpush1.msra.mxu0 0.0
        %1307 = vmatprep.subr.mxu0 0.0
        %1308 = vmatpush1.msra.mxu0 0.0
        %1309 = vmatprep.subr.mxu0 0.0
        %1310 = vmatpush1.msra.mxu0 0.0
        %1311 = vmatprep.subr.mxu0 0.0
        %1312 = vmatpush1.msra.mxu0 0.0
        %1313 = vmatprep.subr.mxu0 0.0
        %1314 = vmatpush1.msra.mxu0 0.0
        %1315 = vmatprep.subr.mxu0 0.0
        %1316 = vmatpush1.msra.mxu0 0.0
        %1317 = vmatprep.subr.mxu0 0.0
        %1318 = vmatpush1.msra.mxu0 0.0
        %1319 = vmatprep.subr.mxu0 %v1081
        %1320 = vmatpush1.msra.mxu0 %v1079
        %1321 = vmatprep.subr.mxu0 %v1075
        %1322 = vmatpush1.msra.mxu0 %v1073
        %1323 = vmatprep.subr.mxu0 %v1069
        %1324 = vmatpush1.msra.mxu0 %v1067
        %1325 = vmatprep.subr.mxu0 %v1063
        %1326 = vmatpush1.msra.mxu0 %v1061
        %1327 = vmatprep.subr.mxu0 0.0
        %1328 = vmatpush2.msra.mxu0 0.0
        %1329 = vmatprep.subr.mxu0 0.0
        %1330 = vmatpush2.msra.mxu0 0.0
        %1331 = vmatprep.subr.mxu0 0.0
        %1332 = vmatpush2.msra.mxu0 0.0
        %1333 = vmatprep.subr.mxu0 0.0
        %1334 = vmatpush2.msra.mxu0 0.0
        %1335 = vmatprep.subr.mxu0 0.0
        %1336 = vmatpush2.msra.mxu0 0.0
        %1337 = vmatprep.subr.mxu0 0.0
        %1338 = vmatpush2.msra.mxu0 0.0
        %1339 = vmatprep.subr.mxu0 0.0
        %1340 = vmatpush2.msra.mxu0 0.0
        %1341 = vmatprep.subr.mxu0 0.0
        %1342 = vmatpush2.msra.mxu0 0.0
        %1343 = vmatprep.subr.mxu0 0.0
        %1344 = vmatpush2.msra.mxu0 0.0
        %1345 = vmatprep.subr.mxu0 0.0
        %1346 = vmatpush2.msra.mxu0 0.0
        %1347 = vmatprep.subr.mxu0 0.0
        %1348 = vmatpush2.msra.mxu0 0.0
        %1349 = vmatprep.subr.mxu0 0.0
        %1350 = vmatpush2.msra.mxu0 0.0
        %1351 = vmatprep.subr.mxu0 0.0
        %1352 = vmatpush2.msra.mxu0 0.0
        %1353 = vmatprep.subr.mxu0 0.0
        %1354 = vmatpush2.msra.mxu0 0.0
        %1355 = vmatprep.subr.mxu0 0.0
        %1356 = vmatpush2.msra.mxu0 0.0
        %1357 = vmatprep.subr.mxu0 0.0
        %1358 = vmatpush2.msra.mxu0 0.0
        %1359 = vmatprep.mubr.f32.mxu0 0.0
        %1360 = vmatmul.mubr.f32.gmra.mxu0 %v1284
        %v1361 = vpop.f32.mrf.mxu0
        %v1362 = vadd.f32 %v1159, %v1361
        %v1363 = vpop.f32.mrf.mxu0
        %v1364 = vadd.f32 %v1161, %v1363
        %1365 = vmatprep.mubr.f32.mxu0 0.0
        %1366 = vmatmul.mubr.f32.gmra.mxu0 %v1287
        %v1367 = vpop.f32.mrf.mxu0
        %v1368 = vadd.f32 %v1165, %v1367
        %v1369 = vpop.f32.mrf.mxu0
        %v1370 = vadd.f32 %v1167, %v1369
        %1371 = vmatprep.mubr.f32.mxu0 0.0
        %1372 = vmatmul.mubr.f32.gmra.mxu0 %v1290
        %v1373 = vpop.f32.mrf.mxu0
        %v1374 = vadd.f32 %v1171, %v1373
        %v1375 = vpop.f32.mrf.mxu0
        %v1376 = vadd.f32 %v1173, %v1375
        %1377 = vmatprep.mubr.f32.mxu0 0.0
        %1378 = vmatmul.mubr.f32.gmra.mxu0 %v1293
        %v1379 = vpop.f32.mrf.mxu0
        %v1380 = vadd.f32 %v1177, %v1379
        %v1381 = vpop.f32.mrf.mxu0
        %v1382 = vadd.f32 %v1179, %v1381
        %1383 = vdwg.mxu0
        %v1384 = vld [vmem:[#allocation10] sm:$0xff]
        %v1385 = vld [vmem:[#allocation10 + $0x8] sm:$0xff]
        %v1386 = vld [vmem:[#allocation10 + $0x10] sm:$0xff]
        %v1387 = vld [vmem:[#allocation10 + $0x18] sm:$0xff]
        %v1389 = vsel %vm981, %v1384, 0
        %v1392 = vsel %vm981, %v1385, 0
        %v1395 = vsel %vm981, %v1386, 0
        %v1398 = vsel %vm981, %v1387, 0
        %1400 = vmatprep.subr.mxu0 0.0
        %1401 = vmatpush1.msra.mxu0 0.0
        %1402 = vmatprep.subr.mxu0 0.0
        %1403 = vmatpush1.msra.mxu0 0.0
        %1404 = vmatprep.subr.mxu0 0.0
        %1405 = vmatpush1.msra.mxu0 0.0
        %1406 = vmatprep.subr.mxu0 0.0
        %1407 = vmatpush1.msra.mxu0 0.0
        %1408 = vmatprep.subr.mxu0 0.0
        %1409 = vmatpush1.msra.mxu0 0.0
        %1410 = vmatprep.subr.mxu0 0.0
        %1411 = vmatpush1.msra.mxu0 0.0
        %1412 = vmatprep.subr.mxu0 0.0
        %1413 = vmatpush1.msra.mxu0 0.0
        %1414 = vmatprep.subr.mxu0 0.0
        %1415 = vmatpush1.msra.mxu0 0.0
        %1416 = vmatprep.subr.mxu0 0.0
        %1417 = vmatpush1.msra.mxu0 0.0
        %1418 = vmatprep.subr.mxu0 0.0
        %1419 = vmatpush1.msra.mxu0 0.0
        %1420 = vmatprep.subr.mxu0 0.0
        %1421 = vmatpush1.msra.mxu0 0.0
        %1422 = vmatprep.subr.mxu0 0.0
        %1423 = vmatpush1.msra.mxu0 0.0
        %1424 = vmatprep.subr.mxu0 %v1277
        %1425 = vmatpush1.msra.mxu0 %v1275
        %1426 = vmatprep.subr.mxu0 %v1271
        %1427 = vmatpush1.msra.mxu0 %v1269
        %1428 = vmatprep.subr.mxu0 %v1265
        %1429 = vmatpush1.msra.mxu0 %v1263
        %1430 = vmatprep.subr.mxu0 %v1259
        %1431 = vmatpush1.msra.mxu0 %v1257
        %1432 = vmatprep.subr.mxu0 0.0
        %1433 = vmatpush2.msra.mxu0 0.0
        %1434 = vmatprep.subr.mxu0 0.0
        %1435 = vmatpush2.msra.mxu0 0.0
        %1436 = vmatprep.subr.mxu0 0.0
        %1437 = vmatpush2.msra.mxu0 0.0
        %1438 = vmatprep.subr.mxu0 0.0
        %1439 = vmatpush2.msra.mxu0 0.0
        %1440 = vmatprep.subr.mxu0 0.0
        %1441 = vmatpush2.msra.mxu0 0.0
        %1442 = vmatprep.subr.mxu0 0.0
        %1443 = vmatpush2.msra.mxu0 0.0
        %1444 = vmatprep.subr.mxu0 0.0
        %1445 = vmatpush2.msra.mxu0 0.0
        %1446 = vmatprep.subr.mxu0 0.0
        %1447 = vmatpush2.msra.mxu0 0.0
        %1448 = vmatprep.subr.mxu0 0.0
        %1449 = vmatpush2.msra.mxu0 0.0
        %1450 = vmatprep.subr.mxu0 0.0
        %1451 = vmatpush2.msra.mxu0 0.0
        %1452 = vmatprep.subr.mxu0 0.0
        %1453 = vmatpush2.msra.mxu0 0.0
        %1454 = vmatprep.subr.mxu0 0.0
        %1455 = vmatpush2.msra.mxu0 0.0
        %1456 = vmatprep.subr.mxu0 0.0
        %1457 = vmatpush2.msra.mxu0 0.0
        %1458 = vmatprep.subr.mxu0 0.0
        %1459 = vmatpush2.msra.mxu0 0.0
        %1460 = vmatprep.subr.mxu0 0.0
        %1461 = vmatpush2.msra.mxu0 0.0
        %1462 = vmatprep.subr.mxu0 0.0
        %1463 = vmatpush2.msra.mxu0 0.0
        %1464 = vmatprep.mubr.f32.mxu0 0.0
        %1465 = vmatmul.mubr.f32.gmra.mxu0 %v1389
        %v1466 = vpop.f32.mrf.mxu0
        %v1467 = vadd.f32 0.0, %v1466
        %v1468 = vpop.f32.mrf.mxu0
        %v1469 = vadd.f32 0.0, %v1468
        %1470 = vmatprep.mubr.f32.mxu0 0.0
        %1471 = vmatmul.mubr.f32.gmra.mxu0 %v1392
        %v1472 = vpop.f32.mrf.mxu0
        %v1473 = vadd.f32 0.0, %v1472
        %v1474 = vpop.f32.mrf.mxu0
        %v1475 = vadd.f32 0.0, %v1474
        %1476 = vmatprep.mubr.f32.mxu0 0.0
        %1477 = vmatmul.mubr.f32.gmra.mxu0 %v1395
        %v1478 = vpop.f32.mrf.mxu0
        %v1479 = vadd.f32 0.0, %v1478
        %v1480 = vpop.f32.mrf.mxu0
        %v1481 = vadd.f32 0.0, %v1480
        %1482 = vmatprep.mubr.f32.mxu0 0.0
        %1483 = vmatmul.mubr.f32.gmra.mxu0 %v1398
        %v1484 = vpop.f32.mrf.mxu0
        %v1485 = vadd.f32 0.0, %v1484
        %v1486 = vpop.f32.mrf.mxu0
        %v1487 = vadd.f32 0.0, %v1486
        %1488 = vdwg.mxu0
        %v1489 = vadd.f32 %v1362, %v1467
        %v1490 = vadd.f32 %v1364, %v1469
        %v1491 = vadd.f32 %v1368, %v1473
        %v1492 = vadd.f32 %v1370, %v1475
        %v1493 = vadd.f32 %v1374, %v1479
        %v1494 = vadd.f32 %v1376, %v1481
        %v1495 = vadd.f32 %v1380, %v1485
        %v1496 = vadd.f32 %v1382, %v1487
        %v1497 = vld [vmem:[#allocation7] sm:$0x3]
        %v1499 = vlaneseq
        %v1500 = vshrl.u32 %v1499, 7
        %v1501 = vsub.s32 0, %v1500
        %v1502 = vrot.slane %v1497, %v1501
        %v1503 = vlaneseq
        %v1504 = vshrl.u32 %v1503, 7
        %v1505 = vsub.s32 1, %v1504
        %v1506 = vrot.slane %v1497, %v1505
        %v1509 = vadd.f32 %v1489, %v1502
        %v1510 = vadd.f32 %v1490, %v1506
        %v1511 = vadd.f32 %v1491, %v1502
        %v1512 = vadd.f32 %v1492, %v1506
        %v1513 = vadd.f32 %v1493, %v1502
        %v1514 = vadd.f32 %v1494, %v1506
        %v1515 = vadd.f32 %v1495, %v1502
        %v1516 = vadd.f32 %v1496, %v1506
        %v1517 = vmax.f32 %v1509, 0.0
        %v1518 = vmax.f32 %v1510, 0.0
        %v1519 = vmax.f32 %v1511, 0.0
        %v1520 = vmax.f32 %v1512, 0.0
        %v1521 = vmax.f32 %v1513, 0.0
        %v1522 = vmax.f32 %v1514, 0.0
        %v1523 = vmax.f32 %v1515, 0.0
        %v1524 = vmax.f32 %v1516, 0.0
        %v1525 = vld [vmem:[#allocation11] sm:$0xff]
        %v1526 = vld [vmem:[#allocation11 + $0x8] sm:$0xff]
        %v1528 = vsel %vm981, %v1525, 0
        %v1531 = vsel %vm981, %v1526, 0
        %1533 = vmatprep.subr.mxu0 0.0
        %1534 = vmatpush1.msra.mxu0 0.0
        %1535 = vmatprep.subr.mxu0 0.0
        %1536 = vmatpush1.msra.mxu0 0.0
        %1537 = vmatprep.subr.mxu0 0.0
        %1538 = vmatpush1.msra.mxu0 0.0
        %1539 = vmatprep.subr.mxu0 0.0
        %1540 = vmatpush1.msra.mxu0 0.0
        %1541 = vmatprep.subr.mxu0 0.0
        %1542 = vmatpush1.msra.mxu0 0.0
        %1543 = vmatprep.subr.mxu0 0.0
        %1544 = vmatpush1.msra.mxu0 0.0
        %1545 = vmatprep.subr.mxu0 0.0
        %1546 = vmatpush1.msra.mxu0 0.0
        %1547 = vmatprep.subr.mxu0 0.0
        %1548 = vmatpush1.msra.mxu0 0.0
        %1549 = vmatprep.subr.mxu0 0.0
        %1550 = vmatpush1.msra.mxu0 0.0
        %1551 = vmatprep.subr.mxu0 0.0
        %1552 = vmatpush1.msra.mxu0 0.0
        %1553 = vmatprep.subr.mxu0 0.0
        %1554 = vmatpush1.msra.mxu0 0.0
        %1555 = vmatprep.subr.mxu0 0.0
        %1556 = vmatpush1.msra.mxu0 0.0
        %1557 = vmatprep.subr.mxu0 %v1524
        %1558 = vmatpush1.msra.mxu0 %v1523
        %1559 = vmatprep.subr.mxu0 %v1522
        %1560 = vmatpush1.msra.mxu0 %v1521
        %1561 = vmatprep.subr.mxu0 %v1520
        %1562 = vmatpush1.msra.mxu0 %v1519
        %1563 = vmatprep.subr.mxu0 %v1518
        %1564 = vmatpush1.msra.mxu0 %v1517
        %1565 = vmatprep.subr.mxu0 0.0
        %1566 = vmatpush2.msra.mxu0 0.0
        %1567 = vmatprep.subr.mxu0 0.0
        %1568 = vmatpush2.msra.mxu0 0.0
        %1569 = vmatprep.subr.mxu0 0.0
        %1570 = vmatpush2.msra.mxu0 0.0
        %1571 = vmatprep.subr.mxu0 0.0
        %1572 = vmatpush2.msra.mxu0 0.0
        %1573 = vmatprep.subr.mxu0 0.0
        %1574 = vmatpush2.msra.mxu0 0.0
        %1575 = vmatprep.subr.mxu0 0.0
        %1576 = vmatpush2.msra.mxu0 0.0
        %1577 = vmatprep.subr.mxu0 0.0
        %1578 = vmatpush2.msra.mxu0 0.0
        %1579 = vmatprep.subr.mxu0 0.0
        %1580 = vmatpush2.msra.mxu0 0.0
        %1581 = vmatprep.subr.mxu0 0.0
        %1582 = vmatpush2.msra.mxu0 0.0
        %1583 = vmatprep.subr.mxu0 0.0
        %1584 = vmatpush2.msra.mxu0 0.0
        %1585 = vmatprep.subr.mxu0 0.0
        %1586 = vmatpush2.msra.mxu0 0.0
        %1587 = vmatprep.subr.mxu0 0.0
        %1588 = vmatpush2.msra.mxu0 0.0
        %1589 = vmatprep.subr.mxu0 0.0
        %1590 = vmatpush2.msra.mxu0 0.0
        %1591 = vmatprep.subr.mxu0 0.0
        %1592 = vmatpush2.msra.mxu0 0.0
        %1593 = vmatprep.subr.mxu0 0.0
        %1594 = vmatpush2.msra.mxu0 0.0
        %1595 = vmatprep.subr.mxu0 0.0
        %1596 = vmatpush2.msra.mxu0 0.0
        %1597 = vmatprep.mubr.f32.mxu0 0.0
        %1598 = vmatmul.mubr.f32.gmra.mxu0 %v1528
        %v1599 = vpop.f32.mrf.mxu0
        %v1600 = vadd.f32 0.0, %v1599
        %v1601 = vpop.f32.mrf.mxu0
        %v1602 = vadd.f32 0.0, %v1601
        %1603 = vmatprep.mubr.f32.mxu0 0.0
        %1604 = vmatmul.mubr.f32.gmra.mxu0 %v1531
        %v1605 = vpop.f32.mrf.mxu0
        %v1606 = vadd.f32 0.0, %v1605
        %v1607 = vpop.f32.mrf.mxu0
        %v1608 = vadd.f32 0.0, %v1607
        %1609 = vdwg.mxu0
        %v1610 = vld [vmem:[#allocation13] sm:$0xff]
        %v1611 = vld [vmem:[#allocation13 + $0x8] sm:$0xff]
        %v1613 = vsel %vm981, %v1610, 0
        %v1616 = vsel %vm981, %v1611, 0
        %1618 = vmatprep.subr.mxu0 0.0
        %1619 = vmatpush1.msra.mxu0 0.0
        %1620 = vmatprep.subr.mxu0 0.0
        %1621 = vmatpush1.msra.mxu0 0.0
        %1622 = vmatprep.subr.mxu0 0.0
        %1623 = vmatpush1.msra.mxu0 0.0
        %1624 = vmatprep.subr.mxu0 0.0
        %1625 = vmatpush1.msra.mxu0 0.0
        %1626 = vmatprep.subr.mxu0 0.0
        %1627 = vmatpush1.msra.mxu0 0.0
        %1628 = vmatprep.subr.mxu0 0.0
        %1629 = vmatpush1.msra.mxu0 0.0
        %1630 = vmatprep.subr.mxu0 0.0
        %1631 = vmatpush1.msra.mxu0 0.0
        %1632 = vmatprep.subr.mxu0 0.0
        %1633 = vmatpush1.msra.mxu0 0.0
        %1634 = vmatprep.subr.mxu0 0.0
        %1635 = vmatpush1.msra.mxu0 0.0
        %1636 = vmatprep.subr.mxu0 0.0
        %1637 = vmatpush1.msra.mxu0 0.0
        %1638 = vmatprep.subr.mxu0 0.0
        %1639 = vmatpush1.msra.mxu0 0.0
        %1640 = vmatprep.subr.mxu0 0.0
        %1641 = vmatpush1.msra.mxu0 0.0
        %1642 = vmatprep.subr.mxu0 %v1524
        %1643 = vmatpush1.msra.mxu0 %v1523
        %1644 = vmatprep.subr.mxu0 %v1522
        %1645 = vmatpush1.msra.mxu0 %v1521
        %1646 = vmatprep.subr.mxu0 %v1520
        %1647 = vmatpush1.msra.mxu0 %v1519
        %1648 = vmatprep.subr.mxu0 %v1518
        %1649 = vmatpush1.msra.mxu0 %v1517
        %1650 = vmatprep.subr.mxu0 0.0
        %1651 = vmatpush2.msra.mxu0 0.0
        %1652 = vmatprep.subr.mxu0 0.0
        %1653 = vmatpush2.msra.mxu0 0.0
        %1654 = vmatprep.subr.mxu0 0.0
        %1655 = vmatpush2.msra.mxu0 0.0
        %1656 = vmatprep.subr.mxu0 0.0
        %1657 = vmatpush2.msra.mxu0 0.0
        %1658 = vmatprep.subr.mxu0 0.0
        %1659 = vmatpush2.msra.mxu0 0.0
        %1660 = vmatprep.subr.mxu0 0.0
        %1661 = vmatpush2.msra.mxu0 0.0
        %1662 = vmatprep.subr.mxu0 0.0
        %1663 = vmatpush2.msra.mxu0 0.0
        %1664 = vmatprep.subr.mxu0 0.0
        %1665 = vmatpush2.msra.mxu0 0.0
        %1666 = vmatprep.subr.mxu0 0.0
        %1667 = vmatpush2.msra.mxu0 0.0
        %1668 = vmatprep.subr.mxu0 0.0
        %1669 = vmatpush2.msra.mxu0 0.0
        %1670 = vmatprep.subr.mxu0 0.0
        %1671 = vmatpush2.msra.mxu0 0.0
        %1672 = vmatprep.subr.mxu0 0.0
        %1673 = vmatpush2.msra.mxu0 0.0
        %1674 = vmatprep.subr.mxu0 0.0
        %1675 = vmatpush2.msra.mxu0 0.0
        %1676 = vmatprep.subr.mxu0 0.0
        %1677 = vmatpush2.msra.mxu0 0.0
        %1678 = vmatprep.subr.mxu0 0.0
        %1679 = vmatpush2.msra.mxu0 0.0
        %1680 = vmatprep.subr.mxu0 0.0
        %1681 = vmatpush2.msra.mxu0 0.0
        %1682 = vmatprep.mubr.f32.mxu0 0.0
        %1683 = vmatmul.mubr.f32.gmra.mxu0 %v1613
        %v1684 = vpop.f32.mrf.mxu0
        %v1685 = vadd.f32 0.0, %v1684
        %v1686 = vpop.f32.mrf.mxu0
        %v1687 = vadd.f32 0.0, %v1686
        %1688 = vmatprep.mubr.f32.mxu0 0.0
        %1689 = vmatmul.mubr.f32.gmra.mxu0 %v1616
        %v1690 = vpop.f32.mrf.mxu0
        %v1691 = vadd.f32 0.0, %v1690
        %v1692 = vpop.f32.mrf.mxu0
        %v1693 = vadd.f32 0.0, %v1692
        %1694 = vdwg.mxu0
        %v1695 = vmax.f32 %v1600, %v1685
        %v1696 = vmax.f32 %v1602, %v1687
        %v1697 = vmax.f32 %v1606, %v1691
        %v1698 = vmax.f32 %v1608, %v1693
        %v1699 = vld [vmem:[#allocation14] sm:$0xff]
        %v1700 = vld [vmem:[#allocation14 + $0x8] sm:$0xff]
        %v1701 = vld [vmem:[#allocation14 + $0x10] sm:$0xff]
        %v1702 = vld [vmem:[#allocation14 + $0x18] sm:$0xff]
        %v1703 = vld [vmem:[#allocation14 + $0x20] sm:$0xff]
        %v1704 = vld [vmem:[#allocation14 + $0x28] sm:$0xff]
        %v1705 = vld [vmem:[#allocation14 + $0x30] sm:$0xff]
        %v1706 = vld [vmem:[#allocation14 + $0x38] sm:$0xff]
        %v1707 = vld [vmem:[#allocation14 + $0x40] sm:$0xff]
        %v1708 = vld [vmem:[#allocation14 + $0x48] sm:$0xff]
        %v1709 = vld [vmem:[#allocation14 + $0x50] sm:$0xff]
        %v1710 = vld [vmem:[#allocation14 + $0x58] sm:$0xff]
        %v1711 = vld [vmem:[#allocation14 + $0x60] sm:$0xff]
        %v1712 = vld [vmem:[#allocation14 + $0x68] sm:$0xff]
        %v1713 = vld [vmem:[#allocation14 + $0x70] sm:$0xff]
        %v1714 = vld [vmem:[#allocation14 + $0x78] sm:$0xff]
        %v1715 = vld [vmem:[#allocation14 + $0x80] sm:$0xff]
        %v1716 = vld [vmem:[#allocation14 + $0x88] sm:$0xff]
        %v1717 = vld [vmem:[#allocation14 + $0x90] sm:$0xff]
        %v1718 = vld [vmem:[#allocation14 + $0x98] sm:$0xff]
        %v1719 = vld [vmem:[#allocation14 + $0xa0] sm:$0xff]
        %v1720 = vld [vmem:[#allocation14 + $0xa8] sm:$0xff]
        %v1721 = vld [vmem:[#allocation14 + $0xb0] sm:$0xff]
        %v1722 = vld [vmem:[#allocation14 + $0xb8] sm:$0xff]
        %vm1723 = vcmask 523264
        %v1725 = vsel %vm1723, %v1696, 0
        %v1728 = vsel %vm1723, %v1698, 0
        %1730 = vmatprep.subr.mxu0 0.0
        %1731 = vmatpush1.msra.mxu0 %v1714
        %1732 = vmatprep.subr.mxu0 0.0
        %1733 = vmatpush1.msra.mxu0 %v1713
        %1734 = vmatprep.subr.mxu0 0.0
        %1735 = vmatpush1.msra.mxu0 %v1712
        %1736 = vmatprep.subr.mxu0 0.0
        %1737 = vmatpush1.msra.mxu0 %v1711
        %1738 = vmatprep.subr.mxu0 0.0
        %1739 = vmatpush1.msra.mxu0 %v1710
        %1740 = vmatprep.subr.mxu0 0.0
        %1741 = vmatpush1.msra.mxu0 %v1709
        %1742 = vmatprep.subr.mxu0 0.0
        %1743 = vmatpush1.msra.mxu0 %v1708
        %1744 = vmatprep.subr.mxu0 0.0
        %1745 = vmatpush1.msra.mxu0 %v1707
        %1746 = vmatprep.subr.mxu0 0.0
        %1747 = vmatpush1.msra.mxu0 %v1706
        %1748 = vmatprep.subr.mxu0 0.0
        %1749 = vmatpush1.msra.mxu0 %v1705
        %1750 = vmatprep.subr.mxu0 0.0
        %1751 = vmatpush1.msra.mxu0 %v1704
        %1752 = vmatprep.subr.mxu0 0.0
        %1753 = vmatpush1.msra.mxu0 %v1703
        %1754 = vmatprep.subr.mxu0 0.0
        %1755 = vmatpush1.msra.mxu0 %v1702
        %1756 = vmatprep.subr.mxu0 0.0
        %1757 = vmatpush1.msra.mxu0 %v1701
        %1758 = vmatprep.subr.mxu0 0.0
        %1759 = vmatpush1.msra.mxu0 %v1700
        %1760 = vmatprep.subr.mxu0 0.0
        %1761 = vmatpush1.msra.mxu0 %v1699
        %1762 = vmatprep.subr.mxu0 0.0
        %1763 = vmatpush2.msra.mxu0 0.0
        %1764 = vmatprep.subr.mxu0 0.0
        %1765 = vmatpush2.msra.mxu0 0.0
        %1766 = vmatprep.subr.mxu0 0.0
        %1767 = vmatpush2.msra.mxu0 0.0
        %1768 = vmatprep.subr.mxu0 0.0
        %1769 = vmatpush2.msra.mxu0 0.0
        %1770 = vmatprep.subr.mxu0 0.0
        %1771 = vmatpush2.msra.mxu0 0.0
        %1772 = vmatprep.subr.mxu0 0.0
        %1773 = vmatpush2.msra.mxu0 0.0
        %1774 = vmatprep.subr.mxu0 0.0
        %1775 = vmatpush2.msra.mxu0 0.0
        %1776 = vmatprep.subr.mxu0 0.0
        %1777 = vmatpush2.msra.mxu0 0.0
        %1778 = vmatprep.subr.mxu0 0.0
        %1779 = vmatpush2.msra.mxu0 %v1722
        %1780 = vmatprep.subr.mxu0 0.0
        %1781 = vmatpush2.msra.mxu0 %v1721
        %1782 = vmatprep.subr.mxu0 0.0
        %1783 = vmatpush2.msra.mxu0 %v1720
        %1784 = vmatprep.subr.mxu0 0.0
        %1785 = vmatpush2.msra.mxu0 %v1719
        %1786 = vmatprep.subr.mxu0 0.0
        %1787 = vmatpush2.msra.mxu0 %v1718
        %1788 = vmatprep.subr.mxu0 0.0
        %1789 = vmatpush2.msra.mxu0 %v1717
        %1790 = vmatprep.subr.mxu0 0.0
        %1791 = vmatpush2.msra.mxu0 %v1716
        %1792 = vmatprep.subr.mxu0 0.0
        %1793 = vmatpush2.msra.mxu0 %v1715
        %1794 = vmatprep.mubr.f32.mxu0 %v1725
        %1795 = vmatmul.mubr.f32.gmra.mxu0 %v1695
        %v1796 = vpop.f32.mrf.mxu0
        %v1797 = vadd.f32 0.0, %v1796
        %v1798 = vpop.f32.mrf.mxu0
        %1799 = vmatprep.mubr.f32.mxu0 %v1728
        %1800 = vmatmul.mubr.f32.gmra.mxu0 %v1697
        %v1801 = vpop.f32.mrf.mxu0
        %v1802 = vadd.f32 0.0, %v1801
        %v1803 = vpop.f32.mrf.mxu0
        %1804 = vdwg.mxu0
        %v1805 = vld [vmem:[#allocation16] sm:$0xff]
        %v1806 = vld [vmem:[#allocation16 + $0x8] sm:$0xff]
        %v1807 = vld [vmem:[#allocation16 + $0x10] sm:$0xff]
        %v1808 = vld [vmem:[#allocation16 + $0x18] sm:$0xff]
        %v1809 = vld [vmem:[#allocation16 + $0x20] sm:$0xff]
        %v1810 = vld [vmem:[#allocation16 + $0x28] sm:$0xff]
        %v1811 = vld [vmem:[#allocation16 + $0x30] sm:$0xff]
        %v1812 = vld [vmem:[#allocation16 + $0x38] sm:$0xff]
        %v1813 = vld [vmem:[#allocation16 + $0x40] sm:$0xff]
        %v1814 = vld [vmem:[#allocation16 + $0x48] sm:$0xff]
        %v1815 = vld [vmem:[#allocation16 + $0x50] sm:$0xff]
        %v1816 = vld [vmem:[#allocation16 + $0x58] sm:$0xff]
        %v1817 = vld [vmem:[#allocation16 + $0x60] sm:$0xff]
        %v1818 = vld [vmem:[#allocation16 + $0x68] sm:$0xff]
        %v1819 = vld [vmem:[#allocation16 + $0x70] sm:$0xff]
        %v1820 = vld [vmem:[#allocation16 + $0x78] sm:$0xff]
        %v1821 = vld [vmem:[#allocation16 + $0x80] sm:$0xff]
        %v1822 = vld [vmem:[#allocation16 + $0x88] sm:$0xff]
        %v1823 = vld [vmem:[#allocation16 + $0x90] sm:$0xff]
        %v1824 = vld [vmem:[#allocation16 + $0x98] sm:$0xff]
        %v1825 = vld [vmem:[#allocation16 + $0xa0] sm:$0xff]
        %v1826 = vld [vmem:[#allocation16 + $0xa8] sm:$0xff]
        %v1827 = vld [vmem:[#allocation16 + $0xb0] sm:$0xff]
        %v1828 = vld [vmem:[#allocation16 + $0xb8] sm:$0xff]
        %1829 = vmatprep.subr.mxu0 0.0
        %1830 = vmatpush1.msra.mxu0 %v1820
        %1831 = vmatprep.subr.mxu0 0.0
        %1832 = vmatpush1.msra.mxu0 %v1819
        %1833 = vmatprep.subr.mxu0 0.0
        %1834 = vmatpush1.msra.mxu0 %v1818
        %1835 = vmatprep.subr.mxu0 0.0
        %1836 = vmatpush1.msra.mxu0 %v1817
        %1837 = vmatprep.subr.mxu0 0.0
        %1838 = vmatpush1.msra.mxu0 %v1816
        %1839 = vmatprep.subr.mxu0 0.0
        %1840 = vmatpush1.msra.mxu0 %v1815
        %1841 = vmatprep.subr.mxu0 0.0
        %1842 = vmatpush1.msra.mxu0 %v1814
        %1843 = vmatprep.subr.mxu0 0.0
        %1844 = vmatpush1.msra.mxu0 %v1813
        %1845 = vmatprep.subr.mxu0 0.0
        %1846 = vmatpush1.msra.mxu0 %v1812
        %1847 = vmatprep.subr.mxu0 0.0
        %1848 = vmatpush1.msra.mxu0 %v1811
        %1849 = vmatprep.subr.mxu0 0.0
        %1850 = vmatpush1.msra.mxu0 %v1810
        %1851 = vmatprep.subr.mxu0 0.0
        %1852 = vmatpush1.msra.mxu0 %v1809
        %1853 = vmatprep.subr.mxu0 0.0
        %1854 = vmatpush1.msra.mxu0 %v1808
        %1855 = vmatprep.subr.mxu0 0.0
        %1856 = vmatpush1.msra.mxu0 %v1807
        %1857 = vmatprep.subr.mxu0 0.0
        %1858 = vmatpush1.msra.mxu0 %v1806
        %1859 = vmatprep.subr.mxu0 0.0
        %1860 = vmatpush1.msra.mxu0 %v1805
        %1861 = vmatprep.subr.mxu0 0.0
        %1862 = vmatpush2.msra.mxu0 0.0
        %1863 = vmatprep.subr.mxu0 0.0
        %1864 = vmatpush2.msra.mxu0 0.0
        %1865 = vmatprep.subr.mxu0 0.0
        %1866 = vmatpush2.msra.mxu0 0.0
        %1867 = vmatprep.subr.mxu0 0.0
        %1868 = vmatpush2.msra.mxu0 0.0
        %1869 = vmatprep.subr.mxu0 0.0
        %1870 = vmatpush2.msra.mxu0 0.0
        %1871 = vmatprep.subr.mxu0 0.0
        %1872 = vmatpush2.msra.mxu0 0.0
        %1873 = vmatprep.subr.mxu0 0.0
        %1874 = vmatpush2.msra.mxu0 0.0
        %1875 = vmatprep.subr.mxu0 0.0
        %1876 = vmatpush2.msra.mxu0 0.0
        %1877 = vmatprep.subr.mxu0 0.0
        %1878 = vmatpush2.msra.mxu0 %v1828
        %1879 = vmatprep.subr.mxu0 0.0
        %1880 = vmatpush2.msra.mxu0 %v1827
        %1881 = vmatprep.subr.mxu0 0.0
        %1882 = vmatpush2.msra.mxu0 %v1826
        %1883 = vmatprep.subr.mxu0 0.0
        %1884 = vmatpush2.msra.mxu0 %v1825
        %1885 = vmatprep.subr.mxu0 0.0
        %1886 = vmatpush2.msra.mxu0 %v1824
        %1887 = vmatprep.subr.mxu0 0.0
        %1888 = vmatpush2.msra.mxu0 %v1823
        %1889 = vmatprep.subr.mxu0 0.0
        %1890 = vmatpush2.msra.mxu0 %v1822
        %1891 = vmatprep.subr.mxu0 0.0
        %1892 = vmatpush2.msra.mxu0 %v1821
        %1893 = vmatprep.mubr.f32.mxu0 %v1725
        %1894 = vmatmul.mubr.f32.gmra.mxu0 %v1695
        %v1895 = vpop.f32.mrf.mxu0
        %v1896 = vadd.f32 0.0, %v1895
        %v1897 = vpop.f32.mrf.mxu0
        %1898 = vmatprep.mubr.f32.mxu0 %v1728
        %1899 = vmatmul.mubr.f32.gmra.mxu0 %v1697
        %v1900 = vpop.f32.mrf.mxu0
        %v1901 = vadd.f32 0.0, %v1900
        %v1902 = vpop.f32.mrf.mxu0
        %1903 = vdwg.mxu0
        %v1904 = vmax.f32 %v1797, %v1896
        %v1905 = vmax.f32 %v1802, %v1901
        %v1906 = vld [vmem:[#allocation17] sm:$0xff]
        %v1907 = vld [vmem:[#allocation17 + $0x8] sm:$0xff]
        %v1908 = vld [vmem:[#allocation17 + $0x10] sm:$0xff]
        %v1909 = vld [vmem:[#allocation17 + $0x18] sm:$0xff]
        %v1910 = vld [vmem:[#allocation17 + $0x20] sm:$0xff]
        %v1911 = vld [vmem:[#allocation17 + $0x28] sm:$0xff]
        %v1912 = vld [vmem:[#allocation17 + $0x30] sm:$0xff]
        %v1913 = vld [vmem:[#allocation17 + $0x38] sm:$0xff]
        %v1914 = vld [vmem:[#allocation17 + $0x40] sm:$0xff]
        %v1915 = vld [vmem:[#allocation17 + $0x48] sm:$0xff]
        %v1916 = vld [vmem:[#allocation17 + $0x50] sm:$0xff]
        %v1917 = vld [vmem:[#allocation17 + $0x58] sm:$0xff]
        %v1918 = vld [vmem:[#allocation17 + $0x60] sm:$0xff]
        %v1919 = vld [vmem:[#allocation17 + $0x68] sm:$0xff]
        %v1920 = vld [vmem:[#allocation17 + $0x70] sm:$0xff]
        %v1921 = vld [vmem:[#allocation17 + $0x78] sm:$0xff]
        %v1922 = vld [vmem:[#allocation17 + $0x80] sm:$0xff]
        %v1923 = vld [vmem:[#allocation17 + $0x88] sm:$0xff]
        %v1924 = vld [vmem:[#allocation17 + $0x90] sm:$0xff]
        %v1925 = vld [vmem:[#allocation17 + $0x98] sm:$0xff]
        %v1926 = vld [vmem:[#allocation17 + $0xa0] sm:$0xff]
        %v1927 = vld [vmem:[#allocation17 + $0xa8] sm:$0xff]
        %v1928 = vld [vmem:[#allocation17 + $0xb0] sm:$0xff]
        %v1929 = vld [vmem:[#allocation17 + $0xb8] sm:$0xff]
        %vm1930 = vcmask 785408
        %v1932 = vsel %vm1930, %v1904, 0
        %v1935 = vsel %vm1930, %v1905, 0
        %1937 = vmatprep.subr.mxu0 0.0
        %1938 = vmatpush1.msra.mxu0 0.0
        %1939 = vmatprep.subr.mxu0 0.0
        %1940 = vmatpush1.msra.mxu0 0.0
        %1941 = vmatprep.subr.mxu0 0.0
        %1942 = vmatpush1.msra.mxu0 0.0
        %1943 = vmatprep.subr.mxu0 0.0
        %1944 = vmatpush1.msra.mxu0 0.0
        %1945 = vmatprep.subr.mxu0 %v1929
        %1946 = vmatpush1.msra.mxu0 %v1928
        %1947 = vmatprep.subr.mxu0 %v1927
        %1948 = vmatpush1.msra.mxu0 %v1926
        %1949 = vmatprep.subr.mxu0 %v1925
        %1950 = vmatpush1.msra.mxu0 %v1924
        %1951 = vmatprep.subr.mxu0 %v1923
        %1952 = vmatpush1.msra.mxu0 %v1922
        %1953 = vmatprep.subr.mxu0 %v1921
        %1954 = vmatpush1.msra.mxu0 %v1920
        %1955 = vmatprep.subr.mxu0 %v1919
        %1956 = vmatpush1.msra.mxu0 %v1918
        %1957 = vmatprep.subr.mxu0 %v1917
        %1958 = vmatpush1.msra.mxu0 %v1916
        %1959 = vmatprep.subr.mxu0 %v1915
        %1960 = vmatpush1.msra.mxu0 %v1914
        %1961 = vmatprep.subr.mxu0 %v1913
        %1962 = vmatpush1.msra.mxu0 %v1912
        %1963 = vmatprep.subr.mxu0 %v1911
        %1964 = vmatpush1.msra.mxu0 %v1910
        %1965 = vmatprep.subr.mxu0 %v1909
        %1966 = vmatpush1.msra.mxu0 %v1908
        %1967 = vmatprep.subr.mxu0 %v1907
        %1968 = vmatpush1.msra.mxu0 %v1906
        %1969 = vmatprep.subr.mxu0 0.0
        %1970 = vmatpush2.msra.mxu0 0.0
        %1971 = vmatprep.subr.mxu0 0.0
        %1972 = vmatpush2.msra.mxu0 0.0
        %1973 = vmatprep.subr.mxu0 0.0
        %1974 = vmatpush2.msra.mxu0 0.0
        %1975 = vmatprep.subr.mxu0 0.0
        %1976 = vmatpush2.msra.mxu0 0.0
        %1977 = vmatprep.subr.mxu0 0.0
        %1978 = vmatpush2.msra.mxu0 0.0
        %1979 = vmatprep.subr.mxu0 0.0
        %1980 = vmatpush2.msra.mxu0 0.0
        %1981 = vmatprep.subr.mxu0 0.0
        %1982 = vmatpush2.msra.mxu0 0.0
        %1983 = vmatprep.subr.mxu0 0.0
        %1984 = vmatpush2.msra.mxu0 0.0
        %1985 = vmatprep.subr.mxu0 0.0
        %1986 = vmatpush2.msra.mxu0 0.0
        %1987 = vmatprep.subr.mxu0 0.0
        %1988 = vmatpush2.msra.mxu0 0.0
        %1989 = vmatprep.subr.mxu0 0.0
        %1990 = vmatpush2.msra.mxu0 0.0
        %1991 = vmatprep.subr.mxu0 0.0
        %1992 = vmatpush2.msra.mxu0 0.0
        %1993 = vmatprep.subr.mxu0 0.0
        %1994 = vmatpush2.msra.mxu0 0.0
        %1995 = vmatprep.subr.mxu0 0.0
        %1996 = vmatpush2.msra.mxu0 0.0
        %1997 = vmatprep.subr.mxu0 0.0
        %1998 = vmatpush2.msra.mxu0 0.0
        %1999 = vmatprep.subr.mxu0 0.0
        %2000 = vmatpush2.msra.mxu0 0.0
        %2001 = vmatprep.mubr.f32.mxu0 0.0
        %2002 = vmatmul.mubr.f32.gmra.mxu0 %v1932
        %v2003 = vpop.f32.mrf.mxu0
        %v2004 = vadd.f32 0.0, %v2003
        %v2005 = vpop.f32.mrf.mxu0
        %v2006 = vadd.f32 0.0, %v2005
        %2007 = vmatprep.mubr.f32.mxu0 0.0
        %2008 = vmatmul.mubr.f32.gmra.mxu0 %v1935
        %v2009 = vpop.f32.mrf.mxu0
        %v2010 = vadd.f32 0.0, %v2009
        %v2011 = vpop.f32.mrf.mxu0
        %v2012 = vadd.f32 0.0, %v2011
        %2013 = vdwg.mxu0
        %s2014 = scalar_lea.vmem [#allocation17], 192
        %v2015 = vld [vmem:[%s2014] sm:$0xff]
        %v2016 = vld [vmem:[%s2014 + $0x8] sm:$0xff]
        %v2017 = vld [vmem:[%s2014 + $0x10] sm:$0xff]
        %v2018 = vld [vmem:[%s2014 + $0x18] sm:$0xff]
        %v2019 = vld [vmem:[%s2014 + $0x20] sm:$0xff]
        %v2020 = vld [vmem:[%s2014 + $0x28] sm:$0xff]
        %v2021 = vld [vmem:[%s2014 + $0x30] sm:$0xff]
        %v2022 = vld [vmem:[%s2014 + $0x38] sm:$0xff]
        %v2023 = vld [vmem:[%s2014 + $0x40] sm:$0xff]
        %v2024 = vld [vmem:[%s2014 + $0x48] sm:$0xff]
        %v2025 = vld [vmem:[%s2014 + $0x50] sm:$0xff]
        %v2026 = vld [vmem:[%s2014 + $0x58] sm:$0xff]
        %v2027 = vld [vmem:[%s2014 + $0x60] sm:$0xff]
        %v2028 = vld [vmem:[%s2014 + $0x68] sm:$0xff]
        %v2029 = vld [vmem:[%s2014 + $0x70] sm:$0xff]
        %v2030 = vld [vmem:[%s2014 + $0x78] sm:$0xff]
        %v2031 = vld [vmem:[%s2014 + $0x80] sm:$0xff]
        %v2032 = vld [vmem:[%s2014 + $0x88] sm:$0xff]
        %v2033 = vld [vmem:[%s2014 + $0x90] sm:$0xff]
        %v2034 = vld [vmem:[%s2014 + $0x98] sm:$0xff]
        %v2035 = vld [vmem:[%s2014 + $0xa0] sm:$0xff]
        %v2036 = vld [vmem:[%s2014 + $0xa8] sm:$0xff]
        %v2037 = vld [vmem:[%s2014 + $0xb0] sm:$0xff]
        %v2038 = vld [vmem:[%s2014 + $0xb8] sm:$0xff]
        %2039 = vmatprep.subr.mxu0 0.0
        %2040 = vmatpush1.msra.mxu0 0.0
        %2041 = vmatprep.subr.mxu0 0.0
        %2042 = vmatpush1.msra.mxu0 0.0
        %2043 = vmatprep.subr.mxu0 0.0
        %2044 = vmatpush1.msra.mxu0 0.0
        %2045 = vmatprep.subr.mxu0 0.0
        %2046 = vmatpush1.msra.mxu0 0.0
        %2047 = vmatprep.subr.mxu0 %v2038
        %2048 = vmatpush1.msra.mxu0 %v2037
        %2049 = vmatprep.subr.mxu0 %v2036
        %2050 = vmatpush1.msra.mxu0 %v2035
        %2051 = vmatprep.subr.mxu0 %v2034
        %2052 = vmatpush1.msra.mxu0 %v2033
        %2053 = vmatprep.subr.mxu0 %v2032
        %2054 = vmatpush1.msra.mxu0 %v2031
        %2055 = vmatprep.subr.mxu0 %v2030
        %2056 = vmatpush1.msra.mxu0 %v2029
        %2057 = vmatprep.subr.mxu0 %v2028
        %2058 = vmatpush1.msra.mxu0 %v2027
        %2059 = vmatprep.subr.mxu0 %v2026
        %2060 = vmatpush1.msra.mxu0 %v2025
        %2061 = vmatprep.subr.mxu0 %v2024
        %2062 = vmatpush1.msra.mxu0 %v2023
        %2063 = vmatprep.subr.mxu0 %v2022
        %2064 = vmatpush1.msra.mxu0 %v2021
        %2065 = vmatprep.subr.mxu0 %v2020
        %2066 = vmatpush1.msra.mxu0 %v2019
        %2067 = vmatprep.subr.mxu0 %v2018
        %2068 = vmatpush1.msra.mxu0 %v2017
        %2069 = vmatprep.subr.mxu0 %v2016
        %2070 = vmatpush1.msra.mxu0 %v2015
        %2071 = vmatprep.subr.mxu0 0.0
        %2072 = vmatpush2.msra.mxu0 0.0
        %2073 = vmatprep.subr.mxu0 0.0
        %2074 = vmatpush2.msra.mxu0 0.0
        %2075 = vmatprep.subr.mxu0 0.0
        %2076 = vmatpush2.msra.mxu0 0.0
        %2077 = vmatprep.subr.mxu0 0.0
        %2078 = vmatpush2.msra.mxu0 0.0
        %2079 = vmatprep.subr.mxu0 0.0
        %2080 = vmatpush2.msra.mxu0 0.0
        %2081 = vmatprep.subr.mxu0 0.0
        %2082 = vmatpush2.msra.mxu0 0.0
        %2083 = vmatprep.subr.mxu0 0.0
        %2084 = vmatpush2.msra.mxu0 0.0
        %2085 = vmatprep.subr.mxu0 0.0
        %2086 = vmatpush2.msra.mxu0 0.0
        %2087 = vmatprep.subr.mxu0 0.0
        %2088 = vmatpush2.msra.mxu0 0.0
        %2089 = vmatprep.subr.mxu0 0.0
        %2090 = vmatpush2.msra.mxu0 0.0
        %2091 = vmatprep.subr.mxu0 0.0
        %2092 = vmatpush2.msra.mxu0 0.0
        %2093 = vmatprep.subr.mxu0 0.0
        %2094 = vmatpush2.msra.mxu0 0.0
        %2095 = vmatprep.subr.mxu0 0.0
        %2096 = vmatpush2.msra.mxu0 0.0
        %2097 = vmatprep.subr.mxu0 0.0
        %2098 = vmatpush2.msra.mxu0 0.0
        %2099 = vmatprep.subr.mxu0 0.0
        %2100 = vmatpush2.msra.mxu0 0.0
        %2101 = vmatprep.subr.mxu0 0.0
        %2102 = vmatpush2.msra.mxu0 0.0
        %2103 = vmatprep.mubr.f32.mxu0 0.0
        %2104 = vmatmul.mubr.f32.gmra.mxu0 %v1932
        %v2105 = vpop.f32.mrf.mxu0
        %v2106 = vadd.f32 0.0, %v2105
        %v2107 = vpop.f32.mrf.mxu0
        %v2108 = vadd.f32 0.0, %v2107
        %2109 = vmatprep.mubr.f32.mxu0 0.0
        %2110 = vmatmul.mubr.f32.gmra.mxu0 %v1935
        %v2111 = vpop.f32.mrf.mxu0
        %v2112 = vadd.f32 0.0, %v2111
        %v2113 = vpop.f32.mrf.mxu0
        %v2114 = vadd.f32 0.0, %v2113
        %2115 = vdwg.mxu0
        %s2116 = scalar_lea.vmem [#allocation17], 384
        %v2117 = vld [vmem:[%s2116] sm:$0xff]
        %v2118 = vld [vmem:[%s2116 + $0x8] sm:$0xff]
        %v2119 = vld [vmem:[%s2116 + $0x10] sm:$0xff]
        %v2120 = vld [vmem:[%s2116 + $0x18] sm:$0xff]
        %v2121 = vld [vmem:[%s2116 + $0x20] sm:$0xff]
        %v2122 = vld [vmem:[%s2116 + $0x28] sm:$0xff]
        %v2123 = vld [vmem:[%s2116 + $0x30] sm:$0xff]
        %v2124 = vld [vmem:[%s2116 + $0x38] sm:$0xff]
        %v2125 = vld [vmem:[%s2116 + $0x40] sm:$0xff]
        %v2126 = vld [vmem:[%s2116 + $0x48] sm:$0xff]
        %v2127 = vld [vmem:[%s2116 + $0x50] sm:$0xff]
        %v2128 = vld [vmem:[%s2116 + $0x58] sm:$0xff]
        %v2129 = vld [vmem:[%s2116 + $0x60] sm:$0xff]
        %v2130 = vld [vmem:[%s2116 + $0x68] sm:$0xff]
        %v2131 = vld [vmem:[%s2116 + $0x70] sm:$0xff]
        %v2132 = vld [vmem:[%s2116 + $0x78] sm:$0xff]
        %v2133 = vld [vmem:[%s2116 + $0x80] sm:$0xff]
        %v2134 = vld [vmem:[%s2116 + $0x88] sm:$0xff]
        %v2135 = vld [vmem:[%s2116 + $0x90] sm:$0xff]
        %v2136 = vld [vmem:[%s2116 + $0x98] sm:$0xff]
        %v2137 = vld [vmem:[%s2116 + $0xa0] sm:$0xff]
        %v2138 = vld [vmem:[%s2116 + $0xa8] sm:$0xff]
        %v2139 = vld [vmem:[%s2116 + $0xb0] sm:$0xff]
        %v2140 = vld [vmem:[%s2116 + $0xb8] sm:$0xff]
        %2141 = vmatprep.subr.mxu0 0.0
        %2142 = vmatpush1.msra.mxu0 0.0
        %2143 = vmatprep.subr.mxu0 0.0
        %2144 = vmatpush1.msra.mxu0 0.0
        %2145 = vmatprep.subr.mxu0 0.0
        %2146 = vmatpush1.msra.mxu0 0.0
        %2147 = vmatprep.subr.mxu0 0.0
        %2148 = vmatpush1.msra.mxu0 0.0
        %2149 = vmatprep.subr.mxu0 %v2140
        %2150 = vmatpush1.msra.mxu0 %v2139
        %2151 = vmatprep.subr.mxu0 %v2138
        %2152 = vmatpush1.msra.mxu0 %v2137
        %2153 = vmatprep.subr.mxu0 %v2136
        %2154 = vmatpush1.msra.mxu0 %v2135
        %2155 = vmatprep.subr.mxu0 %v2134
        %2156 = vmatpush1.msra.mxu0 %v2133
        %2157 = vmatprep.subr.mxu0 %v2132
        %2158 = vmatpush1.msra.mxu0 %v2131
        %2159 = vmatprep.subr.mxu0 %v2130
        %2160 = vmatpush1.msra.mxu0 %v2129
        %2161 = vmatprep.subr.mxu0 %v2128
        %2162 = vmatpush1.msra.mxu0 %v2127
        %2163 = vmatprep.subr.mxu0 %v2126
        %2164 = vmatpush1.msra.mxu0 %v2125
        %2165 = vmatprep.subr.mxu0 %v2124
        %2166 = vmatpush1.msra.mxu0 %v2123
        %2167 = vmatprep.subr.mxu0 %v2122
        %2168 = vmatpush1.msra.mxu0 %v2121
        %2169 = vmatprep.subr.mxu0 %v2120
        %2170 = vmatpush1.msra.mxu0 %v2119
        %2171 = vmatprep.subr.mxu0 %v2118
        %2172 = vmatpush1.msra.mxu0 %v2117
        %2173 = vmatprep.subr.mxu0 0.0
        %2174 = vmatpush2.msra.mxu0 0.0
        %2175 = vmatprep.subr.mxu0 0.0
        %2176 = vmatpush2.msra.mxu0 0.0
        %2177 = vmatprep.subr.mxu0 0.0
        %2178 = vmatpush2.msra.mxu0 0.0
        %2179 = vmatprep.subr.mxu0 0.0
        %2180 = vmatpush2.msra.mxu0 0.0
        %2181 = vmatprep.subr.mxu0 0.0
        %2182 = vmatpush2.msra.mxu0 0.0
        %2183 = vmatprep.subr.mxu0 0.0
        %2184 = vmatpush2.msra.mxu0 0.0
        %2185 = vmatprep.subr.mxu0 0.0
        %2186 = vmatpush2.msra.mxu0 0.0
        %2187 = vmatprep.subr.mxu0 0.0
        %2188 = vmatpush2.msra.mxu0 0.0
        %2189 = vmatprep.subr.mxu0 0.0
        %2190 = vmatpush2.msra.mxu0 0.0
        %2191 = vmatprep.subr.mxu0 0.0
        %2192 = vmatpush2.msra.mxu0 0.0
        %2193 = vmatprep.subr.mxu0 0.0
        %2194 = vmatpush2.msra.mxu0 0.0
        %2195 = vmatprep.subr.mxu0 0.0
        %2196 = vmatpush2.msra.mxu0 0.0
        %2197 = vmatprep.subr.mxu0 0.0
        %2198 = vmatpush2.msra.mxu0 0.0
        %2199 = vmatprep.subr.mxu0 0.0
        %2200 = vmatpush2.msra.mxu0 0.0
        %2201 = vmatprep.subr.mxu0 0.0
        %2202 = vmatpush2.msra.mxu0 0.0
        %2203 = vmatprep.subr.mxu0 0.0
        %2204 = vmatpush2.msra.mxu0 0.0
        %2205 = vmatprep.mubr.f32.mxu0 0.0
        %2206 = vmatmul.mubr.f32.gmra.mxu0 %v1932
        %v2207 = vpop.f32.mrf.mxu0
        %v2208 = vadd.f32 0.0, %v2207
        %v2209 = vpop.f32.mrf.mxu0
        %v2210 = vadd.f32 0.0, %v2209
        %2211 = vmatprep.mubr.f32.mxu0 0.0
        %2212 = vmatmul.mubr.f32.gmra.mxu0 %v1935
        %v2213 = vpop.f32.mrf.mxu0
        %v2214 = vadd.f32 0.0, %v2213
        %v2215 = vpop.f32.mrf.mxu0
        %v2216 = vadd.f32 0.0, %v2215
        %2217 = vdwg.mxu0
        %v2218 = vld [vmem:[#allocation20] sm:$0xff]
        %v2219 = vld [vmem:[#allocation20 + $0x8] sm:$0xff]
        %vm2220 = vcmask 130048
        %v2222 = vsel %vm2220, %v2218, 0
        %v2225 = vsel %vm2220, %v2219, 0
        %2227 = vmatprep.subr.mxu0 0.0
        %2228 = vmatpush1.msra.mxu0 0.0
        %2229 = vmatprep.subr.mxu0 0.0
        %2230 = vmatpush1.msra.mxu0 0.0
        %2231 = vmatprep.subr.mxu0 0.0
        %2232 = vmatpush1.msra.mxu0 0.0
        %2233 = vmatprep.subr.mxu0 0.0
        %2234 = vmatpush1.msra.mxu0 0.0
        %2235 = vmatprep.subr.mxu0 0.0
        %2236 = vmatpush1.msra.mxu0 0.0
        %2237 = vmatprep.subr.mxu0 0.0
        %2238 = vmatpush1.msra.mxu0 0.0
        %2239 = vmatprep.subr.mxu0 0.0
        %2240 = vmatpush1.msra.mxu0 0.0
        %2241 = vmatprep.subr.mxu0 0.0
        %2242 = vmatpush1.msra.mxu0 0.0
        %2243 = vmatprep.subr.mxu0 0.0
        %2244 = vmatpush1.msra.mxu0 0.0
        %2245 = vmatprep.subr.mxu0 0.0
        %2246 = vmatpush1.msra.mxu0 0.0
        %2247 = vmatprep.subr.mxu0 0.0
        %2248 = vmatpush1.msra.mxu0 0.0
        %2249 = vmatprep.subr.mxu0 0.0
        %2250 = vmatpush1.msra.mxu0 0.0
        %2251 = vmatprep.subr.mxu0 0.0
        %2252 = vmatpush1.msra.mxu0 0.0
        %2253 = vmatprep.subr.mxu0 0.0
        %2254 = vmatpush1.msra.mxu0 0.0
        %2255 = vmatprep.subr.mxu0 %v2012
        %2256 = vmatpush1.msra.mxu0 %v2010
        %2257 = vmatprep.subr.mxu0 %v2006
        %2258 = vmatpush1.msra.mxu0 %v2004
        %2259 = vmatprep.subr.mxu0 0.0
        %2260 = vmatpush2.msra.mxu0 0.0
        %2261 = vmatprep.subr.mxu0 0.0
        %2262 = vmatpush2.msra.mxu0 0.0
        %2263 = vmatprep.subr.mxu0 0.0
        %2264 = vmatpush2.msra.mxu0 0.0
        %2265 = vmatprep.subr.mxu0 0.0
        %2266 = vmatpush2.msra.mxu0 0.0
        %2267 = vmatprep.subr.mxu0 0.0
        %2268 = vmatpush2.msra.mxu0 0.0
        %2269 = vmatprep.subr.mxu0 0.0
        %2270 = vmatpush2.msra.mxu0 0.0
        %2271 = vmatprep.subr.mxu0 0.0
        %2272 = vmatpush2.msra.mxu0 0.0
        %2273 = vmatprep.subr.mxu0 0.0
        %2274 = vmatpush2.msra.mxu0 0.0
        %2275 = vmatprep.subr.mxu0 0.0
        %2276 = vmatpush2.msra.mxu0 0.0
        %2277 = vmatprep.subr.mxu0 0.0
        %2278 = vmatpush2.msra.mxu0 0.0
        %2279 = vmatprep.subr.mxu0 0.0
        %2280 = vmatpush2.msra.mxu0 0.0
        %2281 = vmatprep.subr.mxu0 0.0
        %2282 = vmatpush2.msra.mxu0 0.0
        %2283 = vmatprep.subr.mxu0 0.0
        %2284 = vmatpush2.msra.mxu0 0.0
        %2285 = vmatprep.subr.mxu0 0.0
        %2286 = vmatpush2.msra.mxu0 0.0
        %2287 = vmatprep.subr.mxu0 0.0
        %2288 = vmatpush2.msra.mxu0 0.0
        %2289 = vmatprep.subr.mxu0 0.0
        %2290 = vmatpush2.msra.mxu0 0.0
        %2291 = vmatprep.mubr.f32.mxu0 0.0
        %2292 = vmatmul.mubr.f32.gmra.mxu0 %v2222
        %v2293 = vpop.f32.mrf.mxu0
        %v2294 = vadd.f32 %v2106, %v2293
        %v2295 = vpop.f32.mrf.mxu0
        %v2296 = vadd.f32 %v2108, %v2295
        %2297 = vmatprep.mubr.f32.mxu0 0.0
        %2298 = vmatmul.mubr.f32.gmra.mxu0 %v2225
        %v2299 = vpop.f32.mrf.mxu0
        %v2300 = vadd.f32 %v2112, %v2299
        %v2301 = vpop.f32.mrf.mxu0
        %v2302 = vadd.f32 %v2114, %v2301
        %2303 = vdwg.mxu0
        %v2304 = vld [vmem:[%s12] sm:$0xff]
        %v2305 = vld [vmem:[%s12 + $0x8] sm:$0xff]
        %v2307 = vsel %vm2220, %v2304, 0
        %v2310 = vsel %vm2220, %v2305, 0
        %2312 = vmatprep.subr.mxu0 0.0
        %2313 = vmatpush1.msra.mxu0 0.0
        %2314 = vmatprep.subr.mxu0 0.0
        %2315 = vmatpush1.msra.mxu0 0.0
        %2316 = vmatprep.subr.mxu0 0.0
        %2317 = vmatpush1.msra.mxu0 0.0
        %2318 = vmatprep.subr.mxu0 0.0
        %2319 = vmatpush1.msra.mxu0 0.0
        %2320 = vmatprep.subr.mxu0 0.0
        %2321 = vmatpush1.msra.mxu0 0.0
        %2322 = vmatprep.subr.mxu0 0.0
        %2323 = vmatpush1.msra.mxu0 0.0
        %2324 = vmatprep.subr.mxu0 0.0
        %2325 = vmatpush1.msra.mxu0 0.0
        %2326 = vmatprep.subr.mxu0 0.0
        %2327 = vmatpush1.msra.mxu0 0.0
        %2328 = vmatprep.subr.mxu0 0.0
        %2329 = vmatpush1.msra.mxu0 0.0
        %2330 = vmatprep.subr.mxu0 0.0
        %2331 = vmatpush1.msra.mxu0 0.0
        %2332 = vmatprep.subr.mxu0 0.0
        %2333 = vmatpush1.msra.mxu0 0.0
        %2334 = vmatprep.subr.mxu0 0.0
        %2335 = vmatpush1.msra.mxu0 0.0
        %2336 = vmatprep.subr.mxu0 0.0
        %2337 = vmatpush1.msra.mxu0 0.0
        %2338 = vmatprep.subr.mxu0 0.0
        %2339 = vmatpush1.msra.mxu0 0.0
        %2340 = vmatprep.subr.mxu0 %v2216
        %2341 = vmatpush1.msra.mxu0 %v2214
        %2342 = vmatprep.subr.mxu0 %v2210
        %2343 = vmatpush1.msra.mxu0 %v2208
        %2344 = vmatprep.subr.mxu0 0.0
        %2345 = vmatpush2.msra.mxu0 0.0
        %2346 = vmatprep.subr.mxu0 0.0
        %2347 = vmatpush2.msra.mxu0 0.0
        %2348 = vmatprep.subr.mxu0 0.0
        %2349 = vmatpush2.msra.mxu0 0.0
        %2350 = vmatprep.subr.mxu0 0.0
        %2351 = vmatpush2.msra.mxu0 0.0
        %2352 = vmatprep.subr.mxu0 0.0
        %2353 = vmatpush2.msra.mxu0 0.0
        %2354 = vmatprep.subr.mxu0 0.0
        %2355 = vmatpush2.msra.mxu0 0.0
        %2356 = vmatprep.subr.mxu0 0.0
        %2357 = vmatpush2.msra.mxu0 0.0
        %2358 = vmatprep.subr.mxu0 0.0
        %2359 = vmatpush2.msra.mxu0 0.0
        %2360 = vmatprep.subr.mxu0 0.0
        %2361 = vmatpush2.msra.mxu0 0.0
        %2362 = vmatprep.subr.mxu0 0.0
        %2363 = vmatpush2.msra.mxu0 0.0
        %2364 = vmatprep.subr.mxu0 0.0
        %2365 = vmatpush2.msra.mxu0 0.0
        %2366 = vmatprep.subr.mxu0 0.0
        %2367 = vmatpush2.msra.mxu0 0.0
        %2368 = vmatprep.subr.mxu0 0.0
        %2369 = vmatpush2.msra.mxu0 0.0
        %2370 = vmatprep.subr.mxu0 0.0
        %2371 = vmatpush2.msra.mxu0 0.0
        %2372 = vmatprep.subr.mxu0 0.0
        %2373 = vmatpush2.msra.mxu0 0.0
        %2374 = vmatprep.subr.mxu0 0.0
        %2375 = vmatpush2.msra.mxu0 0.0
        %2376 = vmatprep.mubr.f32.mxu0 0.0
        %2377 = vmatmul.mubr.f32.gmra.mxu0 %v2307
        %v2378 = vpop.f32.mrf.mxu0
        %v2379 = vadd.f32 0.0, %v2378
        %v2380 = vpop.f32.mrf.mxu0
        %v2381 = vadd.f32 0.0, %v2380
        %2382 = vmatprep.mubr.f32.mxu0 0.0
        %2383 = vmatmul.mubr.f32.gmra.mxu0 %v2310
        %v2384 = vpop.f32.mrf.mxu0
        %v2385 = vadd.f32 0.0, %v2384
        %v2386 = vpop.f32.mrf.mxu0
        %v2387 = vadd.f32 0.0, %v2386
        %2388 = vdwg.mxu0
        %v2389 = vadd.f32 %v2294, %v2379
        %v2390 = vadd.f32 %v2296, %v2381
        %v2391 = vadd.f32 %v2300, %v2385
        %v2392 = vadd.f32 %v2302, %v2387
        %v2393 = vld [vmem:[#allocation19] sm:$0x3]
        %v2395 = vlaneseq
        %v2396 = vshrl.u32 %v2395, 7
        %v2397 = vsub.s32 0, %v2396
        %v2398 = vrot.slane %v2393, %v2397
        %v2399 = vlaneseq
        %v2400 = vshrl.u32 %v2399, 7
        %v2401 = vsub.s32 1, %v2400
        %v2402 = vrot.slane %v2393, %v2401
        %v2405 = vadd.f32 %v2389, %v2398
        %v2406 = vadd.f32 %v2390, %v2402
        %v2407 = vadd.f32 %v2391, %v2398
        %v2408 = vadd.f32 %v2392, %v2402
        %v2409 = vmax.f32 %v2405, 0.0
        %v2410 = vmax.f32 %v2406, 0.0
        %v2411 = vmax.f32 %v2407, 0.0
        %v2412 = vmax.f32 %v2408, 0.0
        %v2413 = vld [vmem:[#allocation22] sm:$0xff]
        %v2415 = vsel %vm2220, %v2413, 0
        %2417 = vmatprep.subr.mxu0 0.0
        %2418 = vmatpush1.msra.mxu0 0.0
        %2419 = vmatprep.subr.mxu0 0.0
        %2420 = vmatpush1.msra.mxu0 0.0
        %2421 = vmatprep.subr.mxu0 0.0
        %2422 = vmatpush1.msra.mxu0 0.0
        %2423 = vmatprep.subr.mxu0 0.0
        %2424 = vmatpush1.msra.mxu0 0.0
        %2425 = vmatprep.subr.mxu0 0.0
        %2426 = vmatpush1.msra.mxu0 0.0
        %2427 = vmatprep.subr.mxu0 0.0
        %2428 = vmatpush1.msra.mxu0 0.0
        %2429 = vmatprep.subr.mxu0 0.0
        %2430 = vmatpush1.msra.mxu0 0.0
        %2431 = vmatprep.subr.mxu0 0.0
        %2432 = vmatpush1.msra.mxu0 0.0
        %2433 = vmatprep.subr.mxu0 0.0
        %2434 = vmatpush1.msra.mxu0 0.0
        %2435 = vmatprep.subr.mxu0 0.0
        %2436 = vmatpush1.msra.mxu0 0.0
        %2437 = vmatprep.subr.mxu0 0.0
        %2438 = vmatpush1.msra.mxu0 0.0
        %2439 = vmatprep.subr.mxu0 0.0
        %2440 = vmatpush1.msra.mxu0 0.0
        %2441 = vmatprep.subr.mxu0 0.0
        %2442 = vmatpush1.msra.mxu0 0.0
        %2443 = vmatprep.subr.mxu0 0.0
        %2444 = vmatpush1.msra.mxu0 0.0
        %2445 = vmatprep.subr.mxu0 %v2412
        %2446 = vmatpush1.msra.mxu0 %v2411
        %2447 = vmatprep.subr.mxu0 %v2410
        %2448 = vmatpush1.msra.mxu0 %v2409
        %2449 = vmatprep.subr.mxu0 0.0
        %2450 = vmatpush2.msra.mxu0 0.0
        %2451 = vmatprep.subr.mxu0 0.0
        %2452 = vmatpush2.msra.mxu0 0.0
        %2453 = vmatprep.subr.mxu0 0.0
        %2454 = vmatpush2.msra.mxu0 0.0
        %2455 = vmatprep.subr.mxu0 0.0
        %2456 = vmatpush2.msra.mxu0 0.0
        %2457 = vmatprep.subr.mxu0 0.0
        %2458 = vmatpush2.msra.mxu0 0.0
        %2459 = vmatprep.subr.mxu0 0.0
        %2460 = vmatpush2.msra.mxu0 0.0
        %2461 = vmatprep.subr.mxu0 0.0
        %2462 = vmatpush2.msra.mxu0 0.0
        %2463 = vmatprep.subr.mxu0 0.0
        %2464 = vmatpush2.msra.mxu0 0.0
        %2465 = vmatprep.subr.mxu0 0.0
        %2466 = vmatpush2.msra.mxu0 0.0
        %2467 = vmatprep.subr.mxu0 0.0
        %2468 = vmatpush2.msra.mxu0 0.0
        %2469 = vmatprep.subr.mxu0 0.0
        %2470 = vmatpush2.msra.mxu0 0.0
        %2471 = vmatprep.subr.mxu0 0.0
        %2472 = vmatpush2.msra.mxu0 0.0
        %2473 = vmatprep.subr.mxu0 0.0
        %2474 = vmatpush2.msra.mxu0 0.0
        %2475 = vmatprep.subr.mxu0 0.0
        %2476 = vmatpush2.msra.mxu0 0.0
        %2477 = vmatprep.subr.mxu0 0.0
        %2478 = vmatpush2.msra.mxu0 0.0
        %2479 = vmatprep.subr.mxu0 0.0
        %2480 = vmatpush2.msra.mxu0 0.0
        %2481 = vmatprep.mubr.f32.mxu0 0.0
        %2482 = vmatmul.mubr.f32.gmra.mxu0 %v2415
        %v2483 = vpop.f32.mrf.mxu0
        %v2484 = vadd.f32 0.0, %v2483
        %v2485 = vpop.f32.mrf.mxu0
        %v2486 = vadd.f32 0.0, %v2485
        %2487 = vdwg.mxu0
        %v2488 = vld [vmem:[%s14] sm:$0xff]
        %v2490 = vsel %vm2220, %v2488, 0
        %2492 = vmatprep.subr.mxu0 0.0
        %2493 = vmatpush1.msra.mxu0 0.0
        %2494 = vmatprep.subr.mxu0 0.0
        %2495 = vmatpush1.msra.mxu0 0.0
        %2496 = vmatprep.subr.mxu0 0.0
        %2497 = vmatpush1.msra.mxu0 0.0
        %2498 = vmatprep.subr.mxu0 0.0
        %2499 = vmatpush1.msra.mxu0 0.0
        %2500 = vmatprep.subr.mxu0 0.0
        %2501 = vmatpush1.msra.mxu0 0.0
        %2502 = vmatprep.subr.mxu0 0.0
        %2503 = vmatpush1.msra.mxu0 0.0
        %2504 = vmatprep.subr.mxu0 0.0
        %2505 = vmatpush1.msra.mxu0 0.0
        %2506 = vmatprep.subr.mxu0 0.0
        %2507 = vmatpush1.msra.mxu0 0.0
        %2508 = vmatprep.subr.mxu0 0.0
        %2509 = vmatpush1.msra.mxu0 0.0
        %2510 = vmatprep.subr.mxu0 0.0
        %2511 = vmatpush1.msra.mxu0 0.0
        %2512 = vmatprep.subr.mxu0 0.0
        %2513 = vmatpush1.msra.mxu0 0.0
        %2514 = vmatprep.subr.mxu0 0.0
        %2515 = vmatpush1.msra.mxu0 0.0
        %2516 = vmatprep.subr.mxu0 0.0
        %2517 = vmatpush1.msra.mxu0 0.0
        %2518 = vmatprep.subr.mxu0 0.0
        %2519 = vmatpush1.msra.mxu0 0.0
        %2520 = vmatprep.subr.mxu0 %v2412
        %2521 = vmatpush1.msra.mxu0 %v2411
        %2522 = vmatprep.subr.mxu0 %v2410
        %2523 = vmatpush1.msra.mxu0 %v2409
        %2524 = vmatprep.subr.mxu0 0.0
        %2525 = vmatpush2.msra.mxu0 0.0
        %2526 = vmatprep.subr.mxu0 0.0
        %2527 = vmatpush2.msra.mxu0 0.0
        %2528 = vmatprep.subr.mxu0 0.0
        %2529 = vmatpush2.msra.mxu0 0.0
        %2530 = vmatprep.subr.mxu0 0.0
        %2531 = vmatpush2.msra.mxu0 0.0
        %2532 = vmatprep.subr.mxu0 0.0
        %2533 = vmatpush2.msra.mxu0 0.0
        %2534 = vmatprep.subr.mxu0 0.0
        %2535 = vmatpush2.msra.mxu0 0.0
        %2536 = vmatprep.subr.mxu0 0.0
        %2537 = vmatpush2.msra.mxu0 0.0
        %2538 = vmatprep.subr.mxu0 0.0
        %2539 = vmatpush2.msra.mxu0 0.0
        %2540 = vmatprep.subr.mxu0 0.0
        %2541 = vmatpush2.msra.mxu0 0.0
        %2542 = vmatprep.subr.mxu0 0.0
        %2543 = vmatpush2.msra.mxu0 0.0
        %2544 = vmatprep.subr.mxu0 0.0
        %2545 = vmatpush2.msra.mxu0 0.0
        %2546 = vmatprep.subr.mxu0 0.0
        %2547 = vmatpush2.msra.mxu0 0.0
        %2548 = vmatprep.subr.mxu0 0.0
        %2549 = vmatpush2.msra.mxu0 0.0
        %2550 = vmatprep.subr.mxu0 0.0
        %2551 = vmatpush2.msra.mxu0 0.0
        %2552 = vmatprep.subr.mxu0 0.0
        %2553 = vmatpush2.msra.mxu0 0.0
        %2554 = vmatprep.subr.mxu0 0.0
        %2555 = vmatpush2.msra.mxu0 0.0
        %2556 = vmatprep.mubr.f32.mxu0 0.0
        %2557 = vmatmul.mubr.f32.gmra.mxu0 %v2490
        %v2558 = vpop.f32.mrf.mxu0
        %v2559 = vadd.f32 0.0, %v2558
        %v2560 = vpop.f32.mrf.mxu0
        %v2561 = vadd.f32 0.0, %v2560
        %2562 = vdwg.mxu0
        %v2563 = vmax.f32 %v2484, %v2559
        %v2564 = vmax.f32 %v2486, %v2561
        %v2565 = vld [vmem:[#allocation23] sm:$0xff]
        %v2566 = vld [vmem:[#allocation23 + $0x8] sm:$0xff]
        %v2567 = vld [vmem:[#allocation23 + $0x10] sm:$0xff]
        %v2568 = vld [vmem:[#allocation23 + $0x18] sm:$0xff]
        %v2569 = vld [vmem:[#allocation23 + $0x20] sm:$0xff]
        %v2570 = vld [vmem:[#allocation23 + $0x28] sm:$0xff]
        %v2571 = vld [vmem:[#allocation23 + $0x30] sm:$0xff]
        %v2572 = vld [vmem:[#allocation23 + $0x38] sm:$0xff]
        %v2573 = vld [vmem:[#allocation23 + $0x40] sm:$0xff]
        %v2574 = vld [vmem:[#allocation23 + $0x48] sm:$0xff]
        %v2575 = vld [vmem:[#allocation23 + $0x50] sm:$0xff]
        %v2576 = vld [vmem:[#allocation23 + $0x58] sm:$0xff]
        %v2577 = vld [vmem:[#allocation23 + $0x60] sm:$0xff]
        %v2578 = vld [vmem:[#allocation23 + $0x68] sm:$0xff]
        %v2579 = vld [vmem:[#allocation23 + $0x70] sm:$0xff]
        %v2580 = vld [vmem:[#allocation23 + $0x78] sm:$0xff]
        %v2581 = vld [vmem:[#allocation23 + $0x80] sm:$0xff]
        %v2582 = vld [vmem:[#allocation23 + $0x88] sm:$0xff]
        %v2583 = vld [vmem:[#allocation23 + $0x90] sm:$0xff]
        %v2584 = vld [vmem:[#allocation23 + $0x98] sm:$0xff]
        %v2585 = vld [vmem:[#allocation23 + $0xa0] sm:$0xff]
        %v2586 = vld [vmem:[#allocation23 + $0xa8] sm:$0xff]
        %v2587 = vld [vmem:[#allocation23 + $0xb0] sm:$0xff]
        %v2588 = vld [vmem:[#allocation23 + $0xb8] sm:$0xff]
        %v2589 = vld [vmem:[#allocation23 + $0xc0] sm:$0xff]
        %v2590 = vld [vmem:[#allocation23 + $0xc8] sm:$0xff]
        %v2591 = vld [vmem:[#allocation23 + $0xd0] sm:$0xff]
        %v2592 = vld [vmem:[#allocation23 + $0xd8] sm:$0xff]
        %v2593 = vld [vmem:[#allocation23 + $0xe0] sm:$0xff]
        %v2594 = vld [vmem:[#allocation23 + $0xe8] sm:$0xff]
        %v2595 = vld [vmem:[#allocation23 + $0xf0] sm:$0xff]
        %v2596 = vld [vmem:[#allocation23 + $0xf8] sm:$0xff]
        %2597 = vmatprep.subr.mxu0 0.0
        %2598 = vmatpush1.msra.mxu0 %v2580
        %2599 = vmatprep.subr.mxu0 0.0
        %2600 = vmatpush1.msra.mxu0 %v2579
        %2601 = vmatprep.subr.mxu0 0.0
        %2602 = vmatpush1.msra.mxu0 %v2578
        %2603 = vmatprep.subr.mxu0 0.0
        %2604 = vmatpush1.msra.mxu0 %v2577
        %2605 = vmatprep.subr.mxu0 0.0
        %2606 = vmatpush1.msra.mxu0 %v2576
        %2607 = vmatprep.subr.mxu0 0.0
        %2608 = vmatpush1.msra.mxu0 %v2575
        %2609 = vmatprep.subr.mxu0 0.0
        %2610 = vmatpush1.msra.mxu0 %v2574
        %2611 = vmatprep.subr.mxu0 0.0
        %2612 = vmatpush1.msra.mxu0 %v2573
        %2613 = vmatprep.subr.mxu0 0.0
        %2614 = vmatpush1.msra.mxu0 %v2572
        %2615 = vmatprep.subr.mxu0 0.0
        %2616 = vmatpush1.msra.mxu0 %v2571
        %2617 = vmatprep.subr.mxu0 0.0
        %2618 = vmatpush1.msra.mxu0 %v2570
        %2619 = vmatprep.subr.mxu0 0.0
        %2620 = vmatpush1.msra.mxu0 %v2569
        %2621 = vmatprep.subr.mxu0 0.0
        %2622 = vmatpush1.msra.mxu0 %v2568
        %2623 = vmatprep.subr.mxu0 0.0
        %2624 = vmatpush1.msra.mxu0 %v2567
        %2625 = vmatprep.subr.mxu0 0.0
        %2626 = vmatpush1.msra.mxu0 %v2566
        %2627 = vmatprep.subr.mxu0 0.0
        %2628 = vmatpush1.msra.mxu0 %v2565
        %2629 = vmatprep.subr.mxu0 0.0
        %2630 = vmatpush2.msra.mxu0 %v2596
        %2631 = vmatprep.subr.mxu0 0.0
        %2632 = vmatpush2.msra.mxu0 %v2595
        %2633 = vmatprep.subr.mxu0 0.0
        %2634 = vmatpush2.msra.mxu0 %v2594
        %2635 = vmatprep.subr.mxu0 0.0
        %2636 = vmatpush2.msra.mxu0 %v2593
        %2637 = vmatprep.subr.mxu0 0.0
        %2638 = vmatpush2.msra.mxu0 %v2592
        %2639 = vmatprep.subr.mxu0 0.0
        %2640 = vmatpush2.msra.mxu0 %v2591
        %2641 = vmatprep.subr.mxu0 0.0
        %2642 = vmatpush2.msra.mxu0 %v2590
        %2643 = vmatprep.subr.mxu0 0.0
        %2644 = vmatpush2.msra.mxu0 %v2589
        %2645 = vmatprep.subr.mxu0 0.0
        %2646 = vmatpush2.msra.mxu0 %v2588
        %2647 = vmatprep.subr.mxu0 0.0
        %2648 = vmatpush2.msra.mxu0 %v2587
        %2649 = vmatprep.subr.mxu0 0.0
        %2650 = vmatpush2.msra.mxu0 %v2586
        %2651 = vmatprep.subr.mxu0 0.0
        %2652 = vmatpush2.msra.mxu0 %v2585
        %2653 = vmatprep.subr.mxu0 0.0
        %2654 = vmatpush2.msra.mxu0 %v2584
        %2655 = vmatprep.subr.mxu0 0.0
        %2656 = vmatpush2.msra.mxu0 %v2583
        %2657 = vmatprep.subr.mxu0 0.0
        %2658 = vmatpush2.msra.mxu0 %v2582
        %2659 = vmatprep.subr.mxu0 0.0
        %2660 = vmatpush2.msra.mxu0 %v2581
        %2661 = vmatprep.mubr.f32.mxu0 %v2564
        %2662 = vmatmul.mubr.f32.gmra.mxu0 %v2563
        %v2663 = vpop.f32.mrf.mxu0
        %v2664 = vadd.f32 0.0, %v2663
        %v2665 = vpop.f32.mrf.mxu0
        %2666 = vdwg.mxu0
        %v2667 = vld [vmem:[#allocation25] sm:$0xff]
        %v2668 = vld [vmem:[#allocation25 + $0x8] sm:$0xff]
        %v2669 = vld [vmem:[#allocation25 + $0x10] sm:$0xff]
        %v2670 = vld [vmem:[#allocation25 + $0x18] sm:$0xff]
        %v2671 = vld [vmem:[#allocation25 + $0x20] sm:$0xff]
        %v2672 = vld [vmem:[#allocation25 + $0x28] sm:$0xff]
        %v2673 = vld [vmem:[#allocation25 + $0x30] sm:$0xff]
        %v2674 = vld [vmem:[#allocation25 + $0x38] sm:$0xff]
        %v2675 = vld [vmem:[#allocation25 + $0x40] sm:$0xff]
        %v2676 = vld [vmem:[#allocation25 + $0x48] sm:$0xff]
        %v2677 = vld [vmem:[#allocation25 + $0x50] sm:$0xff]
        %v2678 = vld [vmem:[#allocation25 + $0x58] sm:$0xff]
        %v2679 = vld [vmem:[#allocation25 + $0x60] sm:$0xff]
        %v2680 = vld [vmem:[#allocation25 + $0x68] sm:$0xff]
        %v2681 = vld [vmem:[#allocation25 + $0x70] sm:$0xff]
        %v2682 = vld [vmem:[#allocation25 + $0x78] sm:$0xff]
        %v2683 = vld [vmem:[#allocation25 + $0x80] sm:$0xff]
        %v2684 = vld [vmem:[#allocation25 + $0x88] sm:$0xff]
        %v2685 = vld [vmem:[#allocation25 + $0x90] sm:$0xff]
        %v2686 = vld [vmem:[#allocation25 + $0x98] sm:$0xff]
        %v2687 = vld [vmem:[#allocation25 + $0xa0] sm:$0xff]
        %v2688 = vld [vmem:[#allocation25 + $0xa8] sm:$0xff]
        %v2689 = vld [vmem:[#allocation25 + $0xb0] sm:$0xff]
        %v2690 = vld [vmem:[#allocation25 + $0xb8] sm:$0xff]
        %v2691 = vld [vmem:[#allocation25 + $0xc0] sm:$0xff]
        %v2692 = vld [vmem:[#allocation25 + $0xc8] sm:$0xff]
        %v2693 = vld [vmem:[#allocation25 + $0xd0] sm:$0xff]
        %v2694 = vld [vmem:[#allocation25 + $0xd8] sm:$0xff]
        %v2695 = vld [vmem:[#allocation25 + $0xe0] sm:$0xff]
        %v2696 = vld [vmem:[#allocation25 + $0xe8] sm:$0xff]
        %v2697 = vld [vmem:[#allocation25 + $0xf0] sm:$0xff]
        %v2698 = vld [vmem:[#allocation25 + $0xf8] sm:$0xff]
        %2699 = vmatprep.subr.mxu0 0.0
        %2700 = vmatpush1.msra.mxu0 %v2682
        %2701 = vmatprep.subr.mxu0 0.0
        %2702 = vmatpush1.msra.mxu0 %v2681
        %2703 = vmatprep.subr.mxu0 0.0
        %2704 = vmatpush1.msra.mxu0 %v2680
        %2705 = vmatprep.subr.mxu0 0.0
        %2706 = vmatpush1.msra.mxu0 %v2679
        %2707 = vmatprep.subr.mxu0 0.0
        %2708 = vmatpush1.msra.mxu0 %v2678
        %2709 = vmatprep.subr.mxu0 0.0
        %2710 = vmatpush1.msra.mxu0 %v2677
        %2711 = vmatprep.subr.mxu0 0.0
        %2712 = vmatpush1.msra.mxu0 %v2676
        %2713 = vmatprep.subr.mxu0 0.0
        %2714 = vmatpush1.msra.mxu0 %v2675
        %2715 = vmatprep.subr.mxu0 0.0
        %2716 = vmatpush1.msra.mxu0 %v2674
        %2717 = vmatprep.subr.mxu0 0.0
        %2718 = vmatpush1.msra.mxu0 %v2673
        %2719 = vmatprep.subr.mxu0 0.0
        %2720 = vmatpush1.msra.mxu0 %v2672
        %2721 = vmatprep.subr.mxu0 0.0
        %2722 = vmatpush1.msra.mxu0 %v2671
        %2723 = vmatprep.subr.mxu0 0.0
        %2724 = vmatpush1.msra.mxu0 %v2670
        %2725 = vmatprep.subr.mxu0 0.0
        %2726 = vmatpush1.msra.mxu0 %v2669
        %2727 = vmatprep.subr.mxu0 0.0
        %2728 = vmatpush1.msra.mxu0 %v2668
        %2729 = vmatprep.subr.mxu0 0.0
        %2730 = vmatpush1.msra.mxu0 %v2667
        %2731 = vmatprep.subr.mxu0 0.0
        %2732 = vmatpush2.msra.mxu0 %v2698
        %2733 = vmatprep.subr.mxu0 0.0
        %2734 = vmatpush2.msra.mxu0 %v2697
        %2735 = vmatprep.subr.mxu0 0.0
        %2736 = vmatpush2.msra.mxu0 %v2696
        %2737 = vmatprep.subr.mxu0 0.0
        %2738 = vmatpush2.msra.mxu0 %v2695
        %2739 = vmatprep.subr.mxu0 0.0
        %2740 = vmatpush2.msra.mxu0 %v2694
        %2741 = vmatprep.subr.mxu0 0.0
        %2742 = vmatpush2.msra.mxu0 %v2693
        %2743 = vmatprep.subr.mxu0 0.0
        %2744 = vmatpush2.msra.mxu0 %v2692
        %2745 = vmatprep.subr.mxu0 0.0
        %2746 = vmatpush2.msra.mxu0 %v2691
        %2747 = vmatprep.subr.mxu0 0.0
        %2748 = vmatpush2.msra.mxu0 %v2690
        %2749 = vmatprep.subr.mxu0 0.0
        %2750 = vmatpush2.msra.mxu0 %v2689
        %2751 = vmatprep.subr.mxu0 0.0
        %2752 = vmatpush2.msra.mxu0 %v2688
        %2753 = vmatprep.subr.mxu0 0.0
        %2754 = vmatpush2.msra.mxu0 %v2687
        %2755 = vmatprep.subr.mxu0 0.0
        %2756 = vmatpush2.msra.mxu0 %v2686
        %2757 = vmatprep.subr.mxu0 0.0
        %2758 = vmatpush2.msra.mxu0 %v2685
        %2759 = vmatprep.subr.mxu0 0.0
        %2760 = vmatpush2.msra.mxu0 %v2684
        %2761 = vmatprep.subr.mxu0 0.0
        %2762 = vmatpush2.msra.mxu0 %v2683
        %2763 = vmatprep.mubr.f32.mxu0 %v2564
        %2764 = vmatmul.mubr.f32.gmra.mxu0 %v2563
        %v2765 = vpop.f32.mrf.mxu0
        %v2766 = vadd.f32 0.0, %v2765
        %v2767 = vpop.f32.mrf.mxu0
        %2768 = vdwg.mxu0
        %v2769 = vmax.f32 %v2664, %v2766
        %v2770 = vld [vmem:[%s18] sm:$0x1]
        %v2771 = vld [vmem:[#allocation26] sm:$0xff]
        %v2772 = vld [vmem:[#allocation26 + $0x8] sm:$0xff]
        %v2773 = vld [vmem:[#allocation26 + $0x10] sm:$0xff]
        %v2774 = vld [vmem:[#allocation26 + $0x18] sm:$0xff]
        %v2775 = vld [vmem:[#allocation26 + $0x20] sm:$0xff]
        %v2776 = vld [vmem:[#allocation26 + $0x28] sm:$0xff]
        %v2777 = vld [vmem:[#allocation26 + $0x30] sm:$0xff]
        %v2778 = vld [vmem:[#allocation26 + $0x38] sm:$0xff]
        %v2779 = vld [vmem:[#allocation26 + $0x40] sm:$0xff]
        %v2780 = vld [vmem:[#allocation26 + $0x48] sm:$0xff]
        %v2781 = vld [vmem:[#allocation26 + $0x50] sm:$0xff]
        %v2782 = vld [vmem:[#allocation26 + $0x58] sm:$0xff]
        %v2783 = vld [vmem:[#allocation26 + $0x60] sm:$0xff]
        %v2784 = vld [vmem:[#allocation26 + $0x68] sm:$0xff]
        %v2785 = vld [vmem:[#allocation26 + $0x70] sm:$0xff]
        %v2786 = vld [vmem:[#allocation26 + $0x78] sm:$0xff]
        %2787 = vmatprep.subr.mxu0 0.0
        %2788 = vmatpush1.msra.mxu0 %v2786
        %2789 = vmatprep.subr.mxu0 0.0
        %2790 = vmatpush1.msra.mxu0 %v2785
        %2791 = vmatprep.subr.mxu0 0.0
        %2792 = vmatpush1.msra.mxu0 %v2784
        %2793 = vmatprep.subr.mxu0 0.0
        %2794 = vmatpush1.msra.mxu0 %v2783
        %2795 = vmatprep.subr.mxu0 0.0
        %2796 = vmatpush1.msra.mxu0 %v2782
        %2797 = vmatprep.subr.mxu0 0.0
        %2798 = vmatpush1.msra.mxu0 %v2781
        %2799 = vmatprep.subr.mxu0 0.0
        %2800 = vmatpush1.msra.mxu0 %v2780
        %2801 = vmatprep.subr.mxu0 0.0
        %2802 = vmatpush1.msra.mxu0 %v2779
        %2803 = vmatprep.subr.mxu0 0.0
        %2804 = vmatpush1.msra.mxu0 %v2778
        %2805 = vmatprep.subr.mxu0 0.0
        %2806 = vmatpush1.msra.mxu0 %v2777
        %2807 = vmatprep.subr.mxu0 0.0
        %2808 = vmatpush1.msra.mxu0 %v2776
        %2809 = vmatprep.subr.mxu0 0.0
        %2810 = vmatpush1.msra.mxu0 %v2775
        %2811 = vmatprep.subr.mxu0 0.0
        %2812 = vmatpush1.msra.mxu0 %v2774
        %2813 = vmatprep.subr.mxu0 0.0
        %2814 = vmatpush1.msra.mxu0 %v2773
        %2815 = vmatprep.subr.mxu0 0.0
        %2816 = vmatpush1.msra.mxu0 %v2772
        %2817 = vmatprep.subr.mxu0 0.0
        %2818 = vmatpush1.msra.mxu0 %v2771
        %2819 = vmatprep.subr.mxu0 0.0
        %2820 = vmatpush2.msra.mxu0 0.0
        %2821 = vmatprep.subr.mxu0 0.0
        %2822 = vmatpush2.msra.mxu0 0.0
        %2823 = vmatprep.subr.mxu0 0.0
        %2824 = vmatpush2.msra.mxu0 0.0
        %2825 = vmatprep.subr.mxu0 0.0
        %2826 = vmatpush2.msra.mxu0 0.0
        %2827 = vmatprep.subr.mxu0 0.0
        %2828 = vmatpush2.msra.mxu0 0.0
        %2829 = vmatprep.subr.mxu0 0.0
        %2830 = vmatpush2.msra.mxu0 0.0
        %2831 = vmatprep.subr.mxu0 0.0
        %2832 = vmatpush2.msra.mxu0 0.0
        %2833 = vmatprep.subr.mxu0 0.0
        %2834 = vmatpush2.msra.mxu0 0.0
        %2835 = vmatprep.subr.mxu0 0.0
        %2836 = vmatpush2.msra.mxu0 0.0
        %2837 = vmatprep.subr.mxu0 0.0
        %2838 = vmatpush2.msra.mxu0 0.0
        %2839 = vmatprep.subr.mxu0 0.0
        %2840 = vmatpush2.msra.mxu0 0.0
        %2841 = vmatprep.subr.mxu0 0.0
        %2842 = vmatpush2.msra.mxu0 0.0
        %2843 = vmatprep.subr.mxu0 0.0
        %2844 = vmatpush2.msra.mxu0 0.0
        %2845 = vmatprep.subr.mxu0 0.0
        %2846 = vmatpush2.msra.mxu0 0.0
        %2847 = vmatprep.subr.mxu0 0.0
        %2848 = vmatpush2.msra.mxu0 0.0
        %2849 = vmatprep.subr.mxu0 0.0
        %2850 = vmatpush2.msra.mxu0 0.0
        %2851 = vmatprep.mubr.f32.mxu0 0.0
        %2852 = vmatmul.mubr.f32.gmra.mxu0 %v2769
        %v2853 = vpop.f32.mrf.mxu0
        %v2854 = vadd.f32 0.0, %v2853
        %v2855 = vpop.f32.mrf.mxu0
        %2856 = vdwg.mxu0
        %v2857 = vadd.f32 %v2770, %v2854
        %s2858 = scalar_lea.vmem [#allocation26], 128
        %v2859 = vld [vmem:[%s2858] sm:$0xff]
        %v2860 = vld [vmem:[%s2858 + $0x8] sm:$0xff]
        %v2861 = vld [vmem:[%s2858 + $0x10] sm:$0xff]
        %v2862 = vld [vmem:[%s2858 + $0x18] sm:$0xff]
        %v2863 = vld [vmem:[%s2858 + $0x20] sm:$0xff]
        %v2864 = vld [vmem:[%s2858 + $0x28] sm:$0xff]
        %v2865 = vld [vmem:[%s2858 + $0x30] sm:$0xff]
        %v2866 = vld [vmem:[%s2858 + $0x38] sm:$0xff]
        %v2867 = vld [vmem:[%s2858 + $0x40] sm:$0xff]
        %v2868 = vld [vmem:[%s2858 + $0x48] sm:$0xff]
        %v2869 = vld [vmem:[%s2858 + $0x50] sm:$0xff]
        %v2870 = vld [vmem:[%s2858 + $0x58] sm:$0xff]
        %v2871 = vld [vmem:[%s2858 + $0x60] sm:$0xff]
        %v2872 = vld [vmem:[%s2858 + $0x68] sm:$0xff]
        %v2873 = vld [vmem:[%s2858 + $0x70] sm:$0xff]
        %v2874 = vld [vmem:[%s2858 + $0x78] sm:$0xff]
        %v2876 = vrot.slane %v2769, 1
        %2878 = vmatprep.subr.mxu0 0.0
        %2879 = vmatpush1.msra.mxu0 %v2874
        %2880 = vmatprep.subr.mxu0 0.0
        %2881 = vmatpush1.msra.mxu0 %v2873
        %2882 = vmatprep.subr.mxu0 0.0
        %2883 = vmatpush1.msra.mxu0 %v2872
        %2884 = vmatprep.subr.mxu0 0.0
        %2885 = vmatpush1.msra.mxu0 %v2871
        %2886 = vmatprep.subr.mxu0 0.0
        %2887 = vmatpush1.msra.mxu0 %v2870
        %2888 = vmatprep.subr.mxu0 0.0
        %2889 = vmatpush1.msra.mxu0 %v2869
        %2890 = vmatprep.subr.mxu0 0.0
        %2891 = vmatpush1.msra.mxu0 %v2868
        %2892 = vmatprep.subr.mxu0 0.0
        %2893 = vmatpush1.msra.mxu0 %v2867
        %2894 = vmatprep.subr.mxu0 0.0
        %2895 = vmatpush1.msra.mxu0 %v2866
        %2896 = vmatprep.subr.mxu0 0.0
        %2897 = vmatpush1.msra.mxu0 %v2865
        %2898 = vmatprep.subr.mxu0 0.0
        %2899 = vmatpush1.msra.mxu0 %v2864
        %2900 = vmatprep.subr.mxu0 0.0
        %2901 = vmatpush1.msra.mxu0 %v2863
        %2902 = vmatprep.subr.mxu0 0.0
        %2903 = vmatpush1.msra.mxu0 %v2862
        %2904 = vmatprep.subr.mxu0 0.0
        %2905 = vmatpush1.msra.mxu0 %v2861
        %2906 = vmatprep.subr.mxu0 0.0
        %2907 = vmatpush1.msra.mxu0 %v2860
        %2908 = vmatprep.subr.mxu0 0.0
        %2909 = vmatpush1.msra.mxu0 %v2859
        %2910 = vmatprep.subr.mxu0 0.0
        %2911 = vmatpush2.msra.mxu0 0.0
        %2912 = vmatprep.subr.mxu0 0.0
        %2913 = vmatpush2.msra.mxu0 0.0
        %2914 = vmatprep.subr.mxu0 0.0
        %2915 = vmatpush2.msra.mxu0 0.0
        %2916 = vmatprep.subr.mxu0 0.0
        %2917 = vmatpush2.msra.mxu0 0.0
        %2918 = vmatprep.subr.mxu0 0.0
        %2919 = vmatpush2.msra.mxu0 0.0
        %2920 = vmatprep.subr.mxu0 0.0
        %2921 = vmatpush2.msra.mxu0 0.0
        %2922 = vmatprep.subr.mxu0 0.0
        %2923 = vmatpush2.msra.mxu0 0.0
        %2924 = vmatprep.subr.mxu0 0.0
        %2925 = vmatpush2.msra.mxu0 0.0
        %2926 = vmatprep.subr.mxu0 0.0
        %2927 = vmatpush2.msra.mxu0 0.0
        %2928 = vmatprep.subr.mxu0 0.0
        %2929 = vmatpush2.msra.mxu0 0.0
        %2930 = vmatprep.subr.mxu0 0.0
        %2931 = vmatpush2.msra.mxu0 0.0
        %2932 = vmatprep.subr.mxu0 0.0
        %2933 = vmatpush2.msra.mxu0 0.0
        %2934 = vmatprep.subr.mxu0 0.0
        %2935 = vmatpush2.msra.mxu0 0.0
        %2936 = vmatprep.subr.mxu0 0.0
        %2937 = vmatpush2.msra.mxu0 0.0
        %2938 = vmatprep.subr.mxu0 0.0
        %2939 = vmatpush2.msra.mxu0 0.0
        %2940 = vmatprep.subr.mxu0 0.0
        %2941 = vmatpush2.msra.mxu0 0.0
        %2942 = vmatprep.mubr.f32.mxu0 0.0
        %2943 = vmatmul.mubr.f32.gmra.mxu0 %v2876
        %v2944 = vpop.f32.mrf.mxu0
        %v2945 = vadd.f32 0.0, %v2944
        %v2946 = vpop.f32.mrf.mxu0
        %2947 = vdwg.mxu0
        %v2948 = vadd.f32 %v2857, %v2945
        %s2949 = scalar_lea.vmem [#allocation26], 256
        %v2950 = vld [vmem:[%s2949] sm:$0xff]
        %v2951 = vld [vmem:[%s2949 + $0x8] sm:$0xff]
        %v2952 = vld [vmem:[%s2949 + $0x10] sm:$0xff]
        %v2953 = vld [vmem:[%s2949 + $0x18] sm:$0xff]
        %v2954 = vld [vmem:[%s2949 + $0x20] sm:$0xff]
        %v2955 = vld [vmem:[%s2949 + $0x28] sm:$0xff]
        %v2956 = vld [vmem:[%s2949 + $0x30] sm:$0xff]
        %v2957 = vld [vmem:[%s2949 + $0x38] sm:$0xff]
        %v2958 = vld [vmem:[%s2949 + $0x40] sm:$0xff]
        %v2959 = vld [vmem:[%s2949 + $0x48] sm:$0xff]
        %v2960 = vld [vmem:[%s2949 + $0x50] sm:$0xff]
        %v2961 = vld [vmem:[%s2949 + $0x58] sm:$0xff]
        %v2962 = vld [vmem:[%s2949 + $0x60] sm:$0xff]
        %v2963 = vld [vmem:[%s2949 + $0x68] sm:$0xff]
        %v2964 = vld [vmem:[%s2949 + $0x70] sm:$0xff]
        %v2965 = vld [vmem:[%s2949 + $0x78] sm:$0xff]
        %v2966 = vrot.slane %v2769, 2
        %2968 = vmatprep.subr.mxu0 0.0
        %2969 = vmatpush1.msra.mxu0 %v2965
        %2970 = vmatprep.subr.mxu0 0.0
        %2971 = vmatpush1.msra.mxu0 %v2964
        %2972 = vmatprep.subr.mxu0 0.0
        %2973 = vmatpush1.msra.mxu0 %v2963
        %2974 = vmatprep.subr.mxu0 0.0
        %2975 = vmatpush1.msra.mxu0 %v2962
        %2976 = vmatprep.subr.mxu0 0.0
        %2977 = vmatpush1.msra.mxu0 %v2961
        %2978 = vmatprep.subr.mxu0 0.0
        %2979 = vmatpush1.msra.mxu0 %v2960
        %2980 = vmatprep.subr.mxu0 0.0
        %2981 = vmatpush1.msra.mxu0 %v2959
        %2982 = vmatprep.subr.mxu0 0.0
        %2983 = vmatpush1.msra.mxu0 %v2958
        %2984 = vmatprep.subr.mxu0 0.0
        %2985 = vmatpush1.msra.mxu0 %v2957
        %2986 = vmatprep.subr.mxu0 0.0
        %2987 = vmatpush1.msra.mxu0 %v2956
        %2988 = vmatprep.subr.mxu0 0.0
        %2989 = vmatpush1.msra.mxu0 %v2955
        %2990 = vmatprep.subr.mxu0 0.0
        %2991 = vmatpush1.msra.mxu0 %v2954
        %2992 = vmatprep.subr.mxu0 0.0
        %2993 = vmatpush1.msra.mxu0 %v2953
        %2994 = vmatprep.subr.mxu0 0.0
        %2995 = vmatpush1.msra.mxu0 %v2952
        %2996 = vmatprep.subr.mxu0 0.0
        %2997 = vmatpush1.msra.mxu0 %v2951
        %2998 = vmatprep.subr.mxu0 0.0
        %2999 = vmatpush1.msra.mxu0 %v2950
        %3000 = vmatprep.subr.mxu0 0.0
        %3001 = vmatpush2.msra.mxu0 0.0
        %3002 = vmatprep.subr.mxu0 0.0
        %3003 = vmatpush2.msra.mxu0 0.0
        %3004 = vmatprep.subr.mxu0 0.0
        %3005 = vmatpush2.msra.mxu0 0.0
        %3006 = vmatprep.subr.mxu0 0.0
        %3007 = vmatpush2.msra.mxu0 0.0
        %3008 = vmatprep.subr.mxu0 0.0
        %3009 = vmatpush2.msra.mxu0 0.0
        %3010 = vmatprep.subr.mxu0 0.0
        %3011 = vmatpush2.msra.mxu0 0.0
        %3012 = vmatprep.subr.mxu0 0.0
        %3013 = vmatpush2.msra.mxu0 0.0
        %3014 = vmatprep.subr.mxu0 0.0
        %3015 = vmatpush2.msra.mxu0 0.0
        %3016 = vmatprep.subr.mxu0 0.0
        %3017 = vmatpush2.msra.mxu0 0.0
        %3018 = vmatprep.subr.mxu0 0.0
        %3019 = vmatpush2.msra.mxu0 0.0
        %3020 = vmatprep.subr.mxu0 0.0
        %3021 = vmatpush2.msra.mxu0 0.0
        %3022 = vmatprep.subr.mxu0 0.0
        %3023 = vmatpush2.msra.mxu0 0.0
        %3024 = vmatprep.subr.mxu0 0.0
        %3025 = vmatpush2.msra.mxu0 0.0
        %3026 = vmatprep.subr.mxu0 0.0
        %3027 = vmatpush2.msra.mxu0 0.0
        %3028 = vmatprep.subr.mxu0 0.0
        %3029 = vmatpush2.msra.mxu0 0.0
        %3030 = vmatprep.subr.mxu0 0.0
        %3031 = vmatpush2.msra.mxu0 0.0
        %3032 = vmatprep.mubr.f32.mxu0 0.0
        %3033 = vmatmul.mubr.f32.gmra.mxu0 %v2966
        %v3034 = vpop.f32.mrf.mxu0
        %v3035 = vadd.f32 0.0, %v3034
        %v3036 = vpop.f32.mrf.mxu0
        %3037 = vdwg.mxu0
        %v3038 = vadd.f32 %v2948, %v3035
        %s3039 = scalar_lea.vmem [#allocation26], 384
        %v3040 = vld [vmem:[%s3039] sm:$0xff]
        %v3041 = vld [vmem:[%s3039 + $0x8] sm:$0xff]
        %v3042 = vld [vmem:[%s3039 + $0x10] sm:$0xff]
        %v3043 = vld [vmem:[%s3039 + $0x18] sm:$0xff]
        %v3044 = vld [vmem:[%s3039 + $0x20] sm:$0xff]
        %v3045 = vld [vmem:[%s3039 + $0x28] sm:$0xff]
        %v3046 = vld [vmem:[%s3039 + $0x30] sm:$0xff]
        %v3047 = vld [vmem:[%s3039 + $0x38] sm:$0xff]
        %v3048 = vld [vmem:[%s3039 + $0x40] sm:$0xff]
        %v3049 = vld [vmem:[%s3039 + $0x48] sm:$0xff]
        %v3050 = vld [vmem:[%s3039 + $0x50] sm:$0xff]
        %v3051 = vld [vmem:[%s3039 + $0x58] sm:$0xff]
        %v3052 = vld [vmem:[%s3039 + $0x60] sm:$0xff]
        %v3053 = vld [vmem:[%s3039 + $0x68] sm:$0xff]
        %v3054 = vld [vmem:[%s3039 + $0x70] sm:$0xff]
        %v3055 = vld [vmem:[%s3039 + $0x78] sm:$0xff]
        %v3056 = vrot.slane %v2769, 3
        %3058 = vmatprep.subr.mxu0 0.0
        %3059 = vmatpush1.msra.mxu0 %v3055
        %3060 = vmatprep.subr.mxu0 0.0
        %3061 = vmatpush1.msra.mxu0 %v3054
        %3062 = vmatprep.subr.mxu0 0.0
        %3063 = vmatpush1.msra.mxu0 %v3053
        %3064 = vmatprep.subr.mxu0 0.0
        %3065 = vmatpush1.msra.mxu0 %v3052
        %3066 = vmatprep.subr.mxu0 0.0
        %3067 = vmatpush1.msra.mxu0 %v3051
        %3068 = vmatprep.subr.mxu0 0.0
        %3069 = vmatpush1.msra.mxu0 %v3050
        %3070 = vmatprep.subr.mxu0 0.0
        %3071 = vmatpush1.msra.mxu0 %v3049
        %3072 = vmatprep.subr.mxu0 0.0
        %3073 = vmatpush1.msra.mxu0 %v3048
        %3074 = vmatprep.subr.mxu0 0.0
        %3075 = vmatpush1.msra.mxu0 %v3047
        %3076 = vmatprep.subr.mxu0 0.0
        %3077 = vmatpush1.msra.mxu0 %v3046
        %3078 = vmatprep.subr.mxu0 0.0
        %3079 = vmatpush1.msra.mxu0 %v3045
        %3080 = vmatprep.subr.mxu0 0.0
        %3081 = vmatpush1.msra.mxu0 %v3044
        %3082 = vmatprep.subr.mxu0 0.0
        %3083 = vmatpush1.msra.mxu0 %v3043
        %3084 = vmatprep.subr.mxu0 0.0
        %3085 = vmatpush1.msra.mxu0 %v3042
        %3086 = vmatprep.subr.mxu0 0.0
        %3087 = vmatpush1.msra.mxu0 %v3041
        %3088 = vmatprep.subr.mxu0 0.0
        %3089 = vmatpush1.msra.mxu0 %v3040
        %3090 = vmatprep.subr.mxu0 0.0
        %3091 = vmatpush2.msra.mxu0 0.0
        %3092 = vmatprep.subr.mxu0 0.0
        %3093 = vmatpush2.msra.mxu0 0.0
        %3094 = vmatprep.subr.mxu0 0.0
        %3095 = vmatpush2.msra.mxu0 0.0
        %3096 = vmatprep.subr.mxu0 0.0
        %3097 = vmatpush2.msra.mxu0 0.0
        %3098 = vmatprep.subr.mxu0 0.0
        %3099 = vmatpush2.msra.mxu0 0.0
        %3100 = vmatprep.subr.mxu0 0.0
        %3101 = vmatpush2.msra.mxu0 0.0
        %3102 = vmatprep.subr.mxu0 0.0
        %3103 = vmatpush2.msra.mxu0 0.0
        %3104 = vmatprep.subr.mxu0 0.0
        %3105 = vmatpush2.msra.mxu0 0.0
        %3106 = vmatprep.subr.mxu0 0.0
        %3107 = vmatpush2.msra.mxu0 0.0
        %3108 = vmatprep.subr.mxu0 0.0
        %3109 = vmatpush2.msra.mxu0 0.0
        %3110 = vmatprep.subr.mxu0 0.0
        %3111 = vmatpush2.msra.mxu0 0.0
        %3112 = vmatprep.subr.mxu0 0.0
        %3113 = vmatpush2.msra.mxu0 0.0
        %3114 = vmatprep.subr.mxu0 0.0
        %3115 = vmatpush2.msra.mxu0 0.0
        %3116 = vmatprep.subr.mxu0 0.0
        %3117 = vmatpush2.msra.mxu0 0.0
        %3118 = vmatprep.subr.mxu0 0.0
        %3119 = vmatpush2.msra.mxu0 0.0
        %3120 = vmatprep.subr.mxu0 0.0
        %3121 = vmatpush2.msra.mxu0 0.0
        %3122 = vmatprep.mubr.f32.mxu0 0.0
        %3123 = vmatmul.mubr.f32.gmra.mxu0 %v3056
        %v3124 = vpop.f32.mrf.mxu0
        %v3125 = vadd.f32 0.0, %v3124
        %v3126 = vpop.f32.mrf.mxu0
        %3127 = vdwg.mxu0
        %v3128 = vadd.f32 %v3038, %v3125
        %s3129 = scalar_lea.vmem [#allocation26], 512
        %v3130 = vld [vmem:[%s3129] sm:$0xff]
        %v3131 = vld [vmem:[%s3129 + $0x8] sm:$0xff]
        %v3132 = vld [vmem:[%s3129 + $0x10] sm:$0xff]
        %v3133 = vld [vmem:[%s3129 + $0x18] sm:$0xff]
        %v3134 = vld [vmem:[%s3129 + $0x20] sm:$0xff]
        %v3135 = vld [vmem:[%s3129 + $0x28] sm:$0xff]
        %v3136 = vld [vmem:[%s3129 + $0x30] sm:$0xff]
        %v3137 = vld [vmem:[%s3129 + $0x38] sm:$0xff]
        %v3138 = vld [vmem:[%s3129 + $0x40] sm:$0xff]
        %v3139 = vld [vmem:[%s3129 + $0x48] sm:$0xff]
        %v3140 = vld [vmem:[%s3129 + $0x50] sm:$0xff]
        %v3141 = vld [vmem:[%s3129 + $0x58] sm:$0xff]
        %v3142 = vld [vmem:[%s3129 + $0x60] sm:$0xff]
        %v3143 = vld [vmem:[%s3129 + $0x68] sm:$0xff]
        %v3144 = vld [vmem:[%s3129 + $0x70] sm:$0xff]
        %v3145 = vld [vmem:[%s3129 + $0x78] sm:$0xff]
        %v3146 = vrot.slane %v2769, 4
        %3148 = vmatprep.subr.mxu0 0.0
        %3149 = vmatpush1.msra.mxu0 %v3145
        %3150 = vmatprep.subr.mxu0 0.0
        %3151 = vmatpush1.msra.mxu0 %v3144
        %3152 = vmatprep.subr.mxu0 0.0
        %3153 = vmatpush1.msra.mxu0 %v3143
        %3154 = vmatprep.subr.mxu0 0.0
        %3155 = vmatpush1.msra.mxu0 %v3142
        %3156 = vmatprep.subr.mxu0 0.0
        %3157 = vmatpush1.msra.mxu0 %v3141
        %3158 = vmatprep.subr.mxu0 0.0
        %3159 = vmatpush1.msra.mxu0 %v3140
        %3160 = vmatprep.subr.mxu0 0.0
        %3161 = vmatpush1.msra.mxu0 %v3139
        %3162 = vmatprep.subr.mxu0 0.0
        %3163 = vmatpush1.msra.mxu0 %v3138
        %3164 = vmatprep.subr.mxu0 0.0
        %3165 = vmatpush1.msra.mxu0 %v3137
        %3166 = vmatprep.subr.mxu0 0.0
        %3167 = vmatpush1.msra.mxu0 %v3136
        %3168 = vmatprep.subr.mxu0 0.0
        %3169 = vmatpush1.msra.mxu0 %v3135
        %3170 = vmatprep.subr.mxu0 0.0
        %3171 = vmatpush1.msra.mxu0 %v3134
        %3172 = vmatprep.subr.mxu0 0.0
        %3173 = vmatpush1.msra.mxu0 %v3133
        %3174 = vmatprep.subr.mxu0 0.0
        %3175 = vmatpush1.msra.mxu0 %v3132
        %3176 = vmatprep.subr.mxu0 0.0
        %3177 = vmatpush1.msra.mxu0 %v3131
        %3178 = vmatprep.subr.mxu0 0.0
        %3179 = vmatpush1.msra.mxu0 %v3130
        %3180 = vmatprep.subr.mxu0 0.0
        %3181 = vmatpush2.msra.mxu0 0.0
        %3182 = vmatprep.subr.mxu0 0.0
        %3183 = vmatpush2.msra.mxu0 0.0
        %3184 = vmatprep.subr.mxu0 0.0
        %3185 = vmatpush2.msra.mxu0 0.0
        %3186 = vmatprep.subr.mxu0 0.0
        %3187 = vmatpush2.msra.mxu0 0.0
        %3188 = vmatprep.subr.mxu0 0.0
        %3189 = vmatpush2.msra.mxu0 0.0
        %3190 = vmatprep.subr.mxu0 0.0
        %3191 = vmatpush2.msra.mxu0 0.0
        %3192 = vmatprep.subr.mxu0 0.0
        %3193 = vmatpush2.msra.mxu0 0.0
        %3194 = vmatprep.subr.mxu0 0.0
        %3195 = vmatpush2.msra.mxu0 0.0
        %3196 = vmatprep.subr.mxu0 0.0
        %3197 = vmatpush2.msra.mxu0 0.0
        %3198 = vmatprep.subr.mxu0 0.0
        %3199 = vmatpush2.msra.mxu0 0.0
        %3200 = vmatprep.subr.mxu0 0.0
        %3201 = vmatpush2.msra.mxu0 0.0
        %3202 = vmatprep.subr.mxu0 0.0
        %3203 = vmatpush2.msra.mxu0 0.0
        %3204 = vmatprep.subr.mxu0 0.0
        %3205 = vmatpush2.msra.mxu0 0.0
        %3206 = vmatprep.subr.mxu0 0.0
        %3207 = vmatpush2.msra.mxu0 0.0
        %3208 = vmatprep.subr.mxu0 0.0
        %3209 = vmatpush2.msra.mxu0 0.0
        %3210 = vmatprep.subr.mxu0 0.0
        %3211 = vmatpush2.msra.mxu0 0.0
        %3212 = vmatprep.mubr.f32.mxu0 0.0
        %3213 = vmatmul.mubr.f32.gmra.mxu0 %v3146
        %v3214 = vpop.f32.mrf.mxu0
        %v3215 = vadd.f32 0.0, %v3214
        %v3216 = vpop.f32.mrf.mxu0
        %3217 = vdwg.mxu0
        %v3218 = vadd.f32 %v3128, %v3215
        %s3219 = scalar_lea.vmem [#allocation26], 640
        %v3220 = vld [vmem:[%s3219] sm:$0xff]
        %v3221 = vld [vmem:[%s3219 + $0x8] sm:$0xff]
        %v3222 = vld [vmem:[%s3219 + $0x10] sm:$0xff]
        %v3223 = vld [vmem:[%s3219 + $0x18] sm:$0xff]
        %v3224 = vld [vmem:[%s3219 + $0x20] sm:$0xff]
        %v3225 = vld [vmem:[%s3219 + $0x28] sm:$0xff]
        %v3226 = vld [vmem:[%s3219 + $0x30] sm:$0xff]
        %v3227 = vld [vmem:[%s3219 + $0x38] sm:$0xff]
        %v3228 = vld [vmem:[%s3219 + $0x40] sm:$0xff]
        %v3229 = vld [vmem:[%s3219 + $0x48] sm:$0xff]
        %v3230 = vld [vmem:[%s3219 + $0x50] sm:$0xff]
        %v3231 = vld [vmem:[%s3219 + $0x58] sm:$0xff]
        %v3232 = vld [vmem:[%s3219 + $0x60] sm:$0xff]
        %v3233 = vld [vmem:[%s3219 + $0x68] sm:$0xff]
        %v3234 = vld [vmem:[%s3219 + $0x70] sm:$0xff]
        %v3235 = vld [vmem:[%s3219 + $0x78] sm:$0xff]
        %v3236 = vrot.slane %v2769, 5
        %3238 = vmatprep.subr.mxu0 0.0
        %3239 = vmatpush1.msra.mxu0 %v3235
        %3240 = vmatprep.subr.mxu0 0.0
        %3241 = vmatpush1.msra.mxu0 %v3234
        %3242 = vmatprep.subr.mxu0 0.0
        %3243 = vmatpush1.msra.mxu0 %v3233
        %3244 = vmatprep.subr.mxu0 0.0
        %3245 = vmatpush1.msra.mxu0 %v3232
        %3246 = vmatprep.subr.mxu0 0.0
        %3247 = vmatpush1.msra.mxu0 %v3231
        %3248 = vmatprep.subr.mxu0 0.0
        %3249 = vmatpush1.msra.mxu0 %v3230
        %3250 = vmatprep.subr.mxu0 0.0
        %3251 = vmatpush1.msra.mxu0 %v3229
        %3252 = vmatprep.subr.mxu0 0.0
        %3253 = vmatpush1.msra.mxu0 %v3228
        %3254 = vmatprep.subr.mxu0 0.0
        %3255 = vmatpush1.msra.mxu0 %v3227
        %3256 = vmatprep.subr.mxu0 0.0
        %3257 = vmatpush1.msra.mxu0 %v3226
        %3258 = vmatprep.subr.mxu0 0.0
        %3259 = vmatpush1.msra.mxu0 %v3225
        %3260 = vmatprep.subr.mxu0 0.0
        %3261 = vmatpush1.msra.mxu0 %v3224
        %3262 = vmatprep.subr.mxu0 0.0
        %3263 = vmatpush1.msra.mxu0 %v3223
        %3264 = vmatprep.subr.mxu0 0.0
        %3265 = vmatpush1.msra.mxu0 %v3222
        %3266 = vmatprep.subr.mxu0 0.0
        %3267 = vmatpush1.msra.mxu0 %v3221
        %3268 = vmatprep.subr.mxu0 0.0
        %3269 = vmatpush1.msra.mxu0 %v3220
        %3270 = vmatprep.subr.mxu0 0.0
        %3271 = vmatpush2.msra.mxu0 0.0
        %3272 = vmatprep.subr.mxu0 0.0
        %3273 = vmatpush2.msra.mxu0 0.0
        %3274 = vmatprep.subr.mxu0 0.0
        %3275 = vmatpush2.msra.mxu0 0.0
        %3276 = vmatprep.subr.mxu0 0.0
        %3277 = vmatpush2.msra.mxu0 0.0
        %3278 = vmatprep.subr.mxu0 0.0
        %3279 = vmatpush2.msra.mxu0 0.0
        %3280 = vmatprep.subr.mxu0 0.0
        %3281 = vmatpush2.msra.mxu0 0.0
        %3282 = vmatprep.subr.mxu0 0.0
        %3283 = vmatpush2.msra.mxu0 0.0
        %3284 = vmatprep.subr.mxu0 0.0
        %3285 = vmatpush2.msra.mxu0 0.0
        %3286 = vmatprep.subr.mxu0 0.0
        %3287 = vmatpush2.msra.mxu0 0.0
        %3288 = vmatprep.subr.mxu0 0.0
        %3289 = vmatpush2.msra.mxu0 0.0
        %3290 = vmatprep.subr.mxu0 0.0
        %3291 = vmatpush2.msra.mxu0 0.0
        %3292 = vmatprep.subr.mxu0 0.0
        %3293 = vmatpush2.msra.mxu0 0.0
        %3294 = vmatprep.subr.mxu0 0.0
        %3295 = vmatpush2.msra.mxu0 0.0
        %3296 = vmatprep.subr.mxu0 0.0
        %3297 = vmatpush2.msra.mxu0 0.0
        %3298 = vmatprep.subr.mxu0 0.0
        %3299 = vmatpush2.msra.mxu0 0.0
        %3300 = vmatprep.subr.mxu0 0.0
        %3301 = vmatpush2.msra.mxu0 0.0
        %3302 = vmatprep.mubr.f32.mxu0 0.0
        %3303 = vmatmul.mubr.f32.gmra.mxu0 %v3236
        %v3304 = vpop.f32.mrf.mxu0
        %v3305 = vadd.f32 0.0, %v3304
        %v3306 = vpop.f32.mrf.mxu0
        %3307 = vdwg.mxu0
        %v3308 = vadd.f32 %v3218, %v3305
        %s3309 = scalar_lea.vmem [#allocation26], 768
        %v3310 = vld [vmem:[%s3309] sm:$0xff]
        %v3311 = vld [vmem:[%s3309 + $0x8] sm:$0xff]
        %v3312 = vld [vmem:[%s3309 + $0x10] sm:$0xff]
        %v3313 = vld [vmem:[%s3309 + $0x18] sm:$0xff]
        %v3314 = vld [vmem:[%s3309 + $0x20] sm:$0xff]
        %v3315 = vld [vmem:[%s3309 + $0x28] sm:$0xff]
        %v3316 = vld [vmem:[%s3309 + $0x30] sm:$0xff]
        %v3317 = vld [vmem:[%s3309 + $0x38] sm:$0xff]
        %v3318 = vld [vmem:[%s3309 + $0x40] sm:$0xff]
        %v3319 = vld [vmem:[%s3309 + $0x48] sm:$0xff]
        %v3320 = vld [vmem:[%s3309 + $0x50] sm:$0xff]
        %v3321 = vld [vmem:[%s3309 + $0x58] sm:$0xff]
        %v3322 = vld [vmem:[%s3309 + $0x60] sm:$0xff]
        %v3323 = vld [vmem:[%s3309 + $0x68] sm:$0xff]
        %v3324 = vld [vmem:[%s3309 + $0x70] sm:$0xff]
        %v3325 = vld [vmem:[%s3309 + $0x78] sm:$0xff]
        %v3326 = vrot.slane %v2769, 6
        %3328 = vmatprep.subr.mxu0 0.0
        %3329 = vmatpush1.msra.mxu0 %v3325
        %3330 = vmatprep.subr.mxu0 0.0
        %3331 = vmatpush1.msra.mxu0 %v3324
        %3332 = vmatprep.subr.mxu0 0.0
        %3333 = vmatpush1.msra.mxu0 %v3323
        %3334 = vmatprep.subr.mxu0 0.0
        %3335 = vmatpush1.msra.mxu0 %v3322
        %3336 = vmatprep.subr.mxu0 0.0
        %3337 = vmatpush1.msra.mxu0 %v3321
        %3338 = vmatprep.subr.mxu0 0.0
        %3339 = vmatpush1.msra.mxu0 %v3320
        %3340 = vmatprep.subr.mxu0 0.0
        %3341 = vmatpush1.msra.mxu0 %v3319
        %3342 = vmatprep.subr.mxu0 0.0
        %3343 = vmatpush1.msra.mxu0 %v3318
        %3344 = vmatprep.subr.mxu0 0.0
        %3345 = vmatpush1.msra.mxu0 %v3317
        %3346 = vmatprep.subr.mxu0 0.0
        %3347 = vmatpush1.msra.mxu0 %v3316
        %3348 = vmatprep.subr.mxu0 0.0
        %3349 = vmatpush1.msra.mxu0 %v3315
        %3350 = vmatprep.subr.mxu0 0.0
        %3351 = vmatpush1.msra.mxu0 %v3314
        %3352 = vmatprep.subr.mxu0 0.0
        %3353 = vmatpush1.msra.mxu0 %v3313
        %3354 = vmatprep.subr.mxu0 0.0
        %3355 = vmatpush1.msra.mxu0 %v3312
        %3356 = vmatprep.subr.mxu0 0.0
        %3357 = vmatpush1.msra.mxu0 %v3311
        %3358 = vmatprep.subr.mxu0 0.0
        %3359 = vmatpush1.msra.mxu0 %v3310
        %3360 = vmatprep.subr.mxu0 0.0
        %3361 = vmatpush2.msra.mxu0 0.0
        %3362 = vmatprep.subr.mxu0 0.0
        %3363 = vmatpush2.msra.mxu0 0.0
        %3364 = vmatprep.subr.mxu0 0.0
        %3365 = vmatpush2.msra.mxu0 0.0
        %3366 = vmatprep.subr.mxu0 0.0
        %3367 = vmatpush2.msra.mxu0 0.0
        %3368 = vmatprep.subr.mxu0 0.0
        %3369 = vmatpush2.msra.mxu0 0.0
        %3370 = vmatprep.subr.mxu0 0.0
        %3371 = vmatpush2.msra.mxu0 0.0
        %3372 = vmatprep.subr.mxu0 0.0
        %3373 = vmatpush2.msra.mxu0 0.0
        %3374 = vmatprep.subr.mxu0 0.0
        %3375 = vmatpush2.msra.mxu0 0.0
        %3376 = vmatprep.subr.mxu0 0.0
        %3377 = vmatpush2.msra.mxu0 0.0
        %3378 = vmatprep.subr.mxu0 0.0
        %3379 = vmatpush2.msra.mxu0 0.0
        %3380 = vmatprep.subr.mxu0 0.0
        %3381 = vmatpush2.msra.mxu0 0.0
        %3382 = vmatprep.subr.mxu0 0.0
        %3383 = vmatpush2.msra.mxu0 0.0
        %3384 = vmatprep.subr.mxu0 0.0
        %3385 = vmatpush2.msra.mxu0 0.0
        %3386 = vmatprep.subr.mxu0 0.0
        %3387 = vmatpush2.msra.mxu0 0.0
        %3388 = vmatprep.subr.mxu0 0.0
        %3389 = vmatpush2.msra.mxu0 0.0
        %3390 = vmatprep.subr.mxu0 0.0
        %3391 = vmatpush2.msra.mxu0 0.0
        %3392 = vmatprep.mubr.f32.mxu0 0.0
        %3393 = vmatmul.mubr.f32.gmra.mxu0 %v3326
        %v3394 = vpop.f32.mrf.mxu0
        %v3395 = vadd.f32 0.0, %v3394
        %v3396 = vpop.f32.mrf.mxu0
        %3397 = vdwg.mxu0
        %v3398 = vadd.f32 %v3308, %v3395
        %s3399 = scalar_lea.vmem [#allocation26], 896
        %v3400 = vld [vmem:[%s3399] sm:$0xff]
        %v3401 = vld [vmem:[%s3399 + $0x8] sm:$0xff]
        %v3402 = vld [vmem:[%s3399 + $0x10] sm:$0xff]
        %v3403 = vld [vmem:[%s3399 + $0x18] sm:$0xff]
        %v3404 = vld [vmem:[%s3399 + $0x20] sm:$0xff]
        %v3405 = vld [vmem:[%s3399 + $0x28] sm:$0xff]
        %v3406 = vld [vmem:[%s3399 + $0x30] sm:$0xff]
        %v3407 = vld [vmem:[%s3399 + $0x38] sm:$0xff]
        %v3408 = vld [vmem:[%s3399 + $0x40] sm:$0xff]
        %v3409 = vld [vmem:[%s3399 + $0x48] sm:$0xff]
        %v3410 = vld [vmem:[%s3399 + $0x50] sm:$0xff]
        %v3411 = vld [vmem:[%s3399 + $0x58] sm:$0xff]
        %v3412 = vld [vmem:[%s3399 + $0x60] sm:$0xff]
        %v3413 = vld [vmem:[%s3399 + $0x68] sm:$0xff]
        %v3414 = vld [vmem:[%s3399 + $0x70] sm:$0xff]
        %v3415 = vld [vmem:[%s3399 + $0x78] sm:$0xff]
        %v3416 = vrot.slane %v2769, 7
        %3418 = vmatprep.subr.mxu0 0.0
        %3419 = vmatpush1.msra.mxu0 %v3415
        %3420 = vmatprep.subr.mxu0 0.0
        %3421 = vmatpush1.msra.mxu0 %v3414
        %3422 = vmatprep.subr.mxu0 0.0
        %3423 = vmatpush1.msra.mxu0 %v3413
        %3424 = vmatprep.subr.mxu0 0.0
        %3425 = vmatpush1.msra.mxu0 %v3412
        %3426 = vmatprep.subr.mxu0 0.0
        %3427 = vmatpush1.msra.mxu0 %v3411
        %3428 = vmatprep.subr.mxu0 0.0
        %3429 = vmatpush1.msra.mxu0 %v3410
        %3430 = vmatprep.subr.mxu0 0.0
        %3431 = vmatpush1.msra.mxu0 %v3409
        %3432 = vmatprep.subr.mxu0 0.0
        %3433 = vmatpush1.msra.mxu0 %v3408
        %3434 = vmatprep.subr.mxu0 0.0
        %3435 = vmatpush1.msra.mxu0 %v3407
        %3436 = vmatprep.subr.mxu0 0.0
        %3437 = vmatpush1.msra.mxu0 %v3406
        %3438 = vmatprep.subr.mxu0 0.0
        %3439 = vmatpush1.msra.mxu0 %v3405
        %3440 = vmatprep.subr.mxu0 0.0
        %3441 = vmatpush1.msra.mxu0 %v3404
        %3442 = vmatprep.subr.mxu0 0.0
        %3443 = vmatpush1.msra.mxu0 %v3403
        %3444 = vmatprep.subr.mxu0 0.0
        %3445 = vmatpush1.msra.mxu0 %v3402
        %3446 = vmatprep.subr.mxu0 0.0
        %3447 = vmatpush1.msra.mxu0 %v3401
        %3448 = vmatprep.subr.mxu0 0.0
        %3449 = vmatpush1.msra.mxu0 %v3400
        %3450 = vmatprep.subr.mxu0 0.0
        %3451 = vmatpush2.msra.mxu0 0.0
        %3452 = vmatprep.subr.mxu0 0.0
        %3453 = vmatpush2.msra.mxu0 0.0
        %3454 = vmatprep.subr.mxu0 0.0
        %3455 = vmatpush2.msra.mxu0 0.0
        %3456 = vmatprep.subr.mxu0 0.0
        %3457 = vmatpush2.msra.mxu0 0.0
        %3458 = vmatprep.subr.mxu0 0.0
        %3459 = vmatpush2.msra.mxu0 0.0
        %3460 = vmatprep.subr.mxu0 0.0
        %3461 = vmatpush2.msra.mxu0 0.0
        %3462 = vmatprep.subr.mxu0 0.0
        %3463 = vmatpush2.msra.mxu0 0.0
        %3464 = vmatprep.subr.mxu0 0.0
        %3465 = vmatpush2.msra.mxu0 0.0
        %3466 = vmatprep.subr.mxu0 0.0
        %3467 = vmatpush2.msra.mxu0 0.0
        %3468 = vmatprep.subr.mxu0 0.0
        %3469 = vmatpush2.msra.mxu0 0.0
        %3470 = vmatprep.subr.mxu0 0.0
        %3471 = vmatpush2.msra.mxu0 0.0
        %3472 = vmatprep.subr.mxu0 0.0
        %3473 = vmatpush2.msra.mxu0 0.0
        %3474 = vmatprep.subr.mxu0 0.0
        %3475 = vmatpush2.msra.mxu0 0.0
        %3476 = vmatprep.subr.mxu0 0.0
        %3477 = vmatpush2.msra.mxu0 0.0
        %3478 = vmatprep.subr.mxu0 0.0
        %3479 = vmatpush2.msra.mxu0 0.0
        %3480 = vmatprep.subr.mxu0 0.0
        %3481 = vmatpush2.msra.mxu0 0.0
        %3482 = vmatprep.mubr.f32.mxu0 0.0
        %3483 = vmatmul.mubr.f32.gmra.mxu0 %v3416
        %v3484 = vpop.f32.mrf.mxu0
        %v3485 = vadd.f32 0.0, %v3484
        %v3486 = vpop.f32.mrf.mxu0
        %3487 = vdwg.mxu0
        %v3488 = vadd.f32 %v3398, %v3485
        %v3489 = vmax.f32 %v3488, 0.0
        %v3490 = vld [vmem:[#allocation28] sm:$0xff]
        %v3491 = vld [vmem:[#allocation28 + $0x8] sm:$0xff]
        %v3492 = vld [vmem:[#allocation28 + $0x10] sm:$0xff]
        %v3493 = vld [vmem:[#allocation28 + $0x18] sm:$0xff]
        %v3494 = vld [vmem:[#allocation28 + $0x20] sm:$0xff]
        %v3495 = vld [vmem:[#allocation28 + $0x28] sm:$0xff]
        %v3496 = vld [vmem:[#allocation28 + $0x30] sm:$0xff]
        %v3497 = vld [vmem:[#allocation28 + $0x38] sm:$0xff]
        %v3498 = vld [vmem:[#allocation28 + $0x40] sm:$0xff]
        %v3499 = vld [vmem:[#allocation28 + $0x48] sm:$0xff]
        %v3500 = vld [vmem:[#allocation28 + $0x50] sm:$0xff]
        %v3501 = vld [vmem:[#allocation28 + $0x58] sm:$0xff]
        %v3502 = vld [vmem:[#allocation28 + $0x60] sm:$0xff]
        %v3503 = vld [vmem:[#allocation28 + $0x68] sm:$0xff]
        %v3504 = vld [vmem:[#allocation28 + $0x70] sm:$0xff]
        %v3505 = vld [vmem:[#allocation28 + $0x78] sm:$0xff]
        %v3506 = vld [vmem:[%s20] sm:$0x1]
        %3507 = vmatprep.subr.mxu0 0.0
        %3508 = vmatpush1.msra.mxu0 %v3505
        %3509 = vmatprep.subr.mxu0 0.0
        %3510 = vmatpush1.msra.mxu0 %v3504
        %3511 = vmatprep.subr.mxu0 0.0
        %3512 = vmatpush1.msra.mxu0 %v3503
        %3513 = vmatprep.subr.mxu0 0.0
        %3514 = vmatpush1.msra.mxu0 %v3502
        %3515 = vmatprep.subr.mxu0 0.0
        %3516 = vmatpush1.msra.mxu0 %v3501
        %3517 = vmatprep.subr.mxu0 0.0
        %3518 = vmatpush1.msra.mxu0 %v3500
        %3519 = vmatprep.subr.mxu0 0.0
        %3520 = vmatpush1.msra.mxu0 %v3499
        %3521 = vmatprep.subr.mxu0 0.0
        %3522 = vmatpush1.msra.mxu0 %v3498
        %3523 = vmatprep.subr.mxu0 0.0
        %3524 = vmatpush1.msra.mxu0 %v3497
        %3525 = vmatprep.subr.mxu0 0.0
        %3526 = vmatpush1.msra.mxu0 %v3496
        %3527 = vmatprep.subr.mxu0 0.0
        %3528 = vmatpush1.msra.mxu0 %v3495
        %3529 = vmatprep.subr.mxu0 0.0
        %3530 = vmatpush1.msra.mxu0 %v3494
        %3531 = vmatprep.subr.mxu0 0.0
        %3532 = vmatpush1.msra.mxu0 %v3493
        %3533 = vmatprep.subr.mxu0 0.0
        %3534 = vmatpush1.msra.mxu0 %v3492
        %3535 = vmatprep.subr.mxu0 0.0
        %3536 = vmatpush1.msra.mxu0 %v3491
        %3537 = vmatprep.subr.mxu0 0.0
        %3538 = vmatpush1.msra.mxu0 %v3490
        %3539 = vmatprep.subr.mxu0 0.0
        %3540 = vmatpush2.msra.mxu0 0.0
        %3541 = vmatprep.subr.mxu0 0.0
        %3542 = vmatpush2.msra.mxu0 0.0
        %3543 = vmatprep.subr.mxu0 0.0
        %3544 = vmatpush2.msra.mxu0 0.0
        %3545 = vmatprep.subr.mxu0 0.0
        %3546 = vmatpush2.msra.mxu0 0.0
        %3547 = vmatprep.subr.mxu0 0.0
        %3548 = vmatpush2.msra.mxu0 0.0
        %3549 = vmatprep.subr.mxu0 0.0
        %3550 = vmatpush2.msra.mxu0 0.0
        %3551 = vmatprep.subr.mxu0 0.0
        %3552 = vmatpush2.msra.mxu0 0.0
        %3553 = vmatprep.subr.mxu0 0.0
        %3554 = vmatpush2.msra.mxu0 0.0
        %3555 = vmatprep.subr.mxu0 0.0
        %3556 = vmatpush2.msra.mxu0 0.0
        %3557 = vmatprep.subr.mxu0 0.0
        %3558 = vmatpush2.msra.mxu0 0.0
        %3559 = vmatprep.subr.mxu0 0.0
        %3560 = vmatpush2.msra.mxu0 0.0
        %3561 = vmatprep.subr.mxu0 0.0
        %3562 = vmatpush2.msra.mxu0 0.0
        %3563 = vmatprep.subr.mxu0 0.0
        %3564 = vmatpush2.msra.mxu0 0.0
        %3565 = vmatprep.subr.mxu0 0.0
        %3566 = vmatpush2.msra.mxu0 0.0
        %3567 = vmatprep.subr.mxu0 0.0
        %3568 = vmatpush2.msra.mxu0 0.0
        %3569 = vmatprep.subr.mxu0 0.0
        %3570 = vmatpush2.msra.mxu0 0.0
        %3571 = vmatprep.mubr.f32.mxu0 0.0
        %3572 = vmatmul.mubr.f32.gmra.mxu0 %v3489
        %v3573 = vpop.f32.mrf.mxu0
        %v3574 = vadd.f32 %v3506, %v3573
        %v3575 = vpop.f32.mrf.mxu0
        %3576 = vdwg.mxu0
        %v3577 = vmax.f32 %v3574, 0.0
        %v3578 = vld [vmem:[#allocation29] sm:$0xff]
        %v3579 = vld [vmem:[#allocation29 + $0x8] sm:$0xff]
        %v3580 = vld [vmem:[#allocation29 + $0x10] sm:$0xff]
        %v3581 = vld [vmem:[#allocation29 + $0x18] sm:$0xff]
        %v3582 = vld [vmem:[#allocation29 + $0x20] sm:$0xff]
        %v3583 = vld [vmem:[#allocation29 + $0x28] sm:$0xff]
        %v3584 = vld [vmem:[#allocation29 + $0x30] sm:$0xff]
        %v3585 = vld [vmem:[#allocation29 + $0x38] sm:$0xff]
        %v3586 = vld [vmem:[#allocation29 + $0x40] sm:$0xff]
        %v3587 = vld [vmem:[#allocation29 + $0x48] sm:$0xff]
        %v3588 = vld [vmem:[#allocation29 + $0x50] sm:$0xff]
        %v3589 = vld [vmem:[#allocation29 + $0x58] sm:$0xff]
        %v3590 = vld [vmem:[#allocation29 + $0x60] sm:$0xff]
        %v3591 = vld [vmem:[#allocation29 + $0x68] sm:$0xff]
        %v3592 = vld [vmem:[#allocation29 + $0x70] sm:$0xff]
        %v3593 = vld [vmem:[#allocation29 + $0x78] sm:$0xff]
        %v3594 = vld [vmem:[%s22] sm:$0x1]
        %3595 = vmatprep.subr.mxu0 0.0
        %3596 = vmatpush1.msra.mxu0 %v3593
        %3597 = vmatprep.subr.mxu0 0.0
        %3598 = vmatpush1.msra.mxu0 %v3592
        %3599 = vmatprep.subr.mxu0 0.0
        %3600 = vmatpush1.msra.mxu0 %v3591
        %3601 = vmatprep.subr.mxu0 0.0
        %3602 = vmatpush1.msra.mxu0 %v3590
        %3603 = vmatprep.subr.mxu0 0.0
        %3604 = vmatpush1.msra.mxu0 %v3589
        %3605 = vmatprep.subr.mxu0 0.0
        %3606 = vmatpush1.msra.mxu0 %v3588
        %3607 = vmatprep.subr.mxu0 0.0
        %3608 = vmatpush1.msra.mxu0 %v3587
        %3609 = vmatprep.subr.mxu0 0.0
        %3610 = vmatpush1.msra.mxu0 %v3586
        %3611 = vmatprep.subr.mxu0 0.0
        %3612 = vmatpush1.msra.mxu0 %v3585
        %3613 = vmatprep.subr.mxu0 0.0
        %3614 = vmatpush1.msra.mxu0 %v3584
        %3615 = vmatprep.subr.mxu0 0.0
        %3616 = vmatpush1.msra.mxu0 %v3583
        %3617 = vmatprep.subr.mxu0 0.0
        %3618 = vmatpush1.msra.mxu0 %v3582
        %3619 = vmatprep.subr.mxu0 0.0
        %3620 = vmatpush1.msra.mxu0 %v3581
        %3621 = vmatprep.subr.mxu0 0.0
        %3622 = vmatpush1.msra.mxu0 %v3580
        %3623 = vmatprep.subr.mxu0 0.0
        %3624 = vmatpush1.msra.mxu0 %v3579
        %3625 = vmatprep.subr.mxu0 0.0
        %3626 = vmatpush1.msra.mxu0 %v3578
        %3627 = vmatprep.subr.mxu0 0.0
        %3628 = vmatpush2.msra.mxu0 0.0
        %3629 = vmatprep.subr.mxu0 0.0
        %3630 = vmatpush2.msra.mxu0 0.0
        %3631 = vmatprep.subr.mxu0 0.0
        %3632 = vmatpush2.msra.mxu0 0.0
        %3633 = vmatprep.subr.mxu0 0.0
        %3634 = vmatpush2.msra.mxu0 0.0
        %3635 = vmatprep.subr.mxu0 0.0
        %3636 = vmatpush2.msra.mxu0 0.0
        %3637 = vmatprep.subr.mxu0 0.0
        %3638 = vmatpush2.msra.mxu0 0.0
        %3639 = vmatprep.subr.mxu0 0.0
        %3640 = vmatpush2.msra.mxu0 0.0
        %3641 = vmatprep.subr.mxu0 0.0
        %3642 = vmatpush2.msra.mxu0 0.0
        %3643 = vmatprep.subr.mxu0 0.0
        %3644 = vmatpush2.msra.mxu0 0.0
        %3645 = vmatprep.subr.mxu0 0.0
        %3646 = vmatpush2.msra.mxu0 0.0
        %3647 = vmatprep.subr.mxu0 0.0
        %3648 = vmatpush2.msra.mxu0 0.0
        %3649 = vmatprep.subr.mxu0 0.0
        %3650 = vmatpush2.msra.mxu0 0.0
        %3651 = vmatprep.subr.mxu0 0.0
        %3652 = vmatpush2.msra.mxu0 0.0
        %3653 = vmatprep.subr.mxu0 0.0
        %3654 = vmatpush2.msra.mxu0 0.0
        %3655 = vmatprep.subr.mxu0 0.0
        %3656 = vmatpush2.msra.mxu0 0.0
        %3657 = vmatprep.subr.mxu0 0.0
        %3658 = vmatpush2.msra.mxu0 0.0
        %3659 = vmatprep.mubr.f32.mxu0 0.0
        %3660 = vmatmul.mubr.f32.gmra.mxu0 %v3577
        %v3661 = vpop.f32.mrf.mxu0
        %v3662 = vadd.f32 %v3594, %v3661
        %v3663 = vpop.f32.mrf.mxu0
        %3664 = vdwg.mxu0
        %3665 = vst [vmem:[%s968] sm:$0x1] %v3662
        %s3666 = sand.u32 %s545, 1
        %s3667 = scalar_lea.sflag [#allocation4], %s3666
        %s3668 = sand.u32 %s545, 1
        %s3669 = scalar_lea.vmem [#allocation31], %s3668
        // Predicated region
        $region185: #{_lambda_.1} parent=111 // pred_check
          %p3670 = pneg %p555
        $region186: #{_lambda_.1} parent=111 // pred_check_branch
          %3672 = sbr.rel (%p3670) target = $region188
        $region187: #{_lambda_.1} parent=111 // pred_region
          %s3674 = ssub.s32 16, 16
          %3675 = vsyncadd %s3667, %s3674
          %s3676 = smul.addr %s49, 16
          %s3677 = scalar_lea.hbm %s23, %s3676
          %s3679 = sshll.u32 %s3669, 4
          %s3680 = int_to_ptr.vmem [resolvable:$true] %s3679
          %3682 = dma.vmem_to_hbm [thread:$0]  %s3680, 16, %s3677, %s3667
        $region188: #{_lambda_.1} parent=111 // pred_fallthru
          _
      $region112: #{_lambda_.1} parent=5 // pred_fallthru
        _
      %p3683 = scmp.le.s32.totalorder 2, %s44
      // Predicated region
      $region189: #{_lambda_.1} parent=5 // pred_check
        %p3684 = pneg %p3683
      $region190: #{_lambda_.1} parent=5 // pred_check_branch
        %3686 = sbr.rel (%p3684) target = $region192
      $region191: #{_lambda_.1} parent=5 // pred_region
        %s3687 = ssub.s32 %s44, 2
        // Predicated region
        $region193: #{_lambda_.1} parent=191 // pred_check
          %p3688 = pneg %p561
        $region194: #{_lambda_.1} parent=191 // pred_check_branch
          %3690 = sbr.rel (%p3688) target = $region196
        $region195: #{_lambda_.1} parent=191 // pred_region
          %s3691 = sand.u32 %s546, 1
          %s3692 = scalar_lea.sflag [#allocation4], %s3691
          %s3693 = sand.u32 %s546, 1
          %s3694 = scalar_lea.vmem [#allocation31], %s3693
          %3695 = dma.done %s3692, 16
        $region196: #{_lambda_.1} parent=191 // pred_fallthru
          _
      $region192: #{_lambda_.1} parent=5 // pred_fallthru
        _
    $region6: #{_lambda_.1} parent=1 // loop_footer
      %s48 = sadd.s32 1, %s44
    $region7: #{_lambda_.1} parent=1 // loop_footer_branch
      %43 = sbr.rel target = $region3
    $region8: #{_lambda_.1} parent=1 // loop_exit
      _
    %3696 = vsyncpa [#allocation3], 1
    %s3697 = scalar_lea.sflag [#allocation3], 1
    %3698 = vsyncpa %s3697, 1
    %3699 = vsyncpa [#allocation6], 1
    %3700 = vsyncpa [#allocation9], 1
    %3701 = vsyncpa [#allocation12], 1
    %3702 = vsyncpa [#allocation15], 1
    %3703 = vsyncpa [#allocation18], 1
    %3704 = vsyncpa [#allocation21], 1
    %3705 = vsyncpa [#allocation24], 1
    %3706 = vsyncpa [#allocation27], 1
    %3707 = vsyncpa [#allocation30], 1
    %3708 = vsyncpa [#allocation4], 1
    %s3709 = scalar_lea.sflag [#allocation4], 1
    %3710 = vsyncpa %s3709, 1

</llo_original>
